<compile_context>
chip_gen: v7x
topology: tpu7x:2x2x1
jax: 0.10.0
libtpu: 0.0.40
codegen_flags: <defaults>
</compile_context>

<pallas_src>
import jax
import jax.numpy as jnp
from jax.experimental import pallas as pl
from jax.experimental.pallas import tpu as pltpu


STEM_CH = 40        # EfficientNet-b3 stem width
STEM_CH_PAD = 128   # lane-padded stem width (lane 40 is the constant-1 bias channel)
FEAT_CH = 1536      # EfficientNet-b3 final feature channels (matches Linear(1536, .))


def _swish(x):
    # Numerically stable SiLU: sigmoid(x) = 0.5 * (tanh(x/2) + 1)   (EUP tanh)
    return x * (0.5 * (jnp.tanh(0.5 * x) + 1.0))


def _round_up(n, m):
    return ((n + m - 1) // m) * m


def _make_fused_kernel(hwo, inv_hw, compute_dtype):
    """Fused stem(3x3/s2)+swish -> head(1x1)+swish -> masked avg-pool -> Linear."""

    def kernel(patch_ref, sw_ref, sb_ref, hw_ref, ow_ref, ob_ref, out_ref, acc_ref):
        t = pl.program_id(1)

        @pl.when(t == 0)
        def _init():
            acc_ref[...] = jnp.zeros_like(acc_ref)

        x = patch_ref[...]                                   # (THW, KP) bf16 (batch squeezed)
        thw = x.shape[0]

        # stem conv as matmul (MXU, bf16 -> f32 acc) + bias + swish (compute dtype)
        s = jnp.dot(x, sw_ref[...], preferred_element_type=jnp.float32)
        s = _swish((s + sb_ref[...]).astype(compute_dtype))  # (THW, 128)

        # constant-1 channel at lane STEM_CH: folds the head bias into head_w,
        # moving the (THW,1536) broadcast add onto the MXU contraction.
        lane = jax.lax.broadcasted_iota(jnp.int32, s.shape, 1)
        s = jnp.where(lane == STEM_CH, jnp.asarray(1.0, compute_dtype), s)

        # head 1x1 conv to 1536 (MXU) + swish (bias already folded in)
        h = jnp.dot(s.astype(jnp.bfloat16), hw_ref[...],
                    preferred_element_type=jnp.float32)
        h = _swish(h.astype(compute_dtype))                  # (THW, 1536)

        # masked partial global-average-pool on the MXU: (1,THW) @ (THW,1536).
        # The mask also zeroes the HW-padding rows (swish of a zero patch row
        # is NOT zero, so padded rows must not contribute to the average).
        row = jax.lax.broadcasted_iota(jnp.int32, (1, thw), 1) + t * thw
        mask = (row < hwo).astype(compute_dtype)
        acc_ref[...] += jnp.dot(mask, h, preferred_element_type=jnp.float32)

        @pl.when(t == pl.num_programs(1) - 1)
        def _finalize():
            pooled = acc_ref[...] * inv_hw                   # mean over true HWo
            # Dropout(0.1) is identity at inference; then Linear(1536, output_dim)
            res = jnp.dot(pooled, ow_ref[...],
                          preferred_element_type=jnp.float32) + ob_ref[...]
            out_ref[...] = res

    return kernel


def init_params(key, input_channels, output_dim):
    k1, k2, k3, k4, k5, k6 = jax.random.split(key, 6)
    kp = 3 * 3 * input_channels
    stem_w = 0.1 * jax.random.normal(k1, (kp, STEM_CH), jnp.float32)
    stem_b = 0.1 * jax.random.normal(k2, (1, STEM_CH), jnp.float32)
    head_w = 0.05 * jax.random.normal(k3, (STEM_CH, FEAT_CH), jnp.float32)
    head_b = 0.05 * jax.random.normal(k4, (1, FEAT_CH), jnp.float32)
    out_w = 0.02 * jax.random.normal(k5, (FEAT_CH, output_dim), jnp.float32)
    out_b = 0.02 * jax.random.normal(k6, (1, output_dim), jnp.float32)

    # Zero-pad stem channels 40 -> 128 (lane-dense intermediates; zeros keep math exact).
    stem_w_p = jnp.zeros((kp, STEM_CH_PAD), jnp.float32).at[:, :STEM_CH].set(stem_w)
    stem_b_p = jnp.zeros((1, STEM_CH_PAD), jnp.float32).at[:, :STEM_CH].set(stem_b)
    # Fold head bias into row STEM_CH of head_w (the kernel writes a constant-1
    # activation channel there), zero the rest of the padded rows.
    head_w_p = (jnp.zeros((STEM_CH_PAD, FEAT_CH), jnp.float32)
                .at[:STEM_CH, :].set(head_w)
                .at[STEM_CH, :].set(head_b[0]))

    return {
        "stem_w": stem_w_p.astype(jnp.bfloat16),   # (KP, 128)   bf16 MXU operand
        "stem_b": stem_b_p,                        # (1, 128)    f32
        "head_w": head_w_p.astype(jnp.bfloat16),   # (128, 1536) bf16 MXU operand (bias folded)
        "out_w": out_w,                            # (1536, O)   f32 (tiny final matmul)
        "out_b": out_b,                            # (1, O)      f32
    }


def weird_efficientnet_forward(x_nchw, params, *, thw_target=2048):
    # ---- per-generation knobs (bf16 elementwise on v6e/v7x, f32 on v5e/older) ----
    kind = jax.devices()[0].device_kind.lower()
    is_v7 = ("v7" in kind) or ("7x" in kind)
    use_bf16 = is_v7 or ("v6" in kind)
    has_big_vmem = any(g in kind for g in ("v4", "v5", "v6"))   # 128 MiB physical VMEM
    compute_dtype = jnp.bfloat16 if use_bf16 else jnp.float32
    vmem_limit = (64 if has_big_vmem else 32) * 1024 * 1024
    if (not use_bf16) and (not has_big_vmem):
        thw_target = min(thw_target, 1024)   # unknown chip: conservative f32 tiling

    # layout: PyTorch NCHW -> NHWC (channels on TPU lanes)
    x = jnp.transpose(x_nchw, (0, 2, 3, 1)).astype(jnp.float32)
    B, H, W, Cin = x.shape

    # --- stem conv 3x3, stride 2, "same" padding (EfficientNet stem) ---
    k, s = 3, 2
    Ho, Wo = -(-H // s), -(-W // s)
    pad_h = max((Ho - 1) * s + k - H, 0)
    pad_w = max((Wo - 1) * s + k - W, 0)
    xp = jnp.pad(
        x,
        ((0, 0),
         (pad_h // 2, pad_h - pad_h // 2),
         (pad_w // 2, pad_w - pad_w // 2),
         (0, 0)),
    )
    # im2col (layout glue), emitted in bf16; tap order (kh, kw, cin)
    # TODO(synk): build the 3x3 taps inside the kernel from a padded row-band
    # BlockSpec to avoid the 9x im2col expansion in HBM (mainly a v5e HBM win).
    cols = [xp[:, kh:kh + s * Ho:s, kw:kw + s * Wo:s, :]
            for kh in range(k) for kw in range(k)]
    kp_dim = k * k * Cin
    patches = (jnp.concatenate(cols, axis=-1)
               .reshape(B, Ho * Wo, kp_dim)
               .astype(jnp.bfloat16))                              # (B, HW, KP)

    # TODO(synk): the pretrained EfficientNet-b3 MBConv block stack
    # (effnet.extract_features internals) has no in-script weights and is not
    # reimplemented; stem -> head conv only.

    # --- spatial tiling: big tiles, pad HWo up to a multiple of THW, mask tail ---
    HWo = Ho * Wo
    THW = min(_round_up(thw_target, 8), _round_up(HWo, 8))
    HWp = _round_up(HWo, THW)
    T = HWp // THW
    if HWp > HWo:
        patches = jnp.pad(patches, ((0, 0), (0, HWp - HWo), (0, 0)))

    O = params["out_w"].shape[1]

    out = pl.pallas_call(
        _make_fused_kernel(HWo, 1.0 / HWo, compute_dtype),
        out_shape=jax.ShapeDtypeStruct((B, 1, O), jnp.float32),
        grid=(B, T),
        in_specs=[
            pl.BlockSpec((pl.Squeezed(), THW, kp_dim), lambda b, t: (b, t, 0)),  # patch tile
            pl.BlockSpec((kp_dim, STEM_CH_PAD), lambda b, t: (0, 0)),            # stem_w (resident)
            pl.BlockSpec((1, STEM_CH_PAD), lambda b, t: (0, 0)),                 # stem_b
            pl.BlockSpec((STEM_CH_PAD, FEAT_CH), lambda b, t: (0, 0)),           # head_w (resident)
            pl.BlockSpec((FEAT_CH, O), lambda b, t: (0, 0)),                     # out_w (resident)
            pl.BlockSpec((1, O), lambda b, t: (0, 0)),                           # out_b
        ],
        out_specs=pl.BlockSpec((pl.Squeezed(), 1, O), lambda b, t: (b, 0, 0)),
        scratch_shapes=[pltpu.VMEM((1, FEAT_CH), jnp.float32)],                  # pooled-sum acc
        compiler_params=pltpu.CompilerParams(
            dimension_semantics=("parallel", "arbitrary"),
            vmem_limit_bytes=vmem_limit,
        ),
    )(patches, params["stem_w"], params["stem_b"], params["head_w"],
      params["out_w"], params["out_b"])

    return out.reshape(B, O)


if __name__ == "__main__":
    key = jax.random.PRNGKey(0)
    k_in, k_par = jax.random.split(key)

    input_channels = 3   # EfficientNet expects RGB (the ctor arg is unused in PyTorch)
    output_dim = 10
    B, H, W = 2, 16, 16

    x = jax.random.normal(k_in, (B, input_channels, H, W), jnp.float32)  # NCHW like PyTorch
    params = init_params(k_par, input_channels, output_dim)

    out = weird_efficientnet_forward(x, params)
    out = jax.block_until_ready(out)
    assert out.shape == (B, output_dim), out.shape
    assert bool(jnp.all(jnp.isfinite(out)))
    print("KERNEL_OK")
</pallas_src>

<mosaic_0001>
module attributes {stable_mosaic.version = 11 : i64} {
  func.func @kernel(%arg0: i32, %arg1: i32, %arg2: memref<1x64x27xbf16, #tpu.memory_space<vmem>>, %arg3: memref<27x128xbf16, #tpu.memory_space<vmem>>, %arg4: memref<1x128xf32, #tpu.memory_space<vmem>>, %arg5: memref<128x1536xbf16, #tpu.memory_space<vmem>>, %arg6: memref<1536x10xf32, #tpu.memory_space<vmem>>, %arg7: memref<1x10xf32, #tpu.memory_space<vmem>>, %arg8: memref<1x1x10xf32, #tpu.memory_space<vmem>>, %arg9: memref<1x1536xf32, #tpu.memory_space<vmem>>) attributes {dimension_semantics = [#tpu.dimension_semantics<parallel>, #tpu.dimension_semantics<arbitrary>], iteration_bounds = array<i64: 2, 1>, scalar_prefetch = 0 : i64, scratch_operands = 1 : i64, tpu.core_type = #tpu.core_type<tc>, window_params = [{transform_indices = @transform_0, window_bounds = array<i64: 1, 64, 27>}, {pipeline_mode = #tpu.pipeline_mode<synchronous>, transform_indices = @transform_1, window_bounds = array<i64: 27, 128>}, {pipeline_mode = #tpu.pipeline_mode<synchronous>, transform_indices = @transform_2, window_bounds = array<i64: 1, 128>}, {pipeline_mode = #tpu.pipeline_mode<synchronous>, transform_indices = @transform_3, window_bounds = array<i64: 128, 1536>}, {pipeline_mode = #tpu.pipeline_mode<synchronous>, transform_indices = @transform_4, window_bounds = array<i64: 1536, 10>}, {pipeline_mode = #tpu.pipeline_mode<synchronous>, transform_indices = @transform_5, window_bounds = array<i64: 1, 10>}, {transform_indices = @transform_6, window_bounds = array<i64: 1, 1, 10>}]} {
    %c0_i32 = arith.constant 0 : i32
    %0 = arith.cmpi eq, %arg1, %c0_i32 : i32
    %1 = arith.extui %0 : i1 to i32
    %c0_i32_0 = arith.constant 0 : i32
    %2 = arith.cmpi ne, %1, %c0_i32_0 : i32
    scf.if %2 {
      %cst_25 = arith.constant 0.000000e+00 : f32
      %49 = vector.broadcast %cst_25 : f32 to vector<1x1536xf32>
      %c0_26 = arith.constant 0 : index
      %c0_27 = arith.constant 0 : index
      %50 = vector.load %arg9[%c0_26, %c0_27] : memref<1x1536xf32, #tpu.memory_space<vmem>>, vector<1x1536xf32>
      tpu.vector_store %arg9[%c0_26, %c0_27], %49 {strides = array<i32>} : memref<1x1536xf32, #tpu.memory_space<vmem>>, vector<1x1536xf32>,
    } else {
    }
    %c0 = arith.constant 0 : index
    %c0_1 = arith.constant 0 : index
    %c0_2 = arith.constant 0 : index
    %3 = vector.load %arg2[%c0, %c0_1, %c0_2] : memref<1x64x27xbf16, #tpu.memory_space<vmem>>, vector<1x64x27xbf16>
    %4 = vector.shape_cast %3 : vector<1x64x27xbf16> to vector<64x27xbf16>
    %c0_3 = arith.constant 0 : index
    %c0_4 = arith.constant 0 : index
    %5 = vector.load %arg3[%c0_3, %c0_4] : memref<27x128xbf16, #tpu.memory_space<vmem>>, vector<27x128xbf16>
    %cst = arith.constant dense<0.000000e+00> : vector<64x128xf32>
    %6 = tpu.matmul %4, %5, %cst {dimension_numbers = #tpu.dot_dimension_numbers<[1], [0], [0], [1], [0, 0, 1, 1], [], []>} : vector<64x27xbf16>, vector<27x128xbf16>, vector<64x128xf32> -> vector<64x128xf32>
    %c0_5 = arith.constant 0 : index
    %c0_6 = arith.constant 0 : index
    %7 = vector.load %arg4[%c0_5, %c0_6] : memref<1x128xf32, #tpu.memory_space<vmem>>, vector<1x128xf32>
    %8 = vector.broadcast %7 : vector<1x128xf32> to vector<64x128xf32>
    %9 = arith.addf %6, %8 : vector<64x128xf32>
    %cst_7 = arith.constant 5.000000e-01 : f32
    %10 = vector.broadcast %cst_7 : f32 to vector<64x128xf32>
    %11 = arith.mulf %10, %9 : vector<64x128xf32>
    %12 = math.tanh %11 : vector<64x128xf32>
    %cst_8 = arith.constant 1.000000e+00 : f32
    %13 = vector.broadcast %cst_8 : f32 to vector<64x128xf32>
    %14 = arith.addf %12, %13 : vector<64x128xf32>
    %cst_9 = arith.constant 5.000000e-01 : f32
    %15 = vector.broadcast %cst_9 : f32 to vector<64x128xf32>
    %16 = arith.mulf %15, %14 : vector<64x128xf32>
    %17 = arith.mulf %9, %16 : vector<64x128xf32>
    %18 = tpu.iota {dimensions = array<i32: 1>} : vector<64x128xi32>
    %c40_i32 = arith.constant 40 : i32
    %19 = vector.broadcast %c40_i32 : i32 to vector<64x128xi32>
    %20 = arith.cmpi eq, %18, %19 : vector<64x128xi32>
    %cst_10 = arith.constant 1.000000e+00 : f32
    %21 = vector.broadcast %cst_10 : f32 to vector<64x128xf32>
    %22 = arith.select %20, %21, %17 : vector<64x128xi1>, vector<64x128xf32>
    %23 = arith.truncf %22 : vector<64x128xf32> to vector<64x128xbf16>
    %c0_11 = arith.constant 0 : index
    %c0_12 = arith.constant 0 : index
    %24 = vector.load %arg5[%c0_11, %c0_12] : memref<128x1536xbf16, #tpu.memory_space<vmem>>, vector<128x1536xbf16>
    %cst_13 = arith.constant dense<0.000000e+00> : vector<64x1536xf32>
    %25 = tpu.matmul %23, %24, %cst_13 {dimension_numbers = #tpu.dot_dimension_numbers<[1], [0], [0], [1], [0, 0, 1, 1], [], []>} : vector<64x128xbf16>, vector<128x1536xbf16>, vector<64x1536xf32> -> vector<64x1536xf32>
    %cst_14 = arith.constant 5.000000e-01 : f32
    %26 = vector.broadcast %cst_14 : f32 to vector<64x1536xf32>
    %27 = arith.mulf %26, %25 : vector<64x1536xf32>
    %28 = math.tanh %27 : vector<64x1536xf32>
    %cst_15 = arith.constant 1.000000e+00 : f32
    %29 = vector.broadcast %cst_15 : f32 to vector<64x1536xf32>
    %30 = arith.addf %28, %29 : vector<64x1536xf32>
    %cst_16 = arith.constant 5.000000e-01 : f32
    %31 = vector.broadcast %cst_16 : f32 to vector<64x1536xf32>
    %32 = arith.mulf %31, %30 : vector<64x1536xf32>
    %33 = arith.mulf %25, %32 : vector<64x1536xf32>
    %34 = tpu.iota {dimensions = array<i32: 1>} : vector<1x64xi32>
    %c64_i32 = arith.constant 64 : i32
    %35 = arith.muli %arg1, %c64_i32 : i32
    %36 = vector.broadcast %35 : i32 to vector<1x64xi32>
    %37 = arith.addi %34, %36 : vector<1x64xi32>
    %c64_i32_17 = arith.constant 64 : i32
    %38 = vector.broadcast %c64_i32_17 : i32 to vector<1x64xi32>
    %39 = arith.cmpi slt, %37, %38 : vector<1x64xi32>
    %40 = arith.extui %39 : vector<1x64xi1> to vector<1x64xi32>
    %41 = arith.sitofp %40 : vector<1x64xi32> to vector<1x64xf32>
    %c0_18 = arith.constant 0 : index
    %c0_19 = arith.constant 0 : index
    %42 = vector.load %arg9[%c0_18, %c0_19] : memref<1x1536xf32, #tpu.memory_space<vmem>>, vector<1x1536xf32>
    %cst_20 = arith.constant dense<0.000000e+00> : vector<1x1536xf32>
    %43 = tpu.matmul %41, %33, %cst_20 {dimension_numbers = #tpu.dot_dimension_numbers<[1], [0], [0], [1], [0, 0, 1, 1], [], []>} : vector<1x64xf32>, vector<64x1536xf32>, vector<1x1536xf32> -> vector<1x1536xf32>
    %44 = arith.addf %42, %43 : vector<1x1536xf32>
    %c0_21 = arith.constant 0 : index
    %c0_22 = arith.constant 0 : index
    %45 = vector.load %arg9[%c0_21, %c0_22] : memref<1x1536xf32, #tpu.memory_space<vmem>>, vector<1x1536xf32>
    tpu.vector_store %arg9[%c0_21, %c0_22], %44 {strides = array<i32>} : memref<1x1536xf32, #tpu.memory_space<vmem>>, vector<1x1536xf32>,
    %c0_i32_23 = arith.constant 0 : i32
    %46 = arith.cmpi eq, %arg1, %c0_i32_23 : i32
    %47 = arith.extui %46 : i1 to i32
    %c0_i32_24 = arith.constant 0 : i32
    %48 = arith.cmpi ne, %47, %c0_i32_24 : i32
    scf.if %48 {
      %c0_25 = arith.constant 0 : index
      %c0_26 = arith.constant 0 : index
      %49 = vector.load %arg9[%c0_25, %c0_26] : memref<1x1536xf32, #tpu.memory_space<vmem>>, vector<1x1536xf32>
      %cst_27 = arith.constant 1.562500e-02 : f32
      %50 = vector.broadcast %cst_27 : f32 to vector<1x1536xf32>
      %51 = arith.mulf %49, %50 : vector<1x1536xf32>
      %c0_28 = arith.constant 0 : index
      %c0_29 = arith.constant 0 : index
      %52 = vector.load %arg6[%c0_28, %c0_29] : memref<1536x10xf32, #tpu.memory_space<vmem>>, vector<1536x10xf32>
      %cst_30 = arith.constant dense<0.000000e+00> : vector<1x10xf32>
      %53 = tpu.matmul %51, %52, %cst_30 {dimension_numbers = #tpu.dot_dimension_numbers<[1], [0], [0], [1], [0, 0, 1, 1], [], []>} : vector<1x1536xf32>, vector<1536x10xf32>, vector<1x10xf32> -> vector<1x10xf32>
      %c0_31 = arith.constant 0 : index
      %c0_32 = arith.constant 0 : index
      %54 = vector.load %arg7[%c0_31, %c0_32] : memref<1x10xf32, #tpu.memory_space<vmem>>, vector<1x10xf32>
      %55 = arith.addf %53, %54 : vector<1x10xf32>
      %c0_33 = arith.constant 0 : index
      %c0_34 = arith.constant 0 : index
      %c0_35 = arith.constant 0 : index
      %56 = vector.load %arg8[%c0_33, %c0_34, %c0_35] : memref<1x1x10xf32, #tpu.memory_space<vmem>>, vector<1x1x10xf32>
      %57 = vector.shape_cast %56 : vector<1x1x10xf32> to vector<1x10xf32>
      %58 = vector.shape_cast %55 : vector<1x10xf32> to vector<1x1x10xf32>
      tpu.vector_store %arg8[%c0_33, %c0_34, %c0_35], %58 {strides = array<i32>} : memref<1x1x10xf32, #tpu.memory_space<vmem>>, vector<1x1x10xf32>,
    } else {
    }
    return
  }
  func.func @transform_0(%arg0: i32, %arg1: i32) -> (i32, i32, i32) {
    %c0_i32 = arith.constant 0 : i32
    %c0_i32_0 = arith.constant 0 : i32
    return %arg0, %arg1, %c0_i32 : i32, i32, i32
  }
  func.func @transform_1(%arg0: i32, %arg1: i32) -> (i32, i32) {
    %c0_i32 = arith.constant 0 : i32
    %c0_i32_0 = arith.constant 0 : i32
    %c0_i32_1 = arith.constant 0 : i32
    return %c0_i32, %c0_i32_0 : i32, i32
  }
  func.func @transform_2(%arg0: i32, %arg1: i32) -> (i32, i32) {
    %c0_i32 = arith.constant 0 : i32
    %c0_i32_0 = arith.constant 0 : i32
    %c0_i32_1 = arith.constant 0 : i32
    return %c0_i32, %c0_i32_0 : i32, i32
  }
  func.func @transform_3(%arg0: i32, %arg1: i32) -> (i32, i32) {
    %c0_i32 = arith.constant 0 : i32
    %c0_i32_0 = arith.constant 0 : i32
    %c0_i32_1 = arith.constant 0 : i32
    return %c0_i32, %c0_i32_0 : i32, i32
  }
  func.func @transform_4(%arg0: i32, %arg1: i32) -> (i32, i32) {
    %c0_i32 = arith.constant 0 : i32
    %c0_i32_0 = arith.constant 0 : i32
    %c0_i32_1 = arith.constant 0 : i32
    return %c0_i32, %c0_i32_0 : i32, i32
  }
  func.func @transform_5(%arg0: i32, %arg1: i32) -> (i32, i32) {
    %c0_i32 = arith.constant 0 : i32
    %c0_i32_0 = arith.constant 0 : i32
    %c0_i32_1 = arith.constant 0 : i32
    return %c0_i32, %c0_i32_0 : i32, i32
  }
  func.func @transform_6(%arg0: i32, %arg1: i32) -> (i32, i32, i32) {
    %c0_i32 = arith.constant 0 : i32
    %c0_i32_0 = arith.constant 0 : i32
    %c0_i32_1 = arith.constant 0 : i32
    return %arg0, %c0_i32, %c0_i32_0 : i32, i32, i32
  }
}

</mosaic_0001>

<llo_original>
// kernel: tpu_custom_call.1
$region0: #{tpu_custom_call.1}
  #allocation0 [shape = 'u32[]', space=smem, size = 0x4, offset = 0x4, fixed_abs, tag = 'smem constant byte address 0x4 - core index']
  #allocation1 [shape = 'u32[144,128]{1,0:T(1,128)}', space=vmem, size = 0x12000, scoped, tag = 'internal scratch']
  #allocation2 [shape = 'f32[1,1536]{1,0:T(1,128)}', space=vmem, size = 0x1800, scoped, tag = 'scratch operand']
  %s0 = inlined_call_operand.vmem [shape: bf16[2,64,27], index: 0, kind: input, shape index: {}]
  %s1 = inlined_call_operand.vmem [shape: bf16[27,128], index: 1, kind: input, shape index: {}]
  %s2 = inlined_call_operand.vmem [shape: f32[1,128], index: 2, kind: input, shape index: {}]
  %s3 = inlined_call_operand.vmem [shape: bf16[128,1536], index: 3, kind: input, shape index: {}]
  %s4 = inlined_call_operand.vmem [shape: f32[1536,10], index: 4, kind: input, shape index: {}]
  %s5 = inlined_call_operand.vmem [shape: f32[1,10], index: 5, kind: input, shape index: {}]
  %s6 = inlined_call_operand.hbm [shape: f32[2,1,10], index: 6, kind: output, shape index: {}]
  %s7 = sld [smem:[#allocation0]]
  $region65: #{tpu_custom_call.1} parent=0
    _
  %s9 = ssub.s32 1, %s7
  %s10 = scalar_select 0, %s9, %s7
  $region1: #{tpu_custom_call.1} parent=0
    #allocation3 [shape = 'u8[1024]{0}', space=vmem, size = 0x400, scoped, tag = 'output window, operand 0']
    #allocation4 [shape = 's32[2]{0}', space=sflag, size = 0x8, scoped, tag = 'scoped memory for tpu_custom_call.1']
    %11 = vsyncpa [#allocation4], 0
    %s12 = scalar_lea.sflag [#allocation4], 1
    %13 = vsyncpa %s12, 0
    loop: start=0, step=1, limit=4
    $region2: #{tpu_custom_call.1} parent=1 // loop_pre_header
      _
    $region3: #{tpu_custom_call.1} parent=1 // loop_header
      %s15 = sphi 0, %s19
      %p16 = scmp.ge.s32.totalorder %s15, 4
      %s22 = sphi 0, %s34
      %s23 = sphi 0, %s30
      %s24 = sphi 0, %s22
      %s25 = sphi 0, %s23
      %s26 = sphi 0, %s24
      %s27 = sphi 0, %s25
      %s39 = sphi 0, %s41
      %s42 = sphi 0, %s39
      %s43 = sphi 0, %s42
      %s59 = sphi 0, %s43
      %s63 = sphi 0, %s63
      %s65 = sphi 0, %s63
      %s66 = sphi 0, %s65
      %s80 = sphi 0, %s66
      %s84 = sphi 0, %s84
      %s86 = sphi 0, %s84
      %s87 = sphi 0, %s86
      %s101 = sphi 0, %s87
      %s105 = sphi 0, %s105
      %s107 = sphi 0, %s105
      %s108 = sphi 0, %s107
      %s122 = sphi 0, %s108
      %s126 = sphi 0, %s126
      %s128 = sphi 0, %s126
      %s129 = sphi 0, %s128
      %s143 = sphi 0, %s129
      %s147 = sphi 0, %s147
      %s149 = sphi 0, %s147
      %s150 = sphi 0, %s149
      %s164 = sphi 0, %s150
      %s170 = sphi 0, %s172
      %s173 = sphi 0, %s170
      %s174 = sphi 0, %s173
      %s190 = sphi 0, %s174
    $region4: #{tpu_custom_call.1} parent=1 // loop_header_branch
      %18 = sbr.rel (%p16) target = $region8
    $region5: #{tpu_custom_call.1} parent=1 // loop_body
      %s20 = ssub.s32 %s15, 1
      %s21 = ssub.s32 %s15, 2
      %s28 = sadd.s32 1, %s23
      %p29 = scmp.ge.s32.totalorder %s28, 1
      %s30 = scalar_select %p29, 0, %s28
      %s31 = sadd.s32 1, %s22
      %s32 = scalar_select %p29, %s31, %s22
      %p33 = scmp.ge.s32.totalorder %s32, 2
      %s34 = scalar_select %p33, 0, %s32
      %s35 = ssub.s32 %s22, %s34
      %s36 = ssub.s32 %s23, %s30
      %s37 = sor.u32 %s35, %s36
      %p38 = scmp.eq.s32.totalorder %s37, 0
      %s40 = sadd.s32 %s39, 1
      %s41 = scalar_select %p38, %s39, %s40
      %p44 = pneg %p38
      %p45 = scmp.eq.s32.totalorder %s15, 1
      %p46 = por %p44, %p45
      %p47 = scmp.ne.s32.totalorder %s39, %s42
      %p48 = scmp.eq.s32.totalorder %s15, 0
      %p49 = por %p47, %p48
      %p50 = scmp.ne.s32.totalorder %s39, %s42
      %p51 = scmp.eq.s32.totalorder %s20, 1
      %p52 = por %p50, %p51
      %p53 = scmp.ne.s32.totalorder %s42, %s43
      %p54 = scmp.eq.s32.totalorder %s20, 0
      %p55 = por %p53, %p54
      %p56 = scmp.ne.s32.totalorder %s42, %s43
      %p57 = scmp.eq.s32.totalorder %s21, 1
      %p58 = por %p56, %p57
      %p60 = scmp.ne.s32.totalorder %s43, %s59
      %p61 = scmp.eq.s32.totalorder %s21, 0
      %p62 = por %p60, %p61
      %s64 = sadd.s32 %s63, 1
      %p67 = scmp.eq.s32.totalorder %s15, 1
      %p68 = scmp.ne.s32.totalorder %s63, %s65
      %p69 = scmp.eq.s32.totalorder %s15, 0
      %p70 = por %p68, %p69
      %p71 = scmp.ne.s32.totalorder %s63, %s65
      %p72 = scmp.eq.s32.totalorder %s20, 1
      %p73 = por %p71, %p72
      %p74 = scmp.ne.s32.totalorder %s65, %s66
      %p75 = scmp.eq.s32.totalorder %s20, 0
      %p76 = por %p74, %p75
      %p77 = scmp.ne.s32.totalorder %s65, %s66
      %p78 = scmp.eq.s32.totalorder %s21, 1
      %p79 = por %p77, %p78
      %p81 = scmp.ne.s32.totalorder %s66, %s80
      %p82 = scmp.eq.s32.totalorder %s21, 0
      %p83 = por %p81, %p82
      %s85 = sadd.s32 %s84, 1
      %p88 = scmp.eq.s32.totalorder %s15, 1
      %p89 = scmp.ne.s32.totalorder %s84, %s86
      %p90 = scmp.eq.s32.totalorder %s15, 0
      %p91 = por %p89, %p90
      %p92 = scmp.ne.s32.totalorder %s84, %s86
      %p93 = scmp.eq.s32.totalorder %s20, 1
      %p94 = por %p92, %p93
      %p95 = scmp.ne.s32.totalorder %s86, %s87
      %p96 = scmp.eq.s32.totalorder %s20, 0
      %p97 = por %p95, %p96
      %p98 = scmp.ne.s32.totalorder %s86, %s87
      %p99 = scmp.eq.s32.totalorder %s21, 1
      %p100 = por %p98, %p99
      %p102 = scmp.ne.s32.totalorder %s87, %s101
      %p103 = scmp.eq.s32.totalorder %s21, 0
      %p104 = por %p102, %p103
      %s106 = sadd.s32 %s105, 1
      %p109 = scmp.eq.s32.totalorder %s15, 1
      %p110 = scmp.ne.s32.totalorder %s105, %s107
      %p111 = scmp.eq.s32.totalorder %s15, 0
      %p112 = por %p110, %p111
      %p113 = scmp.ne.s32.totalorder %s105, %s107
      %p114 = scmp.eq.s32.totalorder %s20, 1
      %p115 = por %p113, %p114
      %p116 = scmp.ne.s32.totalorder %s107, %s108
      %p117 = scmp.eq.s32.totalorder %s20, 0
      %p118 = por %p116, %p117
      %p119 = scmp.ne.s32.totalorder %s107, %s108
      %p120 = scmp.eq.s32.totalorder %s21, 1
      %p121 = por %p119, %p120
      %p123 = scmp.ne.s32.totalorder %s108, %s122
      %p124 = scmp.eq.s32.totalorder %s21, 0
      %p125 = por %p123, %p124
      %s127 = sadd.s32 %s126, 1
      %p130 = scmp.eq.s32.totalorder %s15, 1
      %p131 = scmp.ne.s32.totalorder %s126, %s128
      %p132 = scmp.eq.s32.totalorder %s15, 0
      %p133 = por %p131, %p132
      %p134 = scmp.ne.s32.totalorder %s126, %s128
      %p135 = scmp.eq.s32.totalorder %s20, 1
      %p136 = por %p134, %p135
      %p137 = scmp.ne.s32.totalorder %s128, %s129
      %p138 = scmp.eq.s32.totalorder %s20, 0
      %p139 = por %p137, %p138
      %p140 = scmp.ne.s32.totalorder %s128, %s129
      %p141 = scmp.eq.s32.totalorder %s21, 1
      %p142 = por %p140, %p141
      %p144 = scmp.ne.s32.totalorder %s129, %s143
      %p145 = scmp.eq.s32.totalorder %s21, 0
      %p146 = por %p144, %p145
      %s148 = sadd.s32 %s147, 1
      %p151 = scmp.eq.s32.totalorder %s15, 1
      %p152 = scmp.ne.s32.totalorder %s147, %s149
      %p153 = scmp.eq.s32.totalorder %s15, 0
      %p154 = por %p152, %p153
      %p155 = scmp.ne.s32.totalorder %s147, %s149
      %p156 = scmp.eq.s32.totalorder %s20, 1
      %p157 = por %p155, %p156
      %p158 = scmp.ne.s32.totalorder %s149, %s150
      %p159 = scmp.eq.s32.totalorder %s20, 0
      %p160 = por %p158, %p159
      %p161 = scmp.ne.s32.totalorder %s149, %s150
      %p162 = scmp.eq.s32.totalorder %s21, 1
      %p163 = por %p161, %p162
      %p165 = scmp.ne.s32.totalorder %s150, %s164
      %p166 = scmp.eq.s32.totalorder %s21, 0
      %p167 = por %p165, %p166
      %s168 = ssub.s32 %s22, %s34
      %p169 = scmp.eq.s32.totalorder %s168, 0
      %s171 = sadd.s32 %s170, 1
      %s172 = scalar_select %p169, %s170, %s171
      %p175 = pneg %p169
      %p176 = scmp.eq.s32.totalorder %s15, 1
      %p177 = por %p175, %p176
      %p178 = scmp.ne.s32.totalorder %s170, %s173
      %p179 = scmp.eq.s32.totalorder %s15, 0
      %p180 = por %p178, %p179
      %p181 = scmp.ne.s32.totalorder %s170, %s173
      %p182 = scmp.eq.s32.totalorder %s20, 1
      %p183 = por %p181, %p182
      %p184 = scmp.ne.s32.totalorder %s173, %s174
      %p185 = scmp.eq.s32.totalorder %s20, 0
      %p186 = por %p184, %p185
      %p187 = scmp.ne.s32.totalorder %s173, %s174
      %p188 = scmp.eq.s32.totalorder %s21, 1
      %p189 = por %p187, %p188
      %p191 = scmp.ne.s32.totalorder %s174, %s190
      %p192 = scmp.eq.s32.totalorder %s21, 0
      %p193 = por %p191, %p192
      %p194 = scmp.le.s32.totalorder 1, %s15
      %p195 = scmp.lt.s32.totalorder %s15, 3
      %p196 = pnand %p194, %p195
      %p197 = pneg %p196
      // Predicated region
      $region9: #{tpu_custom_call.1} parent=5 // pred_check
        _
      $region10: #{tpu_custom_call.1} parent=5 // pred_check_branch
        %199 = sbr.rel (%p196) target = $region12
      $region11: #{tpu_custom_call.1} parent=5 // pred_region
        %s200 = ssub.s32 %s15, 1
        // Predicated region
        $region13: #{tpu_custom_call.1} parent=11 // pred_check
          %p201 = pneg %p76
        $region14: #{tpu_custom_call.1} parent=11 // pred_check_branch
          %203 = sbr.rel (%p201) target = $region16
        $region15: #{tpu_custom_call.1} parent=11 // pred_region
          _
        $region16: #{tpu_custom_call.1} parent=11 // pred_fallthru
          _
        // Predicated region
        $region17: #{tpu_custom_call.1} parent=11 // pred_check
          %p204 = pneg %p97
        $region18: #{tpu_custom_call.1} parent=11 // pred_check_branch
          %206 = sbr.rel (%p204) target = $region20
        $region19: #{tpu_custom_call.1} parent=11 // pred_region
          _
        $region20: #{tpu_custom_call.1} parent=11 // pred_fallthru
          _
        // Predicated region
        $region21: #{tpu_custom_call.1} parent=11 // pred_check
          %p207 = pneg %p118
        $region22: #{tpu_custom_call.1} parent=11 // pred_check_branch
          %209 = sbr.rel (%p207) target = $region24
        $region23: #{tpu_custom_call.1} parent=11 // pred_region
          _
        $region24: #{tpu_custom_call.1} parent=11 // pred_fallthru
          _
        // Predicated region
        $region25: #{tpu_custom_call.1} parent=11 // pred_check
          %p210 = pneg %p139
        $region26: #{tpu_custom_call.1} parent=11 // pred_check_branch
          %212 = sbr.rel (%p210) target = $region28
        $region27: #{tpu_custom_call.1} parent=11 // pred_region
          _
        $region28: #{tpu_custom_call.1} parent=11 // pred_fallthru
          _
        // Predicated region
        $region29: #{tpu_custom_call.1} parent=11 // pred_check
          %p213 = pneg %p160
        $region30: #{tpu_custom_call.1} parent=11 // pred_check_branch
          %215 = sbr.rel (%p213) target = $region32
        $region31: #{tpu_custom_call.1} parent=11 // pred_region
          _
        $region32: #{tpu_custom_call.1} parent=11 // pred_fallthru
          _
      $region12: #{tpu_custom_call.1} parent=5 // pred_fallthru
        _
      %p216 = scmp.lt.s32.totalorder %s15, 2
      // Predicated region
      $region33: #{tpu_custom_call.1} parent=5 // pred_check
        %p217 = pneg %p216
      $region34: #{tpu_custom_call.1} parent=5 // pred_check_branch
        %219 = sbr.rel (%p217) target = $region36
      $region35: #{tpu_custom_call.1} parent=5 // pred_region
        // Predicated region
        $region37: #{tpu_custom_call.1} parent=35 // pred_check
          %p220 = pneg %p49
        $region38: #{tpu_custom_call.1} parent=35 // pred_check_branch
          %222 = sbr.rel (%p220) target = $region40
        $region39: #{tpu_custom_call.1} parent=35 // pred_region
          %s223 = smul.u32 8, %s23
          %p224 = scmp.lt.s32.totalorder %s22, 1
          %s225 = scalar_select %p224, %s22, 1
          %p226 = scmp.lt.s32.totalorder %s223, 7
          %s227 = scalar_select %p226, %s223, 7
          %s228 = smul.addr %s225, 8
          %s229 = sadd.s32 %s227, %s228
          %s230 = smul.addr %s229, 4
          %s231 = scalar_lea.vmem %s0, %s230
          %s232 = smul.u32 8, %s23
        $region40: #{tpu_custom_call.1} parent=35 // pred_fallthru
          _
      $region36: #{tpu_custom_call.1} parent=5 // pred_fallthru
        _
      %p233 = scmp.le.s32.totalorder 1, %s15
      %p234 = scmp.lt.s32.totalorder %s15, 3
      %p235 = pnand %p233, %p234
      %p236 = pneg %p235
      // Predicated region
      $region41: #{tpu_custom_call.1} parent=5 // pred_check
        _
      $region42: #{tpu_custom_call.1} parent=5 // pred_check_branch
        %238 = sbr.rel (%p235) target = $region44
      $region43: #{tpu_custom_call.1} parent=5 // pred_region
        %s239 = ssub.s32 %s15, 1
        %s240 = smul.u32 8, %s25
        %p241 = scmp.lt.s32.totalorder %s24, 1
        %s242 = scalar_select %p241, %s24, 1
        %p243 = scmp.lt.s32.totalorder %s240, 7
        %s244 = scalar_select %p243, %s240, 7
        %s245 = smul.addr %s242, 8
        %s246 = sadd.s32 %s244, %s245
        %s247 = smul.addr %s246, 4
        %s248 = scalar_lea.vmem %s0, %s247
        %p249 = pneg %p55
        %p250 = pneg %p52
        %p251 = pneg %p76
        %p252 = pneg %p73
        %p253 = pneg %p97
        %p254 = pneg %p94
        %p255 = pneg %p118
        %p256 = pneg %p115
        %p257 = pneg %p139
        %p258 = pneg %p136
        %p259 = pneg %p160
        %p260 = pneg %p157
        %p261 = pneg %p186
        %p262 = pneg %p183
        %s263 = sand.u32 %s173, 1
        %s264 = scalar_lea.sflag [#allocation4], %s263
        %s265 = sand.u32 %s173, 1
        %s266 = scalar_lea.vmem [#allocation3], %s265
        %s267 = smul.u32 8, %s25
        %p268 = scmp.lt.s32.totalorder %s24, 1
        %s269 = scalar_select %p268, %s24, 1
        %p270 = scmp.lt.s32.totalorder %s267, 7
        %s271 = scalar_select %p270, %s267, 7
        %s272 = smul.addr %s269, 8
        %s273 = sadd.s32 %s271, %s272
        %s274 = smul.addr %s273, 4
        %s275 = scalar_lea.vmem %s0, %s274
        %s276 = smul.u32 8, %s25
        %p278 = scmp.eq.s32.totalorder %s25, 0
        // Predicated region
        $region45: #{tpu_custom_call.1} parent=43 // pred_check
          %p279 = pneg %p278
        $region46: #{tpu_custom_call.1} parent=43 // pred_check_branch
          %281 = sbr.rel (%p279) target = $region48
        $region47: #{tpu_custom_call.1} parent=43 // pred_region
          %282 = vst [vmem:[#allocation2] sm:$0xff] 0.0
          %v283 = vlaneseq
          %vm284 = vcmp.ge.s32.totalorder %v283, 0
          %vm285 = vcmp.lt.s32.totalorder %v283, 512
          %vm286 = vmand %vm284, %vm285
          %287 = vst.msk [vmem:[#allocation2 + $0x8] sm:$0xf] %vm286, 0.0
        $region48: #{tpu_custom_call.1} parent=43 // pred_fallthru
          _
        %v288 = vld [vmem:[%s275] sm:$0xf]
        %v289 = vld [vmem:[%s275 + $0x4] sm:$0xf]
        %v290 = vld [vmem:[%s275 + $0x8] sm:$0xf]
        %v291 = vld [vmem:[%s275 + $0xc] sm:$0xf]
        %v292 = vld [vmem:[%s275 + $0x10] sm:$0xf]
        %v293 = vld [vmem:[%s275 + $0x14] sm:$0xf]
        %v294 = vld [vmem:[%s275 + $0x18] sm:$0xf]
        %v295 = vld [vmem:[%s275 + $0x1c] sm:$0xf]
        %v296 = vld [vmem:[%s1] sm:$0xf]
        %v297 = vld [vmem:[%s1 + $0x4] sm:$0xf]
        %v298 = vld [vmem:[%s1 + $0x8] sm:$0xf]
        %v299 = vld [vmem:[%s1 + $0xc] sm:$0x3]
        %v300 = vld [vmem:[%s2] sm:$0x1]
        %v302 = vlaneseq
        %v303 = vshrl.u32 %v302, 7
        %v304 = vsub.s32 0, %v303
        %v305 = vrot.slane %v300, %v304
        %v315 = vunpack.c.l.b16 %v288
        %v316 = vunpack.c.l.b16 %v289
        %v317 = vunpack.c.l.b16 %v290
        %v318 = vunpack.c.l.b16 %v291
        %v319 = vunpack.c.l.b16 %v292
        %v320 = vunpack.c.l.b16 %v293
        %v321 = vunpack.c.l.b16 %v294
        %v322 = vunpack.c.l.b16 %v295
        %v323 = vpack.c.b16 %v316, %v315
        %v324 = vpack.c.b16 %v318, %v317
        %v325 = vpack.c.b16 %v320, %v319
        %v326 = vpack.c.b16 %v322, %v321
        %v331 = vunpack.c.l.b16 %v296
        %v332 = vunpack.c.l.b16 %v297
        %v333 = vunpack.c.l.b16 %v298
        %v334 = vunpack.c.l.b16 %v299
        %v335 = vpack.c.b16 %v332, %v331
        %v336 = vpack.c.b16 %v334, %v333
        %vm338 = vcmask 220160
        %v340 = vsel %vm338, %v323, 0
        %v343 = vsel %vm338, %v324, 0
        %v346 = vsel %vm338, %v325, 0
        %v349 = vsel %vm338, %v326, 0
        %vm351 = vcmask 1044480
        %vm352 = vcmask 1045504
        %v353 = vsel %vm351, 4294967295, 65535
        %v354 = vsel %vm352, %v353, 0
        %v356 = vand.u32 %v336, %v354
        %358 = vmatprep.subr.bf16.mxu0 0
        %359 = vmatpush1.bf16.msra.mxu0 %v335
        %360 = vmatprep.subr.bf16.mxu0 0
        %361 = vmatpush1.bf16.msra.mxu0 %v356
        %362 = vmatprep.subr.bf16.mxu0 0
        %363 = vmatpush1.bf16.msra.mxu0 0
        %364 = vmatprep.subr.bf16.mxu0 0
        %365 = vmatpush1.bf16.msra.mxu0 0
        %366 = vmatprep.subr.bf16.mxu0 0
        %367 = vmatpush1.bf16.msra.mxu0 0
        %368 = vmatprep.subr.bf16.mxu0 0
        %369 = vmatpush1.bf16.msra.mxu0 0
        %370 = vmatprep.subr.bf16.mxu0 0
        %371 = vmatpush1.bf16.msra.mxu0 0
        %372 = vmatprep.subr.bf16.mxu0 0
        %373 = vmatpush1.bf16.msra.mxu0 0
        %374 = vmatprep.subr.bf16.mxu0 0
        %375 = vmatpush1.bf16.msra.mxu0 0
        %376 = vmatprep.subr.bf16.mxu0 0
        %377 = vmatpush1.bf16.msra.mxu0 0
        %378 = vmatprep.subr.bf16.mxu0 0
        %379 = vmatpush1.bf16.msra.mxu0 0
        %380 = vmatprep.subr.bf16.mxu0 0
        %381 = vmatpush1.bf16.msra.mxu0 0
        %382 = vmatprep.subr.bf16.mxu0 0
        %383 = vmatpush1.bf16.msra.mxu0 0
        %384 = vmatprep.subr.bf16.mxu0 0
        %385 = vmatpush1.bf16.msra.mxu0 0
        %386 = vmatprep.subr.bf16.mxu0 0
        %387 = vmatpush1.bf16.msra.mxu0 0
        %388 = vmatprep.subr.bf16.mxu0 0
        %389 = vmatpush1.bf16.msra.mxu0 0
        %390 = vmatprep.mubr.bf16.mxu0 0
        %391 = vmatmul.mubr.bf16.gmra.mrb[0].mxu0 %v340
        %v392 = vpop.f32.mrb[0].mxu0
        %v393 = vadd.f32 %v305, %v392
        %v394 = vpop.f32.mrb[0].mxu0
        %v395 = vpop.f32.mrb[0].mxu0
        %v396 = vadd.f32 %v305, %v395
        %v397 = vpop.f32.mrb[0].mxu0
        %398 = vmatprep.mubr.bf16.mxu0 0
        %399 = vmatmul.mubr.bf16.gmra.mrb[0].mxu0 %v343
        %v400 = vpop.f32.mrb[0].mxu0
        %v401 = vadd.f32 %v305, %v400
        %v402 = vpop.f32.mrb[0].mxu0
        %v403 = vpop.f32.mrb[0].mxu0
        %v404 = vadd.f32 %v305, %v403
        %v405 = vpop.f32.mrb[0].mxu0
        %406 = vmatprep.mubr.bf16.mxu0 0
        %407 = vmatmul.mubr.bf16.gmra.mrb[0].mxu0 %v346
        %v408 = vpop.f32.mrb[0].mxu0
        %v409 = vadd.f32 %v305, %v408
        %v410 = vpop.f32.mrb[0].mxu0
        %v411 = vpop.f32.mrb[0].mxu0
        %v412 = vadd.f32 %v305, %v411
        %v413 = vpop.f32.mrb[0].mxu0
        %414 = vmatprep.mubr.bf16.mxu0 0
        %415 = vmatmul.mubr.bf16.gmra.mrb[0].mxu0 %v349
        %v416 = vpop.f32.mrb[0].mxu0
        %v417 = vadd.f32 %v305, %v416
        %v418 = vpop.f32.mrb[0].mxu0
        %v419 = vpop.f32.mrb[0].mxu0
        %v420 = vadd.f32 %v305, %v419
        %v421 = vpop.f32.mrb[0].mxu0
        %422 = vdwg.mxu0
        %v423 = vmul.f32 %v393, 0.5
        %v424 = vmul.f32 %v396, 0.5
        %v425 = vmul.f32 %v401, 0.5
        %v426 = vmul.f32 %v404, 0.5
        %v427 = vmul.f32 %v409, 0.5
        %v428 = vmul.f32 %v412, 0.5
        %v429 = vmul.f32 %v417, 0.5
        %v430 = vmul.f32 %v420, 0.5
        %v431 = vtanh.pop %v423
        %v432 = vtanh.pop %v424
        %v433 = vtanh.pop %v425
        %v434 = vtanh.pop %v426
        %v435 = vtanh.pop %v427
        %v436 = vtanh.pop %v428
        %v437 = vtanh.pop %v429
        %v438 = vtanh.pop %v430
        %v439 = vadd.f32 %v431, 1.0
        %v440 = vadd.f32 %v432, 1.0
        %v441 = vadd.f32 %v433, 1.0
        %v442 = vadd.f32 %v434, 1.0
        %v443 = vadd.f32 %v435, 1.0
        %v444 = vadd.f32 %v436, 1.0
        %v445 = vadd.f32 %v437, 1.0
        %v446 = vadd.f32 %v438, 1.0
        %v447 = vmul.f32 %v439, 0.5
        %v448 = vmul.f32 %v440, 0.5
        %v449 = vmul.f32 %v441, 0.5
        %v450 = vmul.f32 %v442, 0.5
        %v451 = vmul.f32 %v443, 0.5
        %v452 = vmul.f32 %v444, 0.5
        %v453 = vmul.f32 %v445, 0.5
        %v454 = vmul.f32 %v446, 0.5
        %v455 = vmul.f32 %v393, %v447
        %v456 = vmul.f32 %v396, %v448
        %v457 = vmul.f32 %v401, %v449
        %v458 = vmul.f32 %v404, %v450
        %v459 = vmul.f32 %v409, %v451
        %v460 = vmul.f32 %v412, %v452
        %v461 = vmul.f32 %v417, %v453
        %v462 = vmul.f32 %v420, %v454
        %v463 = vlaneseq
        %v464 = vand.u32 %v463, 127
        %vm465 = vcmp.eq.s32.totalorder %v464, 40
        %v466 = vsel %vm465, 1.0, %v455
        %v467 = vsel %vm465, 1.0, %v456
        %v468 = vsel %vm465, 1.0, %v457
        %v469 = vsel %vm465, 1.0, %v458
        %v470 = vsel %vm465, 1.0, %v459
        %v471 = vsel %vm465, 1.0, %v460
        %v472 = vsel %vm465, 1.0, %v461
        %v473 = vsel %vm465, 1.0, %v462
        %v474 = vpack.c.bf16 %v467, %v466
        %v475 = vpack.c.bf16 %v469, %v468
        %v476 = vpack.c.bf16 %v471, %v470
        %v477 = vpack.c.bf16 %v473, %v472
        %v478 = vld [vmem:[%s3] sm:$0xff]
        %v479 = vld [vmem:[%s3 + $0x8] sm:$0xff]
        %v480 = vld [vmem:[%s3 + $0x10] sm:$0xff]
        %v481 = vld [vmem:[%s3 + $0x18] sm:$0xff]
        %v482 = vld [vmem:[%s3 + $0x20] sm:$0xff]
        %v483 = vld [vmem:[%s3 + $0x28] sm:$0xff]
        %v484 = vld [vmem:[%s3 + $0x30] sm:$0xff]
        %v485 = vld [vmem:[%s3 + $0x38] sm:$0xff]
        %v486 = vld [vmem:[%s3 + $0x40] sm:$0xff]
        %v487 = vld [vmem:[%s3 + $0x48] sm:$0xff]
        %v488 = vld [vmem:[%s3 + $0x50] sm:$0xff]
        %v489 = vld [vmem:[%s3 + $0x58] sm:$0xff]
        %v490 = vld [vmem:[%s3 + $0x60] sm:$0xff]
        %v491 = vld [vmem:[%s3 + $0x68] sm:$0xff]
        %v492 = vld [vmem:[%s3 + $0x70] sm:$0xff]
        %v493 = vld [vmem:[%s3 + $0x78] sm:$0xff]
        %v494 = vld [vmem:[%s3 + $0x80] sm:$0xff]
        %v495 = vld [vmem:[%s3 + $0x88] sm:$0xff]
        %v496 = vld [vmem:[%s3 + $0x90] sm:$0xff]
        %v497 = vld [vmem:[%s3 + $0x98] sm:$0xff]
        %v498 = vld [vmem:[%s3 + $0xa0] sm:$0xff]
        %v499 = vld [vmem:[%s3 + $0xa8] sm:$0xff]
        %v500 = vld [vmem:[%s3 + $0xb0] sm:$0xff]
        %v501 = vld [vmem:[%s3 + $0xb8] sm:$0xff]
        %v502 = vld [vmem:[%s3 + $0xc0] sm:$0xff]
        %v503 = vld [vmem:[%s3 + $0xc8] sm:$0xff]
        %v504 = vld [vmem:[%s3 + $0xd0] sm:$0xff]
        %v505 = vld [vmem:[%s3 + $0xd8] sm:$0xff]
        %v506 = vld [vmem:[%s3 + $0xe0] sm:$0xff]
        %v507 = vld [vmem:[%s3 + $0xe8] sm:$0xff]
        %v508 = vld [vmem:[%s3 + $0xf0] sm:$0xff]
        %v509 = vld [vmem:[%s3 + $0xf8] sm:$0xff]
        %v510 = vld [vmem:[%s3 + $0x100] sm:$0xff]
        %v511 = vld [vmem:[%s3 + $0x108] sm:$0xff]
        %v512 = vld [vmem:[%s3 + $0x110] sm:$0xff]
        %v513 = vld [vmem:[%s3 + $0x118] sm:$0xff]
        %v514 = vld [vmem:[%s3 + $0x120] sm:$0xff]
        %v515 = vld [vmem:[%s3 + $0x128] sm:$0xff]
        %v516 = vld [vmem:[%s3 + $0x130] sm:$0xff]
        %v517 = vld [vmem:[%s3 + $0x138] sm:$0xff]
        %v518 = vld [vmem:[%s3 + $0x140] sm:$0xff]
        %v519 = vld [vmem:[%s3 + $0x148] sm:$0xff]
        %v520 = vld [vmem:[%s3 + $0x150] sm:$0xff]
        %v521 = vld [vmem:[%s3 + $0x158] sm:$0xff]
        %v522 = vld [vmem:[%s3 + $0x160] sm:$0xff]
        %v523 = vld [vmem:[%s3 + $0x168] sm:$0xff]
        %v524 = vld [vmem:[%s3 + $0x170] sm:$0xff]
        %v525 = vld [vmem:[%s3 + $0x178] sm:$0xff]
        %v526 = vld [vmem:[%s3 + $0x180] sm:$0xff]
        %v527 = vld [vmem:[%s3 + $0x188] sm:$0xff]
        %v528 = vld [vmem:[%s3 + $0x190] sm:$0xff]
        %v529 = vld [vmem:[%s3 + $0x198] sm:$0xff]
        %v530 = vld [vmem:[%s3 + $0x1a0] sm:$0xff]
        %v531 = vld [vmem:[%s3 + $0x1a8] sm:$0xff]
        %v532 = vld [vmem:[%s3 + $0x1b0] sm:$0xff]
        %v533 = vld [vmem:[%s3 + $0x1b8] sm:$0xff]
        %v534 = vld [vmem:[%s3 + $0x1c0] sm:$0xff]
        %v535 = vld [vmem:[%s3 + $0x1c8] sm:$0xff]
        %v536 = vld [vmem:[%s3 + $0x1d0] sm:$0xff]
        %v537 = vld [vmem:[%s3 + $0x1d8] sm:$0xff]
        %v538 = vld [vmem:[%s3 + $0x1e0] sm:$0xff]
        %v539 = vld [vmem:[%s3 + $0x1e8] sm:$0xff]
        %v540 = vld [vmem:[%s3 + $0x1f0] sm:$0xff]
        %v541 = vld [vmem:[%s3 + $0x1f8] sm:$0xff]
        %v542 = vld [vmem:[%s3 + $0x200] sm:$0xff]
        %v543 = vld [vmem:[%s3 + $0x208] sm:$0xff]
        %v544 = vld [vmem:[%s3 + $0x210] sm:$0xff]
        %v545 = vld [vmem:[%s3 + $0x218] sm:$0xff]
        %v546 = vld [vmem:[%s3 + $0x220] sm:$0xff]
        %v547 = vld [vmem:[%s3 + $0x228] sm:$0xff]
        %v548 = vld [vmem:[%s3 + $0x230] sm:$0xff]
        %v549 = vld [vmem:[%s3 + $0x238] sm:$0xff]
        %v550 = vld [vmem:[%s3 + $0x240] sm:$0xff]
        %v551 = vld [vmem:[%s3 + $0x248] sm:$0xff]
        %v552 = vld [vmem:[%s3 + $0x250] sm:$0xff]
        %v553 = vld [vmem:[%s3 + $0x258] sm:$0xff]
        %v554 = vld [vmem:[%s3 + $0x260] sm:$0xff]
        %v555 = vld [vmem:[%s3 + $0x268] sm:$0xff]
        %v556 = vld [vmem:[%s3 + $0x270] sm:$0xff]
        %v557 = vld [vmem:[%s3 + $0x278] sm:$0xff]
        %v558 = vld [vmem:[%s3 + $0x280] sm:$0xff]
        %v559 = vld [vmem:[%s3 + $0x288] sm:$0xff]
        %v560 = vld [vmem:[%s3 + $0x290] sm:$0xff]
        %v561 = vld [vmem:[%s3 + $0x298] sm:$0xff]
        %v562 = vld [vmem:[%s3 + $0x2a0] sm:$0xff]
        %v563 = vld [vmem:[%s3 + $0x2a8] sm:$0xff]
        %v564 = vld [vmem:[%s3 + $0x2b0] sm:$0xff]
        %v565 = vld [vmem:[%s3 + $0x2b8] sm:$0xff]
        %v566 = vld [vmem:[%s3 + $0x2c0] sm:$0xff]
        %v567 = vld [vmem:[%s3 + $0x2c8] sm:$0xff]
        %v568 = vld [vmem:[%s3 + $0x2d0] sm:$0xff]
        %v569 = vld [vmem:[%s3 + $0x2d8] sm:$0xff]
        %v570 = vld [vmem:[%s3 + $0x2e0] sm:$0xff]
        %v571 = vld [vmem:[%s3 + $0x2e8] sm:$0xff]
        %v572 = vld [vmem:[%s3 + $0x2f0] sm:$0xff]
        %v573 = vld [vmem:[%s3 + $0x2f8] sm:$0xff]
        %v670 = vunpack.c.l.b16 %v478
        %v671 = vunpack.c.h.b16 %v478
        %v672 = vunpack.c.l.b16 %v479
        %v673 = vunpack.c.h.b16 %v479
        %v674 = vunpack.c.l.b16 %v480
        %v675 = vunpack.c.h.b16 %v480
        %v676 = vunpack.c.l.b16 %v481
        %v677 = vunpack.c.h.b16 %v481
        %v678 = vunpack.c.l.b16 %v482
        %v679 = vunpack.c.h.b16 %v482
        %v680 = vunpack.c.l.b16 %v483
        %v681 = vunpack.c.h.b16 %v483
        %v682 = vunpack.c.l.b16 %v484
        %v683 = vunpack.c.h.b16 %v484
        %v684 = vunpack.c.l.b16 %v485
        %v685 = vunpack.c.h.b16 %v485
        %v686 = vunpack.c.l.b16 %v486
        %v687 = vunpack.c.h.b16 %v486
        %v688 = vunpack.c.l.b16 %v487
        %v689 = vunpack.c.h.b16 %v487
        %v690 = vunpack.c.l.b16 %v488
        %v691 = vunpack.c.h.b16 %v488
        %v692 = vunpack.c.l.b16 %v489
        %v693 = vunpack.c.h.b16 %v489
        %v694 = vunpack.c.l.b16 %v490
        %v695 = vunpack.c.h.b16 %v490
        %v696 = vunpack.c.l.b16 %v491
        %v697 = vunpack.c.h.b16 %v491
        %v698 = vunpack.c.l.b16 %v492
        %v699 = vunpack.c.h.b16 %v492
        %v700 = vunpack.c.l.b16 %v493
        %v701 = vunpack.c.h.b16 %v493
        %v702 = vunpack.c.l.b16 %v494
        %v703 = vunpack.c.h.b16 %v494
        %v704 = vunpack.c.l.b16 %v495
        %v705 = vunpack.c.h.b16 %v495
        %v706 = vunpack.c.l.b16 %v496
        %v707 = vunpack.c.h.b16 %v496
        %v708 = vunpack.c.l.b16 %v497
        %v709 = vunpack.c.h.b16 %v497
        %v710 = vunpack.c.l.b16 %v498
        %v711 = vunpack.c.h.b16 %v498
        %v712 = vunpack.c.l.b16 %v499
        %v713 = vunpack.c.h.b16 %v499
        %v714 = vunpack.c.l.b16 %v500
        %v715 = vunpack.c.h.b16 %v500
        %v716 = vunpack.c.l.b16 %v501
        %v717 = vunpack.c.h.b16 %v501
        %v718 = vunpack.c.l.b16 %v502
        %v719 = vunpack.c.h.b16 %v502
        %v720 = vunpack.c.l.b16 %v503
        %v721 = vunpack.c.h.b16 %v503
        %v722 = vunpack.c.l.b16 %v504
        %v723 = vunpack.c.h.b16 %v504
        %v724 = vunpack.c.l.b16 %v505
        %v725 = vunpack.c.h.b16 %v505
        %v726 = vunpack.c.l.b16 %v506
        %v727 = vunpack.c.h.b16 %v506
        %v728 = vunpack.c.l.b16 %v507
        %v729 = vunpack.c.h.b16 %v507
        %v730 = vunpack.c.l.b16 %v508
        %v731 = vunpack.c.h.b16 %v508
        %v732 = vunpack.c.l.b16 %v509
        %v733 = vunpack.c.h.b16 %v509
        %v734 = vunpack.c.l.b16 %v510
        %v735 = vunpack.c.h.b16 %v510
        %v736 = vunpack.c.l.b16 %v511
        %v737 = vunpack.c.h.b16 %v511
        %v738 = vunpack.c.l.b16 %v512
        %v739 = vunpack.c.h.b16 %v512
        %v740 = vunpack.c.l.b16 %v513
        %v741 = vunpack.c.h.b16 %v513
        %v742 = vunpack.c.l.b16 %v514
        %v743 = vunpack.c.h.b16 %v514
        %v744 = vunpack.c.l.b16 %v515
        %v745 = vunpack.c.h.b16 %v515
        %v746 = vunpack.c.l.b16 %v516
        %v747 = vunpack.c.h.b16 %v516
        %v748 = vunpack.c.l.b16 %v517
        %v749 = vunpack.c.h.b16 %v517
        %v750 = vunpack.c.l.b16 %v518
        %v751 = vunpack.c.h.b16 %v518
        %v752 = vunpack.c.l.b16 %v519
        %v753 = vunpack.c.h.b16 %v519
        %v754 = vunpack.c.l.b16 %v520
        %v755 = vunpack.c.h.b16 %v520
        %v756 = vunpack.c.l.b16 %v521
        %v757 = vunpack.c.h.b16 %v521
        %v758 = vunpack.c.l.b16 %v522
        %v759 = vunpack.c.h.b16 %v522
        %v760 = vunpack.c.l.b16 %v523
        %v761 = vunpack.c.h.b16 %v523
        %v762 = vunpack.c.l.b16 %v524
        %v763 = vunpack.c.h.b16 %v524
        %v764 = vunpack.c.l.b16 %v525
        %v765 = vunpack.c.h.b16 %v525
        %v766 = vunpack.c.l.b16 %v526
        %v767 = vunpack.c.h.b16 %v526
        %v768 = vunpack.c.l.b16 %v527
        %v769 = vunpack.c.h.b16 %v527
        %v770 = vunpack.c.l.b16 %v528
        %v771 = vunpack.c.h.b16 %v528
        %v772 = vunpack.c.l.b16 %v529
        %v773 = vunpack.c.h.b16 %v529
        %v774 = vunpack.c.l.b16 %v530
        %v775 = vunpack.c.h.b16 %v530
        %v776 = vunpack.c.l.b16 %v531
        %v777 = vunpack.c.h.b16 %v531
        %v778 = vunpack.c.l.b16 %v532
        %v779 = vunpack.c.h.b16 %v532
        %v780 = vunpack.c.l.b16 %v533
        %v781 = vunpack.c.h.b16 %v533
        %v782 = vunpack.c.l.b16 %v534
        %v783 = vunpack.c.h.b16 %v534
        %v784 = vunpack.c.l.b16 %v535
        %v785 = vunpack.c.h.b16 %v535
        %v786 = vunpack.c.l.b16 %v536
        %v787 = vunpack.c.h.b16 %v536
        %v788 = vunpack.c.l.b16 %v537
        %v789 = vunpack.c.h.b16 %v537
        %v790 = vunpack.c.l.b16 %v538
        %v791 = vunpack.c.h.b16 %v538
        %v792 = vunpack.c.l.b16 %v539
        %v793 = vunpack.c.h.b16 %v539
        %v794 = vunpack.c.l.b16 %v540
        %v795 = vunpack.c.h.b16 %v540
        %v796 = vunpack.c.l.b16 %v541
        %v797 = vunpack.c.h.b16 %v541
        %v798 = vunpack.c.l.b16 %v542
        %v799 = vunpack.c.h.b16 %v542
        %v800 = vunpack.c.l.b16 %v543
        %v801 = vunpack.c.h.b16 %v543
        %v802 = vunpack.c.l.b16 %v544
        %v803 = vunpack.c.h.b16 %v544
        %v804 = vunpack.c.l.b16 %v545
        %v805 = vunpack.c.h.b16 %v545
        %v806 = vunpack.c.l.b16 %v546
        %v807 = vunpack.c.h.b16 %v546
        %v808 = vunpack.c.l.b16 %v547
        %v809 = vunpack.c.h.b16 %v547
        %v810 = vunpack.c.l.b16 %v548
        %v811 = vunpack.c.h.b16 %v548
        %v812 = vunpack.c.l.b16 %v549
        %v813 = vunpack.c.h.b16 %v549
        %v814 = vunpack.c.l.b16 %v550
        %v815 = vunpack.c.h.b16 %v550
        %v816 = vunpack.c.l.b16 %v551
        %v817 = vunpack.c.h.b16 %v551
        %v818 = vunpack.c.l.b16 %v552
        %v819 = vunpack.c.h.b16 %v552
        %v820 = vunpack.c.l.b16 %v553
        %v821 = vunpack.c.h.b16 %v553
        %v822 = vunpack.c.l.b16 %v554
        %v823 = vunpack.c.h.b16 %v554
        %v824 = vunpack.c.l.b16 %v555
        %v825 = vunpack.c.h.b16 %v555
        %v826 = vunpack.c.l.b16 %v556
        %v827 = vunpack.c.h.b16 %v556
        %v828 = vunpack.c.l.b16 %v557
        %v829 = vunpack.c.h.b16 %v557
        %v830 = vunpack.c.l.b16 %v558
        %v831 = vunpack.c.h.b16 %v558
        %v832 = vunpack.c.l.b16 %v559
        %v833 = vunpack.c.h.b16 %v559
        %v834 = vunpack.c.l.b16 %v560
        %v835 = vunpack.c.h.b16 %v560
        %v836 = vunpack.c.l.b16 %v561
        %v837 = vunpack.c.h.b16 %v561
        %v838 = vunpack.c.l.b16 %v562
        %v839 = vunpack.c.h.b16 %v562
        %v840 = vunpack.c.l.b16 %v563
        %v841 = vunpack.c.h.b16 %v563
        %v842 = vunpack.c.l.b16 %v564
        %v843 = vunpack.c.h.b16 %v564
        %v844 = vunpack.c.l.b16 %v565
        %v845 = vunpack.c.h.b16 %v565
        %v846 = vunpack.c.l.b16 %v566
        %v847 = vunpack.c.h.b16 %v566
        %v848 = vunpack.c.l.b16 %v567
        %v849 = vunpack.c.h.b16 %v567
        %v850 = vunpack.c.l.b16 %v568
        %v851 = vunpack.c.h.b16 %v568
        %v852 = vunpack.c.l.b16 %v569
        %v853 = vunpack.c.h.b16 %v569
        %v854 = vunpack.c.l.b16 %v570
        %v855 = vunpack.c.h.b16 %v570
        %v856 = vunpack.c.l.b16 %v571
        %v857 = vunpack.c.h.b16 %v571
        %v858 = vunpack.c.l.b16 %v572
        %v859 = vunpack.c.h.b16 %v572
        %v860 = vunpack.c.l.b16 %v573
        %v861 = vunpack.c.h.b16 %v573
        %v862 = vpack.c.b16 %v682, %v670
        %v863 = vpack.c.b16 %v683, %v671
        %v864 = vpack.c.b16 %v684, %v672
        %v865 = vpack.c.b16 %v685, %v673
        %v866 = vpack.c.b16 %v686, %v674
        %v867 = vpack.c.b16 %v687, %v675
        %v868 = vpack.c.b16 %v688, %v676
        %v869 = vpack.c.b16 %v689, %v677
        %v870 = vpack.c.b16 %v690, %v678
        %v871 = vpack.c.b16 %v691, %v679
        %v872 = vpack.c.b16 %v692, %v680
        %v873 = vpack.c.b16 %v693, %v681
        %v874 = vpack.c.b16 %v706, %v694
        %v875 = vpack.c.b16 %v707, %v695
        %v876 = vpack.c.b16 %v708, %v696
        %v877 = vpack.c.b16 %v709, %v697
        %v878 = vpack.c.b16 %v710, %v698
        %v879 = vpack.c.b16 %v711, %v699
        %v880 = vpack.c.b16 %v712, %v700
        %v881 = vpack.c.b16 %v713, %v701
        %v882 = vpack.c.b16 %v714, %v702
        %v883 = vpack.c.b16 %v715, %v703
        %v884 = vpack.c.b16 %v716, %v704
        %v885 = vpack.c.b16 %v717, %v705
        %v886 = vpack.c.b16 %v730, %v718
        %v887 = vpack.c.b16 %v731, %v719
        %v888 = vpack.c.b16 %v732, %v720
        %v889 = vpack.c.b16 %v733, %v721
        %v890 = vpack.c.b16 %v734, %v722
        %v891 = vpack.c.b16 %v735, %v723
        %v892 = vpack.c.b16 %v736, %v724
        %v893 = vpack.c.b16 %v737, %v725
        %v894 = vpack.c.b16 %v738, %v726
        %v895 = vpack.c.b16 %v739, %v727
        %v896 = vpack.c.b16 %v740, %v728
        %v897 = vpack.c.b16 %v741, %v729
        %v898 = vpack.c.b16 %v754, %v742
        %v899 = vpack.c.b16 %v755, %v743
        %v900 = vpack.c.b16 %v756, %v744
        %v901 = vpack.c.b16 %v757, %v745
        %v902 = vpack.c.b16 %v758, %v746
        %v903 = vpack.c.b16 %v759, %v747
        %v904 = vpack.c.b16 %v760, %v748
        %v905 = vpack.c.b16 %v761, %v749
        %v906 = vpack.c.b16 %v762, %v750
        %v907 = vpack.c.b16 %v763, %v751
        %v908 = vpack.c.b16 %v764, %v752
        %v909 = vpack.c.b16 %v765, %v753
        %v910 = vpack.c.b16 %v778, %v766
        %v911 = vpack.c.b16 %v779, %v767
        %v912 = vpack.c.b16 %v780, %v768
        %v913 = vpack.c.b16 %v781, %v769
        %v914 = vpack.c.b16 %v782, %v770
        %v915 = vpack.c.b16 %v783, %v771
        %v916 = vpack.c.b16 %v784, %v772
        %v917 = vpack.c.b16 %v785, %v773
        %v918 = vpack.c.b16 %v786, %v774
        %v919 = vpack.c.b16 %v787, %v775
        %v920 = vpack.c.b16 %v788, %v776
        %v921 = vpack.c.b16 %v789, %v777
        %v922 = vpack.c.b16 %v802, %v790
        %v923 = vpack.c.b16 %v803, %v791
        %v924 = vpack.c.b16 %v804, %v792
        %v925 = vpack.c.b16 %v805, %v793
        %v926 = vpack.c.b16 %v806, %v794
        %v927 = vpack.c.b16 %v807, %v795
        %v928 = vpack.c.b16 %v808, %v796
        %v929 = vpack.c.b16 %v809, %v797
        %v930 = vpack.c.b16 %v810, %v798
        %v931 = vpack.c.b16 %v811, %v799
        %v932 = vpack.c.b16 %v812, %v800
        %v933 = vpack.c.b16 %v813, %v801
        %v934 = vpack.c.b16 %v826, %v814
        %v935 = vpack.c.b16 %v827, %v815
        %v936 = vpack.c.b16 %v828, %v816
        %v937 = vpack.c.b16 %v829, %v817
        %v938 = vpack.c.b16 %v830, %v818
        %v939 = vpack.c.b16 %v831, %v819
        %v940 = vpack.c.b16 %v832, %v820
        %v941 = vpack.c.b16 %v833, %v821
        %v942 = vpack.c.b16 %v834, %v822
        %v943 = vpack.c.b16 %v835, %v823
        %v944 = vpack.c.b16 %v836, %v824
        %v945 = vpack.c.b16 %v837, %v825
        %v946 = vpack.c.b16 %v850, %v838
        %v947 = vpack.c.b16 %v851, %v839
        %v948 = vpack.c.b16 %v852, %v840
        %v949 = vpack.c.b16 %v853, %v841
        %v950 = vpack.c.b16 %v854, %v842
        %v951 = vpack.c.b16 %v855, %v843
        %v952 = vpack.c.b16 %v856, %v844
        %v953 = vpack.c.b16 %v857, %v845
        %v954 = vpack.c.b16 %v858, %v846
        %v955 = vpack.c.b16 %v859, %v847
        %v956 = vpack.c.b16 %v860, %v848
        %v957 = vpack.c.b16 %v861, %v849
        %1054 = vmatprep.subr.bf16.mxu0 %v863
        %1055 = vmatpush1.bf16.msra.mxu0 %v862
        %1056 = vmatprep.subr.bf16.mxu0 %v875
        %1057 = vmatpush1.bf16.msra.mxu0 %v874
        %1058 = vmatprep.subr.bf16.mxu0 %v887
        %1059 = vmatpush1.bf16.msra.mxu0 %v886
        %1060 = vmatprep.subr.bf16.mxu0 %v899
        %1061 = vmatpush1.bf16.msra.mxu0 %v898
        %1062 = vmatprep.subr.bf16.mxu0 %v911
        %1063 = vmatpush1.bf16.msra.mxu0 %v910
        %1064 = vmatprep.subr.bf16.mxu0 %v923
        %1065 = vmatpush1.bf16.msra.mxu0 %v922
        %1066 = vmatprep.subr.bf16.mxu0 %v935
        %1067 = vmatpush1.bf16.msra.mxu0 %v934
        %1068 = vmatprep.subr.bf16.mxu0 %v947
        %1069 = vmatpush1.bf16.msra.mxu0 %v946
        %1070 = vmatprep.subr.bf16.mxu0 0
        %1071 = vmatpush1.bf16.msra.mxu0 0
        %1072 = vmatprep.subr.bf16.mxu0 0
        %1073 = vmatpush1.bf16.msra.mxu0 0
        %1074 = vmatprep.subr.bf16.mxu0 0
        %1075 = vmatpush1.bf16.msra.mxu0 0
        %1076 = vmatprep.subr.bf16.mxu0 0
        %1077 = vmatpush1.bf16.msra.mxu0 0
        %1078 = vmatprep.subr.bf16.mxu0 0
        %1079 = vmatpush1.bf16.msra.mxu0 0
        %1080 = vmatprep.subr.bf16.mxu0 0
        %1081 = vmatpush1.bf16.msra.mxu0 0
        %1082 = vmatprep.subr.bf16.mxu0 0
        %1083 = vmatpush1.bf16.msra.mxu0 0
        %1084 = vmatprep.subr.bf16.mxu0 0
        %1085 = vmatpush1.bf16.msra.mxu0 0
        %1086 = vmatprep.mubr.bf16.mxu0 0
        %1087 = vmatmul.mubr.bf16.gmra.mrb[0].mxu0 %v474
        %v1088 = vpop.f32.mrb[0].mxu0
        %v1089 = vadd.f32 0.0, %v1088
        %v1090 = vpop.f32.mrb[0].mxu0
        %v1091 = vadd.f32 0.0, %v1090
        %v1092 = vpop.f32.mrb[0].mxu0
        %v1093 = vadd.f32 0.0, %v1092
        %v1094 = vpop.f32.mrb[0].mxu0
        %v1095 = vadd.f32 0.0, %v1094
        %1096 = vmatprep.mubr.bf16.mxu0 0
        %1097 = vmatmul.mubr.bf16.gmra.mrb[0].mxu0 %v475
        %v1098 = vpop.f32.mrb[0].mxu0
        %v1099 = vadd.f32 0.0, %v1098
        %v1100 = vpop.f32.mrb[0].mxu0
        %v1101 = vadd.f32 0.0, %v1100
        %v1102 = vpop.f32.mrb[0].mxu0
        %v1103 = vadd.f32 0.0, %v1102
        %v1104 = vpop.f32.mrb[0].mxu0
        %v1105 = vadd.f32 0.0, %v1104
        %1106 = vmatprep.mubr.bf16.mxu0 0
        %1107 = vmatmul.mubr.bf16.gmra.mrb[0].mxu0 %v476
        %v1108 = vpop.f32.mrb[0].mxu0
        %v1109 = vadd.f32 0.0, %v1108
        %v1110 = vpop.f32.mrb[0].mxu0
        %v1111 = vadd.f32 0.0, %v1110
        %v1112 = vpop.f32.mrb[0].mxu0
        %v1113 = vadd.f32 0.0, %v1112
        %v1114 = vpop.f32.mrb[0].mxu0
        %v1115 = vadd.f32 0.0, %v1114
        %1116 = vmatprep.mubr.bf16.mxu0 0
        %1117 = vmatmul.mubr.bf16.gmra.mrb[0].mxu0 %v477
        %v1118 = vpop.f32.mrb[0].mxu0
        %v1119 = vadd.f32 0.0, %v1118
        %v1120 = vpop.f32.mrb[0].mxu0
        %v1121 = vadd.f32 0.0, %v1120
        %v1122 = vpop.f32.mrb[0].mxu0
        %v1123 = vadd.f32 0.0, %v1122
        %v1124 = vpop.f32.mrb[0].mxu0
        %v1125 = vadd.f32 0.0, %v1124
        %1126 = vdwg.mxu0
        %1127 = vmatprep.subr.bf16.mxu0 %v865
        %1128 = vmatpush1.bf16.msra.mxu0 %v864
        %1129 = vmatprep.subr.bf16.mxu0 %v877
        %1130 = vmatpush1.bf16.msra.mxu0 %v876
        %1131 = vmatprep.subr.bf16.mxu0 %v889
        %1132 = vmatpush1.bf16.msra.mxu0 %v888
        %1133 = vmatprep.subr.bf16.mxu0 %v901
        %1134 = vmatpush1.bf16.msra.mxu0 %v900
        %1135 = vmatprep.subr.bf16.mxu0 %v913
        %1136 = vmatpush1.bf16.msra.mxu0 %v912
        %1137 = vmatprep.subr.bf16.mxu0 %v925
        %1138 = vmatpush1.bf16.msra.mxu0 %v924
        %1139 = vmatprep.subr.bf16.mxu0 %v937
        %1140 = vmatpush1.bf16.msra.mxu0 %v936
        %1141 = vmatprep.subr.bf16.mxu0 %v949
        %1142 = vmatpush1.bf16.msra.mxu0 %v948
        %1143 = vmatprep.subr.bf16.mxu0 0
        %1144 = vmatpush1.bf16.msra.mxu0 0
        %1145 = vmatprep.subr.bf16.mxu0 0
        %1146 = vmatpush1.bf16.msra.mxu0 0
        %1147 = vmatprep.subr.bf16.mxu0 0
        %1148 = vmatpush1.bf16.msra.mxu0 0
        %1149 = vmatprep.subr.bf16.mxu0 0
        %1150 = vmatpush1.bf16.msra.mxu0 0
        %1151 = vmatprep.subr.bf16.mxu0 0
        %1152 = vmatpush1.bf16.msra.mxu0 0
        %1153 = vmatprep.subr.bf16.mxu0 0
        %1154 = vmatpush1.bf16.msra.mxu0 0
        %1155 = vmatprep.subr.bf16.mxu0 0
        %1156 = vmatpush1.bf16.msra.mxu0 0
        %1157 = vmatprep.subr.bf16.mxu0 0
        %1158 = vmatpush1.bf16.msra.mxu0 0
        %1159 = vmatprep.mubr.bf16.mxu0 0
        %1160 = vmatmul.mubr.bf16.gmra.mrb[0].mxu0 %v474
        %v1161 = vpop.f32.mrb[0].mxu0
        %v1162 = vadd.f32 0.0, %v1161
        %v1163 = vpop.f32.mrb[0].mxu0
        %v1164 = vadd.f32 0.0, %v1163
        %v1165 = vpop.f32.mrb[0].mxu0
        %v1166 = vadd.f32 0.0, %v1165
        %v1167 = vpop.f32.mrb[0].mxu0
        %v1168 = vadd.f32 0.0, %v1167
        %1169 = vmatprep.mubr.bf16.mxu0 0
        %1170 = vmatmul.mubr.bf16.gmra.mrb[0].mxu0 %v475
        %v1171 = vpop.f32.mrb[0].mxu0
        %v1172 = vadd.f32 0.0, %v1171
        %v1173 = vpop.f32.mrb[0].mxu0
        %v1174 = vadd.f32 0.0, %v1173
        %v1175 = vpop.f32.mrb[0].mxu0
        %v1176 = vadd.f32 0.0, %v1175
        %v1177 = vpop.f32.mrb[0].mxu0
        %v1178 = vadd.f32 0.0, %v1177
        %1179 = vmatprep.mubr.bf16.mxu0 0
        %1180 = vmatmul.mubr.bf16.gmra.mrb[0].mxu0 %v476
        %v1181 = vpop.f32.mrb[0].mxu0
        %v1182 = vadd.f32 0.0, %v1181
        %v1183 = vpop.f32.mrb[0].mxu0
        %v1184 = vadd.f32 0.0, %v1183
        %v1185 = vpop.f32.mrb[0].mxu0
        %v1186 = vadd.f32 0.0, %v1185
        %v1187 = vpop.f32.mrb[0].mxu0
        %v1188 = vadd.f32 0.0, %v1187
        %1189 = vmatprep.mubr.bf16.mxu0 0
        %1190 = vmatmul.mubr.bf16.gmra.mrb[0].mxu0 %v477
        %v1191 = vpop.f32.mrb[0].mxu0
        %v1192 = vadd.f32 0.0, %v1191
        %v1193 = vpop.f32.mrb[0].mxu0
        %v1194 = vadd.f32 0.0, %v1193
        %v1195 = vpop.f32.mrb[0].mxu0
        %v1196 = vadd.f32 0.0, %v1195
        %v1197 = vpop.f32.mrb[0].mxu0
        %v1198 = vadd.f32 0.0, %v1197
        %1199 = vdwg.mxu0
        %1200 = vmatprep.subr.bf16.mxu0 %v867
        %1201 = vmatpush1.bf16.msra.mxu0 %v866
        %1202 = vmatprep.subr.bf16.mxu0 %v879
        %1203 = vmatpush1.bf16.msra.mxu0 %v878
        %1204 = vmatprep.subr.bf16.mxu0 %v891
        %1205 = vmatpush1.bf16.msra.mxu0 %v890
        %1206 = vmatprep.subr.bf16.mxu0 %v903
        %1207 = vmatpush1.bf16.msra.mxu0 %v902
        %1208 = vmatprep.subr.bf16.mxu0 %v915
        %1209 = vmatpush1.bf16.msra.mxu0 %v914
        %1210 = vmatprep.subr.bf16.mxu0 %v927
        %1211 = vmatpush1.bf16.msra.mxu0 %v926
        %1212 = vmatprep.subr.bf16.mxu0 %v939
        %1213 = vmatpush1.bf16.msra.mxu0 %v938
        %1214 = vmatprep.subr.bf16.mxu0 %v951
        %1215 = vmatpush1.bf16.msra.mxu0 %v950
        %1216 = vmatprep.subr.bf16.mxu0 0
        %1217 = vmatpush1.bf16.msra.mxu0 0
        %1218 = vmatprep.subr.bf16.mxu0 0
        %1219 = vmatpush1.bf16.msra.mxu0 0
        %1220 = vmatprep.subr.bf16.mxu0 0
        %1221 = vmatpush1.bf16.msra.mxu0 0
        %1222 = vmatprep.subr.bf16.mxu0 0
        %1223 = vmatpush1.bf16.msra.mxu0 0
        %1224 = vmatprep.subr.bf16.mxu0 0
        %1225 = vmatpush1.bf16.msra.mxu0 0
        %1226 = vmatprep.subr.bf16.mxu0 0
        %1227 = vmatpush1.bf16.msra.mxu0 0
        %1228 = vmatprep.subr.bf16.mxu0 0
        %1229 = vmatpush1.bf16.msra.mxu0 0
        %1230 = vmatprep.subr.bf16.mxu0 0
        %1231 = vmatpush1.bf16.msra.mxu0 0
        %1232 = vmatprep.mubr.bf16.mxu0 0
        %1233 = vmatmul.mubr.bf16.gmra.mrb[0].mxu0 %v474
        %v1234 = vpop.f32.mrb[0].mxu0
        %v1235 = vadd.f32 0.0, %v1234
        %v1236 = vpop.f32.mrb[0].mxu0
        %v1237 = vadd.f32 0.0, %v1236
        %v1238 = vpop.f32.mrb[0].mxu0
        %v1239 = vadd.f32 0.0, %v1238
        %v1240 = vpop.f32.mrb[0].mxu0
        %v1241 = vadd.f32 0.0, %v1240
        %1242 = vmatprep.mubr.bf16.mxu0 0
        %1243 = vmatmul.mubr.bf16.gmra.mrb[0].mxu0 %v475
        %v1244 = vpop.f32.mrb[0].mxu0
        %v1245 = vadd.f32 0.0, %v1244
        %v1246 = vpop.f32.mrb[0].mxu0
        %v1247 = vadd.f32 0.0, %v1246
        %v1248 = vpop.f32.mrb[0].mxu0
        %v1249 = vadd.f32 0.0, %v1248
        %v1250 = vpop.f32.mrb[0].mxu0
        %v1251 = vadd.f32 0.0, %v1250
        %1252 = vmatprep.mubr.bf16.mxu0 0
        %1253 = vmatmul.mubr.bf16.gmra.mrb[0].mxu0 %v476
        %v1254 = vpop.f32.mrb[0].mxu0
        %v1255 = vadd.f32 0.0, %v1254
        %v1256 = vpop.f32.mrb[0].mxu0
        %v1257 = vadd.f32 0.0, %v1256
        %v1258 = vpop.f32.mrb[0].mxu0
        %v1259 = vadd.f32 0.0, %v1258
        %v1260 = vpop.f32.mrb[0].mxu0
        %v1261 = vadd.f32 0.0, %v1260
        %1262 = vmatprep.mubr.bf16.mxu0 0
        %1263 = vmatmul.mubr.bf16.gmra.mrb[0].mxu0 %v477
        %v1264 = vpop.f32.mrb[0].mxu0
        %v1265 = vadd.f32 0.0, %v1264
        %v1266 = vpop.f32.mrb[0].mxu0
        %v1267 = vadd.f32 0.0, %v1266
        %v1268 = vpop.f32.mrb[0].mxu0
        %v1269 = vadd.f32 0.0, %v1268
        %v1270 = vpop.f32.mrb[0].mxu0
        %v1271 = vadd.f32 0.0, %v1270
        %1272 = vdwg.mxu0
        %1273 = vmatprep.subr.bf16.mxu0 %v869
        %1274 = vmatpush1.bf16.msra.mxu0 %v868
        %1275 = vmatprep.subr.bf16.mxu0 %v881
        %1276 = vmatpush1.bf16.msra.mxu0 %v880
        %1277 = vmatprep.subr.bf16.mxu0 %v893
        %1278 = vmatpush1.bf16.msra.mxu0 %v892
        %1279 = vmatprep.subr.bf16.mxu0 %v905
        %1280 = vmatpush1.bf16.msra.mxu0 %v904
        %1281 = vmatprep.subr.bf16.mxu0 %v917
        %1282 = vmatpush1.bf16.msra.mxu0 %v916
        %1283 = vmatprep.subr.bf16.mxu0 %v929
        %1284 = vmatpush1.bf16.msra.mxu0 %v928
        %1285 = vmatprep.subr.bf16.mxu0 %v941
        %1286 = vmatpush1.bf16.msra.mxu0 %v940
        %1287 = vmatprep.subr.bf16.mxu0 %v953
        %1288 = vmatpush1.bf16.msra.mxu0 %v952
        %1289 = vmatprep.subr.bf16.mxu0 0
        %1290 = vmatpush1.bf16.msra.mxu0 0
        %1291 = vmatprep.subr.bf16.mxu0 0
        %1292 = vmatpush1.bf16.msra.mxu0 0
        %1293 = vmatprep.subr.bf16.mxu0 0
        %1294 = vmatpush1.bf16.msra.mxu0 0
        %1295 = vmatprep.subr.bf16.mxu0 0
        %1296 = vmatpush1.bf16.msra.mxu0 0
        %1297 = vmatprep.subr.bf16.mxu0 0
        %1298 = vmatpush1.bf16.msra.mxu0 0
        %1299 = vmatprep.subr.bf16.mxu0 0
        %1300 = vmatpush1.bf16.msra.mxu0 0
        %1301 = vmatprep.subr.bf16.mxu0 0
        %1302 = vmatpush1.bf16.msra.mxu0 0
        %1303 = vmatprep.subr.bf16.mxu0 0
        %1304 = vmatpush1.bf16.msra.mxu0 0
        %1305 = vmatprep.mubr.bf16.mxu0 0
        %1306 = vmatmul.mubr.bf16.gmra.mrb[0].mxu0 %v474
        %v1307 = vpop.f32.mrb[0].mxu0
        %v1308 = vadd.f32 0.0, %v1307
        %v1309 = vpop.f32.mrb[0].mxu0
        %v1310 = vadd.f32 0.0, %v1309
        %v1311 = vpop.f32.mrb[0].mxu0
        %v1312 = vadd.f32 0.0, %v1311
        %v1313 = vpop.f32.mrb[0].mxu0
        %v1314 = vadd.f32 0.0, %v1313
        %1315 = vmatprep.mubr.bf16.mxu0 0
        %1316 = vmatmul.mubr.bf16.gmra.mrb[0].mxu0 %v475
        %v1317 = vpop.f32.mrb[0].mxu0
        %v1318 = vadd.f32 0.0, %v1317
        %v1319 = vpop.f32.mrb[0].mxu0
        %v1320 = vadd.f32 0.0, %v1319
        %v1321 = vpop.f32.mrb[0].mxu0
        %v1322 = vadd.f32 0.0, %v1321
        %v1323 = vpop.f32.mrb[0].mxu0
        %v1324 = vadd.f32 0.0, %v1323
        %1325 = vmatprep.mubr.bf16.mxu0 0
        %1326 = vmatmul.mubr.bf16.gmra.mrb[0].mxu0 %v476
        %v1327 = vpop.f32.mrb[0].mxu0
        %v1328 = vadd.f32 0.0, %v1327
        %v1329 = vpop.f32.mrb[0].mxu0
        %v1330 = vadd.f32 0.0, %v1329
        %v1331 = vpop.f32.mrb[0].mxu0
        %v1332 = vadd.f32 0.0, %v1331
        %v1333 = vpop.f32.mrb[0].mxu0
        %v1334 = vadd.f32 0.0, %v1333
        %1335 = vmatprep.mubr.bf16.mxu0 0
        %1336 = vmatmul.mubr.bf16.gmra.mrb[0].mxu0 %v477
        %v1337 = vpop.f32.mrb[0].mxu0
        %v1338 = vadd.f32 0.0, %v1337
        %v1339 = vpop.f32.mrb[0].mxu0
        %v1340 = vadd.f32 0.0, %v1339
        %v1341 = vpop.f32.mrb[0].mxu0
        %v1342 = vadd.f32 0.0, %v1341
        %v1343 = vpop.f32.mrb[0].mxu0
        %v1344 = vadd.f32 0.0, %v1343
        %1345 = vdwg.mxu0
        %1346 = vmatprep.subr.bf16.mxu0 %v871
        %1347 = vmatpush1.bf16.msra.mxu0 %v870
        %1348 = vmatprep.subr.bf16.mxu0 %v883
        %1349 = vmatpush1.bf16.msra.mxu0 %v882
        %1350 = vmatprep.subr.bf16.mxu0 %v895
        %1351 = vmatpush1.bf16.msra.mxu0 %v894
        %1352 = vmatprep.subr.bf16.mxu0 %v907
        %1353 = vmatpush1.bf16.msra.mxu0 %v906
        %1354 = vmatprep.subr.bf16.mxu0 %v919
        %1355 = vmatpush1.bf16.msra.mxu0 %v918
        %1356 = vmatprep.subr.bf16.mxu0 %v931
        %1357 = vmatpush1.bf16.msra.mxu0 %v930
        %1358 = vmatprep.subr.bf16.mxu0 %v943
        %1359 = vmatpush1.bf16.msra.mxu0 %v942
        %1360 = vmatprep.subr.bf16.mxu0 %v955
        %1361 = vmatpush1.bf16.msra.mxu0 %v954
        %1362 = vmatprep.subr.bf16.mxu0 0
        %1363 = vmatpush1.bf16.msra.mxu0 0
        %1364 = vmatprep.subr.bf16.mxu0 0
        %1365 = vmatpush1.bf16.msra.mxu0 0
        %1366 = vmatprep.subr.bf16.mxu0 0
        %1367 = vmatpush1.bf16.msra.mxu0 0
        %1368 = vmatprep.subr.bf16.mxu0 0
        %1369 = vmatpush1.bf16.msra.mxu0 0
        %1370 = vmatprep.subr.bf16.mxu0 0
        %1371 = vmatpush1.bf16.msra.mxu0 0
        %1372 = vmatprep.subr.bf16.mxu0 0
        %1373 = vmatpush1.bf16.msra.mxu0 0
        %1374 = vmatprep.subr.bf16.mxu0 0
        %1375 = vmatpush1.bf16.msra.mxu0 0
        %1376 = vmatprep.subr.bf16.mxu0 0
        %1377 = vmatpush1.bf16.msra.mxu0 0
        %1378 = vmatprep.mubr.bf16.mxu0 0
        %1379 = vmatmul.mubr.bf16.gmra.mrb[0].mxu0 %v474
        %v1380 = vpop.f32.mrb[0].mxu0
        %v1381 = vadd.f32 0.0, %v1380
        %v1382 = vpop.f32.mrb[0].mxu0
        %v1383 = vadd.f32 0.0, %v1382
        %v1384 = vpop.f32.mrb[0].mxu0
        %v1385 = vadd.f32 0.0, %v1384
        %v1386 = vpop.f32.mrb[0].mxu0
        %v1387 = vadd.f32 0.0, %v1386
        %1388 = vmatprep.mubr.bf16.mxu0 0
        %1389 = vmatmul.mubr.bf16.gmra.mrb[0].mxu0 %v475
        %v1390 = vpop.f32.mrb[0].mxu0
        %v1391 = vadd.f32 0.0, %v1390
        %v1392 = vpop.f32.mrb[0].mxu0
        %v1393 = vadd.f32 0.0, %v1392
        %v1394 = vpop.f32.mrb[0].mxu0
        %v1395 = vadd.f32 0.0, %v1394
        %v1396 = vpop.f32.mrb[0].mxu0
        %v1397 = vadd.f32 0.0, %v1396
        %1398 = vmatprep.mubr.bf16.mxu0 0
        %1399 = vmatmul.mubr.bf16.gmra.mrb[0].mxu0 %v476
        %v1400 = vpop.f32.mrb[0].mxu0
        %v1401 = vadd.f32 0.0, %v1400
        %v1402 = vpop.f32.mrb[0].mxu0
        %v1403 = vadd.f32 0.0, %v1402
        %v1404 = vpop.f32.mrb[0].mxu0
        %v1405 = vadd.f32 0.0, %v1404
        %v1406 = vpop.f32.mrb[0].mxu0
        %v1407 = vadd.f32 0.0, %v1406
        %1408 = vmatprep.mubr.bf16.mxu0 0
        %1409 = vmatmul.mubr.bf16.gmra.mrb[0].mxu0 %v477
        %v1410 = vpop.f32.mrb[0].mxu0
        %v1411 = vadd.f32 0.0, %v1410
        %v1412 = vpop.f32.mrb[0].mxu0
        %v1413 = vadd.f32 0.0, %v1412
        %v1414 = vpop.f32.mrb[0].mxu0
        %v1415 = vadd.f32 0.0, %v1414
        %v1416 = vpop.f32.mrb[0].mxu0
        %v1417 = vadd.f32 0.0, %v1416
        %1418 = vdwg.mxu0
        %1419 = vmatprep.subr.bf16.mxu0 %v873
        %1420 = vmatpush1.bf16.msra.mxu0 %v872
        %1421 = vmatprep.subr.bf16.mxu0 %v885
        %1422 = vmatpush1.bf16.msra.mxu0 %v884
        %1423 = vmatprep.subr.bf16.mxu0 %v897
        %1424 = vmatpush1.bf16.msra.mxu0 %v896
        %1425 = vmatprep.subr.bf16.mxu0 %v909
        %1426 = vmatpush1.bf16.msra.mxu0 %v908
        %1427 = vmatprep.subr.bf16.mxu0 %v921
        %1428 = vmatpush1.bf16.msra.mxu0 %v920
        %1429 = vmatprep.subr.bf16.mxu0 %v933
        %1430 = vmatpush1.bf16.msra.mxu0 %v932
        %1431 = vmatprep.subr.bf16.mxu0 %v945
        %1432 = vmatpush1.bf16.msra.mxu0 %v944
        %1433 = vmatprep.subr.bf16.mxu0 %v957
        %1434 = vmatpush1.bf16.msra.mxu0 %v956
        %1435 = vmatprep.subr.bf16.mxu0 0
        %1436 = vmatpush1.bf16.msra.mxu0 0
        %1437 = vmatprep.subr.bf16.mxu0 0
        %1438 = vmatpush1.bf16.msra.mxu0 0
        %1439 = vmatprep.subr.bf16.mxu0 0
        %1440 = vmatpush1.bf16.msra.mxu0 0
        %1441 = vmatprep.subr.bf16.mxu0 0
        %1442 = vmatpush1.bf16.msra.mxu0 0
        %1443 = vmatprep.subr.bf16.mxu0 0
        %1444 = vmatpush1.bf16.msra.mxu0 0
        %1445 = vmatprep.subr.bf16.mxu0 0
        %1446 = vmatpush1.bf16.msra.mxu0 0
        %1447 = vmatprep.subr.bf16.mxu0 0
        %1448 = vmatpush1.bf16.msra.mxu0 0
        %1449 = vmatprep.subr.bf16.mxu0 0
        %1450 = vmatpush1.bf16.msra.mxu0 0
        %1451 = vmatprep.mubr.bf16.mxu0 0
        %1452 = vmatmul.mubr.bf16.gmra.mrb[0].mxu0 %v474
        %v1453 = vpop.f32.mrb[0].mxu0
        %v1454 = vadd.f32 0.0, %v1453
        %v1455 = vpop.f32.mrb[0].mxu0
        %v1456 = vadd.f32 0.0, %v1455
        %v1457 = vpop.f32.mrb[0].mxu0
        %v1458 = vadd.f32 0.0, %v1457
        %v1459 = vpop.f32.mrb[0].mxu0
        %v1460 = vadd.f32 0.0, %v1459
        %1461 = vmatprep.mubr.bf16.mxu0 0
        %1462 = vmatmul.mubr.bf16.gmra.mrb[0].mxu0 %v475
        %v1463 = vpop.f32.mrb[0].mxu0
        %v1464 = vadd.f32 0.0, %v1463
        %v1465 = vpop.f32.mrb[0].mxu0
        %v1466 = vadd.f32 0.0, %v1465
        %v1467 = vpop.f32.mrb[0].mxu0
        %v1468 = vadd.f32 0.0, %v1467
        %v1469 = vpop.f32.mrb[0].mxu0
        %v1470 = vadd.f32 0.0, %v1469
        %1471 = vmatprep.mubr.bf16.mxu0 0
        %1472 = vmatmul.mubr.bf16.gmra.mrb[0].mxu0 %v476
        %v1473 = vpop.f32.mrb[0].mxu0
        %v1474 = vadd.f32 0.0, %v1473
        %v1475 = vpop.f32.mrb[0].mxu0
        %v1476 = vadd.f32 0.0, %v1475
        %v1477 = vpop.f32.mrb[0].mxu0
        %v1478 = vadd.f32 0.0, %v1477
        %v1479 = vpop.f32.mrb[0].mxu0
        %v1480 = vadd.f32 0.0, %v1479
        %1481 = vmatprep.mubr.bf16.mxu0 0
        %1482 = vmatmul.mubr.bf16.gmra.mrb[0].mxu0 %v477
        %v1483 = vpop.f32.mrb[0].mxu0
        %v1484 = vadd.f32 0.0, %v1483
        %v1485 = vpop.f32.mrb[0].mxu0
        %v1486 = vadd.f32 0.0, %v1485
        %v1487 = vpop.f32.mrb[0].mxu0
        %v1488 = vadd.f32 0.0, %v1487
        %v1489 = vpop.f32.mrb[0].mxu0
        %v1490 = vadd.f32 0.0, %v1489
        %1491 = vdwg.mxu0
        %v1492 = vmul.f32 %v1089, 0.5
        %v1493 = vmul.f32 %v1091, 0.5
        %v1494 = vmul.f32 %v1162, 0.5
        %v1495 = vmul.f32 %v1164, 0.5
        %v1496 = vmul.f32 %v1235, 0.5
        %v1497 = vmul.f32 %v1237, 0.5
        %v1498 = vmul.f32 %v1308, 0.5
        %v1499 = vmul.f32 %v1310, 0.5
        %v1500 = vmul.f32 %v1381, 0.5
        %v1501 = vmul.f32 %v1383, 0.5
        %v1502 = vmul.f32 %v1454, 0.5
        %v1503 = vmul.f32 %v1456, 0.5
        %v1504 = vmul.f32 %v1093, 0.5
        %v1505 = vmul.f32 %v1095, 0.5
        %v1506 = vmul.f32 %v1166, 0.5
        %v1507 = vmul.f32 %v1168, 0.5
        %v1508 = vmul.f32 %v1239, 0.5
        %v1509 = vmul.f32 %v1241, 0.5
        %v1510 = vmul.f32 %v1312, 0.5
        %v1511 = vmul.f32 %v1314, 0.5
        %v1512 = vmul.f32 %v1385, 0.5
        %v1513 = vmul.f32 %v1387, 0.5
        %v1514 = vmul.f32 %v1458, 0.5
        %v1515 = vmul.f32 %v1460, 0.5
        %v1516 = vmul.f32 %v1099, 0.5
        %v1517 = vmul.f32 %v1101, 0.5
        %v1518 = vmul.f32 %v1172, 0.5
        %v1519 = vmul.f32 %v1174, 0.5
        %v1520 = vmul.f32 %v1245, 0.5
        %v1521 = vmul.f32 %v1247, 0.5
        %v1522 = vmul.f32 %v1318, 0.5
        %v1523 = vmul.f32 %v1320, 0.5
        %v1524 = vmul.f32 %v1391, 0.5
        %v1525 = vmul.f32 %v1393, 0.5
        %v1526 = vmul.f32 %v1464, 0.5
        %v1527 = vmul.f32 %v1466, 0.5
        %v1528 = vmul.f32 %v1103, 0.5
        %v1529 = vmul.f32 %v1105, 0.5
        %v1530 = vmul.f32 %v1176, 0.5
        %v1531 = vmul.f32 %v1178, 0.5
        %v1532 = vmul.f32 %v1249, 0.5
        %v1533 = vmul.f32 %v1251, 0.5
        %v1534 = vmul.f32 %v1322, 0.5
        %v1535 = vmul.f32 %v1324, 0.5
        %v1536 = vmul.f32 %v1395, 0.5
        %v1537 = vmul.f32 %v1397, 0.5
        %v1538 = vmul.f32 %v1468, 0.5
        %v1539 = vmul.f32 %v1470, 0.5
        %v1540 = vmul.f32 %v1109, 0.5
        %v1541 = vmul.f32 %v1111, 0.5
        %v1542 = vmul.f32 %v1182, 0.5
        %v1543 = vmul.f32 %v1184, 0.5
        %v1544 = vmul.f32 %v1255, 0.5
        %v1545 = vmul.f32 %v1257, 0.5
        %v1546 = vmul.f32 %v1328, 0.5
        %v1547 = vmul.f32 %v1330, 0.5
        %v1548 = vmul.f32 %v1401, 0.5
        %v1549 = vmul.f32 %v1403, 0.5
        %v1550 = vmul.f32 %v1474, 0.5
        %v1551 = vmul.f32 %v1476, 0.5
        %v1552 = vmul.f32 %v1113, 0.5
        %v1553 = vmul.f32 %v1115, 0.5
        %v1554 = vmul.f32 %v1186, 0.5
        %v1555 = vmul.f32 %v1188, 0.5
        %v1556 = vmul.f32 %v1259, 0.5
        %v1557 = vmul.f32 %v1261, 0.5
        %v1558 = vmul.f32 %v1332, 0.5
        %v1559 = vmul.f32 %v1334, 0.5
        %v1560 = vmul.f32 %v1405, 0.5
        %v1561 = vmul.f32 %v1407, 0.5
        %v1562 = vmul.f32 %v1478, 0.5
        %v1563 = vmul.f32 %v1480, 0.5
        %v1564 = vmul.f32 %v1119, 0.5
        %v1565 = vmul.f32 %v1121, 0.5
        %v1566 = vmul.f32 %v1192, 0.5
        %v1567 = vmul.f32 %v1194, 0.5
        %v1568 = vmul.f32 %v1265, 0.5
        %v1569 = vmul.f32 %v1267, 0.5
        %v1570 = vmul.f32 %v1338, 0.5
        %v1571 = vmul.f32 %v1340, 0.5
        %v1572 = vmul.f32 %v1411, 0.5
        %v1573 = vmul.f32 %v1413, 0.5
        %v1574 = vmul.f32 %v1484, 0.5
        %v1575 = vmul.f32 %v1486, 0.5
        %v1576 = vmul.f32 %v1123, 0.5
        %v1577 = vmul.f32 %v1125, 0.5
        %v1578 = vmul.f32 %v1196, 0.5
        %v1579 = vmul.f32 %v1198, 0.5
        %v1580 = vmul.f32 %v1269, 0.5
        %v1581 = vmul.f32 %v1271, 0.5
        %v1582 = vmul.f32 %v1342, 0.5
        %v1583 = vmul.f32 %v1344, 0.5
        %v1584 = vmul.f32 %v1415, 0.5
        %v1585 = vmul.f32 %v1417, 0.5
        %v1586 = vmul.f32 %v1488, 0.5
        %v1587 = vmul.f32 %v1490, 0.5
        %v1588 = vtanh.pop %v1492
        %v1589 = vtanh.pop %v1493
        %v1590 = vtanh.pop %v1494
        %v1591 = vtanh.pop %v1495
        %v1592 = vtanh.pop %v1496
        %v1593 = vtanh.pop %v1497
        %v1594 = vtanh.pop %v1498
        %v1595 = vtanh.pop %v1499
        %v1596 = vtanh.pop %v1500
        %v1597 = vtanh.pop %v1501
        %v1598 = vtanh.pop %v1502
        %v1599 = vtanh.pop %v1503
        %v1600 = vtanh.pop %v1504
        %v1601 = vtanh.pop %v1505
        %v1602 = vtanh.pop %v1506
        %v1603 = vtanh.pop %v1507
        %v1604 = vtanh.pop %v1508
        %v1605 = vtanh.pop %v1509
        %v1606 = vtanh.pop %v1510
        %v1607 = vtanh.pop %v1511
        %v1608 = vtanh.pop %v1512
        %v1609 = vtanh.pop %v1513
        %v1610 = vtanh.pop %v1514
        %v1611 = vtanh.pop %v1515
        %v1612 = vtanh.pop %v1516
        %v1613 = vtanh.pop %v1517
        %v1614 = vtanh.pop %v1518
        %v1615 = vtanh.pop %v1519
        %v1616 = vtanh.pop %v1520
        %v1617 = vtanh.pop %v1521
        %v1618 = vtanh.pop %v1522
        %v1619 = vtanh.pop %v1523
        %v1620 = vtanh.pop %v1524
        %v1621 = vtanh.pop %v1525
        %v1622 = vtanh.pop %v1526
        %v1623 = vtanh.pop %v1527
        %v1624 = vtanh.pop %v1528
        %v1625 = vtanh.pop %v1529
        %v1626 = vtanh.pop %v1530
        %v1627 = vtanh.pop %v1531
        %v1628 = vtanh.pop %v1532
        %v1629 = vtanh.pop %v1533
        %v1630 = vtanh.pop %v1534
        %v1631 = vtanh.pop %v1535
        %v1632 = vtanh.pop %v1536
        %v1633 = vtanh.pop %v1537
        %v1634 = vtanh.pop %v1538
        %v1635 = vtanh.pop %v1539
        %v1636 = vtanh.pop %v1540
        %v1637 = vtanh.pop %v1541
        %v1638 = vtanh.pop %v1542
        %v1639 = vtanh.pop %v1543
        %v1640 = vtanh.pop %v1544
        %v1641 = vtanh.pop %v1545
        %v1642 = vtanh.pop %v1546
        %v1643 = vtanh.pop %v1547
        %v1644 = vtanh.pop %v1548
        %v1645 = vtanh.pop %v1549
        %v1646 = vtanh.pop %v1550
        %v1647 = vtanh.pop %v1551
        %v1648 = vtanh.pop %v1552
        %v1649 = vtanh.pop %v1553
        %v1650 = vtanh.pop %v1554
        %v1651 = vtanh.pop %v1555
        %v1652 = vtanh.pop %v1556
        %v1653 = vtanh.pop %v1557
        %v1654 = vtanh.pop %v1558
        %v1655 = vtanh.pop %v1559
        %v1656 = vtanh.pop %v1560
        %v1657 = vtanh.pop %v1561
        %v1658 = vtanh.pop %v1562
        %v1659 = vtanh.pop %v1563
        %v1660 = vtanh.pop %v1564
        %v1661 = vtanh.pop %v1565
        %v1662 = vtanh.pop %v1566
        %v1663 = vtanh.pop %v1567
        %v1664 = vtanh.pop %v1568
        %v1665 = vtanh.pop %v1569
        %v1666 = vtanh.pop %v1570
        %v1667 = vtanh.pop %v1571
        %v1668 = vtanh.pop %v1572
        %v1669 = vtanh.pop %v1573
        %v1670 = vtanh.pop %v1574
        %v1671 = vtanh.pop %v1575
        %v1672 = vtanh.pop %v1576
        %v1673 = vtanh.pop %v1577
        %v1674 = vtanh.pop %v1578
        %v1675 = vtanh.pop %v1579
        %v1676 = vtanh.pop %v1580
        %v1677 = vtanh.pop %v1581
        %v1678 = vtanh.pop %v1582
        %v1679 = vtanh.pop %v1583
        %v1680 = vtanh.pop %v1584
        %v1681 = vtanh.pop %v1585
        %v1682 = vtanh.pop %v1586
        %v1683 = vtanh.pop %v1587
        %v1684 = vadd.f32 %v1588, 1.0
        %v1685 = vadd.f32 %v1589, 1.0
        %v1686 = vadd.f32 %v1590, 1.0
        %v1687 = vadd.f32 %v1591, 1.0
        %v1688 = vadd.f32 %v1592, 1.0
        %v1689 = vadd.f32 %v1593, 1.0
        %v1690 = vadd.f32 %v1594, 1.0
        %v1691 = vadd.f32 %v1595, 1.0
        %v1692 = vadd.f32 %v1596, 1.0
        %v1693 = vadd.f32 %v1597, 1.0
        %v1694 = vadd.f32 %v1598, 1.0
        %v1695 = vadd.f32 %v1599, 1.0
        %v1696 = vadd.f32 %v1600, 1.0
        %v1697 = vadd.f32 %v1601, 1.0
        %v1698 = vadd.f32 %v1602, 1.0
        %v1699 = vadd.f32 %v1603, 1.0
        %v1700 = vadd.f32 %v1604, 1.0
        %v1701 = vadd.f32 %v1605, 1.0
        %v1702 = vadd.f32 %v1606, 1.0
        %v1703 = vadd.f32 %v1607, 1.0
        %v1704 = vadd.f32 %v1608, 1.0
        %v1705 = vadd.f32 %v1609, 1.0
        %v1706 = vadd.f32 %v1610, 1.0
        %v1707 = vadd.f32 %v1611, 1.0
        %v1708 = vadd.f32 %v1612, 1.0
        %v1709 = vadd.f32 %v1613, 1.0
        %v1710 = vadd.f32 %v1614, 1.0
        %v1711 = vadd.f32 %v1615, 1.0
        %v1712 = vadd.f32 %v1616, 1.0
        %v1713 = vadd.f32 %v1617, 1.0
        %v1714 = vadd.f32 %v1618, 1.0
        %v1715 = vadd.f32 %v1619, 1.0
        %v1716 = vadd.f32 %v1620, 1.0
        %v1717 = vadd.f32 %v1621, 1.0
        %v1718 = vadd.f32 %v1622, 1.0
        %v1719 = vadd.f32 %v1623, 1.0
        %v1720 = vadd.f32 %v1624, 1.0
        %v1721 = vadd.f32 %v1625, 1.0
        %v1722 = vadd.f32 %v1626, 1.0
        %v1723 = vadd.f32 %v1627, 1.0
        %v1724 = vadd.f32 %v1628, 1.0
        %v1725 = vadd.f32 %v1629, 1.0
        %v1726 = vadd.f32 %v1630, 1.0
        %v1727 = vadd.f32 %v1631, 1.0
        %v1728 = vadd.f32 %v1632, 1.0
        %v1729 = vadd.f32 %v1633, 1.0
        %v1730 = vadd.f32 %v1634, 1.0
        %v1731 = vadd.f32 %v1635, 1.0
        %v1732 = vadd.f32 %v1636, 1.0
        %v1733 = vadd.f32 %v1637, 1.0
        %v1734 = vadd.f32 %v1638, 1.0
        %v1735 = vadd.f32 %v1639, 1.0
        %v1736 = vadd.f32 %v1640, 1.0
        %v1737 = vadd.f32 %v1641, 1.0
        %v1738 = vadd.f32 %v1642, 1.0
        %v1739 = vadd.f32 %v1643, 1.0
        %v1740 = vadd.f32 %v1644, 1.0
        %v1741 = vadd.f32 %v1645, 1.0
        %v1742 = vadd.f32 %v1646, 1.0
        %v1743 = vadd.f32 %v1647, 1.0
        %v1744 = vadd.f32 %v1648, 1.0
        %v1745 = vadd.f32 %v1649, 1.0
        %v1746 = vadd.f32 %v1650, 1.0
        %v1747 = vadd.f32 %v1651, 1.0
        %v1748 = vadd.f32 %v1652, 1.0
        %v1749 = vadd.f32 %v1653, 1.0
        %v1750 = vadd.f32 %v1654, 1.0
        %v1751 = vadd.f32 %v1655, 1.0
        %v1752 = vadd.f32 %v1656, 1.0
        %v1753 = vadd.f32 %v1657, 1.0
        %v1754 = vadd.f32 %v1658, 1.0
        %v1755 = vadd.f32 %v1659, 1.0
        %v1756 = vadd.f32 %v1660, 1.0
        %v1757 = vadd.f32 %v1661, 1.0
        %v1758 = vadd.f32 %v1662, 1.0
        %v1759 = vadd.f32 %v1663, 1.0
        %v1760 = vadd.f32 %v1664, 1.0
        %v1761 = vadd.f32 %v1665, 1.0
        %v1762 = vadd.f32 %v1666, 1.0
        %v1763 = vadd.f32 %v1667, 1.0
        %v1764 = vadd.f32 %v1668, 1.0
        %v1765 = vadd.f32 %v1669, 1.0
        %v1766 = vadd.f32 %v1670, 1.0
        %v1767 = vadd.f32 %v1671, 1.0
        %v1768 = vadd.f32 %v1672, 1.0
        %v1769 = vadd.f32 %v1673, 1.0
        %v1770 = vadd.f32 %v1674, 1.0
        %v1771 = vadd.f32 %v1675, 1.0
        %v1772 = vadd.f32 %v1676, 1.0
        %v1773 = vadd.f32 %v1677, 1.0
        %v1774 = vadd.f32 %v1678, 1.0
        %v1775 = vadd.f32 %v1679, 1.0
        %v1776 = vadd.f32 %v1680, 1.0
        %v1777 = vadd.f32 %v1681, 1.0
        %v1778 = vadd.f32 %v1682, 1.0
        %v1779 = vadd.f32 %v1683, 1.0
        %v1780 = vmul.f32 %v1684, 0.5
        %v1781 = vmul.f32 %v1685, 0.5
        %v1782 = vmul.f32 %v1686, 0.5
        %v1783 = vmul.f32 %v1687, 0.5
        %v1784 = vmul.f32 %v1688, 0.5
        %v1785 = vmul.f32 %v1689, 0.5
        %v1786 = vmul.f32 %v1690, 0.5
        %v1787 = vmul.f32 %v1691, 0.5
        %v1788 = vmul.f32 %v1692, 0.5
        %v1789 = vmul.f32 %v1693, 0.5
        %v1790 = vmul.f32 %v1694, 0.5
        %v1791 = vmul.f32 %v1695, 0.5
        %v1792 = vmul.f32 %v1696, 0.5
        %v1793 = vmul.f32 %v1697, 0.5
        %v1794 = vmul.f32 %v1698, 0.5
        %v1795 = vmul.f32 %v1699, 0.5
        %v1796 = vmul.f32 %v1700, 0.5
        %v1797 = vmul.f32 %v1701, 0.5
        %v1798 = vmul.f32 %v1702, 0.5
        %v1799 = vmul.f32 %v1703, 0.5
        %v1800 = vmul.f32 %v1704, 0.5
        %v1801 = vmul.f32 %v1705, 0.5
        %v1802 = vmul.f32 %v1706, 0.5
        %v1803 = vmul.f32 %v1707, 0.5
        %v1804 = vmul.f32 %v1708, 0.5
        %v1805 = vmul.f32 %v1709, 0.5
        %v1806 = vmul.f32 %v1710, 0.5
        %v1807 = vmul.f32 %v1711, 0.5
        %v1808 = vmul.f32 %v1712, 0.5
        %v1809 = vmul.f32 %v1713, 0.5
        %v1810 = vmul.f32 %v1714, 0.5
        %v1811 = vmul.f32 %v1715, 0.5
        %v1812 = vmul.f32 %v1716, 0.5
        %v1813 = vmul.f32 %v1717, 0.5
        %v1814 = vmul.f32 %v1718, 0.5
        %v1815 = vmul.f32 %v1719, 0.5
        %v1816 = vmul.f32 %v1720, 0.5
        %v1817 = vmul.f32 %v1721, 0.5
        %v1818 = vmul.f32 %v1722, 0.5
        %v1819 = vmul.f32 %v1723, 0.5
        %v1820 = vmul.f32 %v1724, 0.5
        %v1821 = vmul.f32 %v1725, 0.5
        %v1822 = vmul.f32 %v1726, 0.5
        %v1823 = vmul.f32 %v1727, 0.5
        %v1824 = vmul.f32 %v1728, 0.5
        %v1825 = vmul.f32 %v1729, 0.5
        %v1826 = vmul.f32 %v1730, 0.5
        %v1827 = vmul.f32 %v1731, 0.5
        %v1828 = vmul.f32 %v1732, 0.5
        %v1829 = vmul.f32 %v1733, 0.5
        %v1830 = vmul.f32 %v1734, 0.5
        %v1831 = vmul.f32 %v1735, 0.5
        %v1832 = vmul.f32 %v1736, 0.5
        %v1833 = vmul.f32 %v1737, 0.5
        %v1834 = vmul.f32 %v1738, 0.5
        %v1835 = vmul.f32 %v1739, 0.5
        %v1836 = vmul.f32 %v1740, 0.5
        %v1837 = vmul.f32 %v1741, 0.5
        %v1838 = vmul.f32 %v1742, 0.5
        %v1839 = vmul.f32 %v1743, 0.5
        %v1840 = vmul.f32 %v1744, 0.5
        %v1841 = vmul.f32 %v1745, 0.5
        %v1842 = vmul.f32 %v1746, 0.5
        %v1843 = vmul.f32 %v1747, 0.5
        %v1844 = vmul.f32 %v1748, 0.5
        %v1845 = vmul.f32 %v1749, 0.5
        %v1846 = vmul.f32 %v1750, 0.5
        %v1847 = vmul.f32 %v1751, 0.5
        %v1848 = vmul.f32 %v1752, 0.5
        %v1849 = vmul.f32 %v1753, 0.5
        %v1850 = vmul.f32 %v1754, 0.5
        %v1851 = vmul.f32 %v1755, 0.5
        %v1852 = vmul.f32 %v1756, 0.5
        %v1853 = vmul.f32 %v1757, 0.5
        %v1854 = vmul.f32 %v1758, 0.5
        %v1855 = vmul.f32 %v1759, 0.5
        %v1856 = vmul.f32 %v1760, 0.5
        %v1857 = vmul.f32 %v1761, 0.5
        %v1858 = vmul.f32 %v1762, 0.5
        %v1859 = vmul.f32 %v1763, 0.5
        %v1860 = vmul.f32 %v1764, 0.5
        %v1861 = vmul.f32 %v1765, 0.5
        %v1862 = vmul.f32 %v1766, 0.5
        %v1863 = vmul.f32 %v1767, 0.5
        %v1864 = vmul.f32 %v1768, 0.5
        %v1865 = vmul.f32 %v1769, 0.5
        %v1866 = vmul.f32 %v1770, 0.5
        %v1867 = vmul.f32 %v1771, 0.5
        %v1868 = vmul.f32 %v1772, 0.5
        %v1869 = vmul.f32 %v1773, 0.5
        %v1870 = vmul.f32 %v1774, 0.5
        %v1871 = vmul.f32 %v1775, 0.5
        %v1872 = vmul.f32 %v1776, 0.5
        %v1873 = vmul.f32 %v1777, 0.5
        %v1874 = vmul.f32 %v1778, 0.5
        %v1875 = vmul.f32 %v1779, 0.5
        %v1876 = vmul.f32 %v1089, %v1780
        %v1877 = vmul.f32 %v1091, %v1781
        %v1878 = vmul.f32 %v1162, %v1782
        %v1879 = vmul.f32 %v1164, %v1783
        %v1880 = vmul.f32 %v1235, %v1784
        %v1881 = vmul.f32 %v1237, %v1785
        %v1882 = vmul.f32 %v1308, %v1786
        %v1883 = vmul.f32 %v1310, %v1787
        %v1884 = vmul.f32 %v1381, %v1788
        %v1885 = vmul.f32 %v1383, %v1789
        %v1886 = vmul.f32 %v1454, %v1790
        %v1887 = vmul.f32 %v1456, %v1791
        %v1888 = vmul.f32 %v1093, %v1792
        %v1889 = vmul.f32 %v1095, %v1793
        %v1890 = vmul.f32 %v1166, %v1794
        %v1891 = vmul.f32 %v1168, %v1795
        %v1892 = vmul.f32 %v1239, %v1796
        %v1893 = vmul.f32 %v1241, %v1797
        %v1894 = vmul.f32 %v1312, %v1798
        %v1895 = vmul.f32 %v1314, %v1799
        %v1896 = vmul.f32 %v1385, %v1800
        %v1897 = vmul.f32 %v1387, %v1801
        %v1898 = vmul.f32 %v1458, %v1802
        %v1899 = vmul.f32 %v1460, %v1803
        %v1900 = vmul.f32 %v1099, %v1804
        %v1901 = vmul.f32 %v1101, %v1805
        %v1902 = vmul.f32 %v1172, %v1806
        %v1903 = vmul.f32 %v1174, %v1807
        %v1904 = vmul.f32 %v1245, %v1808
        %v1905 = vmul.f32 %v1247, %v1809
        %v1906 = vmul.f32 %v1318, %v1810
        %v1907 = vmul.f32 %v1320, %v1811
        %v1908 = vmul.f32 %v1391, %v1812
        %v1909 = vmul.f32 %v1393, %v1813
        %v1910 = vmul.f32 %v1464, %v1814
        %v1911 = vmul.f32 %v1466, %v1815
        %v1912 = vmul.f32 %v1103, %v1816
        %v1913 = vmul.f32 %v1105, %v1817
        %v1914 = vmul.f32 %v1176, %v1818
        %v1915 = vmul.f32 %v1178, %v1819
        %v1916 = vmul.f32 %v1249, %v1820
        %v1917 = vmul.f32 %v1251, %v1821
        %v1918 = vmul.f32 %v1322, %v1822
        %v1919 = vmul.f32 %v1324, %v1823
        %v1920 = vmul.f32 %v1395, %v1824
        %v1921 = vmul.f32 %v1397, %v1825
        %v1922 = vmul.f32 %v1468, %v1826
        %v1923 = vmul.f32 %v1470, %v1827
        %v1924 = vmul.f32 %v1109, %v1828
        %v1925 = vmul.f32 %v1111, %v1829
        %v1926 = vmul.f32 %v1182, %v1830
        %v1927 = vmul.f32 %v1184, %v1831
        %v1928 = vmul.f32 %v1255, %v1832
        %v1929 = vmul.f32 %v1257, %v1833
        %v1930 = vmul.f32 %v1328, %v1834
        %v1931 = vmul.f32 %v1330, %v1835
        %v1932 = vmul.f32 %v1401, %v1836
        %v1933 = vmul.f32 %v1403, %v1837
        %v1934 = vmul.f32 %v1474, %v1838
        %v1935 = vmul.f32 %v1476, %v1839
        %v1936 = vmul.f32 %v1113, %v1840
        %v1937 = vmul.f32 %v1115, %v1841
        %v1938 = vmul.f32 %v1186, %v1842
        %v1939 = vmul.f32 %v1188, %v1843
        %v1940 = vmul.f32 %v1259, %v1844
        %v1941 = vmul.f32 %v1261, %v1845
        %v1942 = vmul.f32 %v1332, %v1846
        %v1943 = vmul.f32 %v1334, %v1847
        %v1944 = vmul.f32 %v1405, %v1848
        %v1945 = vmul.f32 %v1407, %v1849
        %v1946 = vmul.f32 %v1478, %v1850
        %v1947 = vmul.f32 %v1480, %v1851
        %v1948 = vmul.f32 %v1119, %v1852
        %v1949 = vmul.f32 %v1121, %v1853
        %v1950 = vmul.f32 %v1192, %v1854
        %v1951 = vmul.f32 %v1194, %v1855
        %v1952 = vmul.f32 %v1265, %v1856
        %v1953 = vmul.f32 %v1267, %v1857
        %v1954 = vmul.f32 %v1338, %v1858
        %v1955 = vmul.f32 %v1340, %v1859
        %v1956 = vmul.f32 %v1411, %v1860
        %v1957 = vmul.f32 %v1413, %v1861
        %v1958 = vmul.f32 %v1484, %v1862
        %v1959 = vmul.f32 %v1486, %v1863
        %v1960 = vmul.f32 %v1123, %v1864
        %v1961 = vmul.f32 %v1125, %v1865
        %v1962 = vmul.f32 %v1196, %v1866
        %v1963 = vmul.f32 %v1198, %v1867
        %v1964 = vmul.f32 %v1269, %v1868
        %v1965 = vmul.f32 %v1271, %v1869
        %v1966 = vmul.f32 %v1342, %v1870
        %v1967 = vmul.f32 %v1344, %v1871
        %v1968 = vmul.f32 %v1415, %v1872
        %v1969 = vmul.f32 %v1417, %v1873
        %v1970 = vmul.f32 %v1488, %v1874
        %v1971 = vmul.f32 %v1490, %v1875
        %s1972 = smul.u32 %s25, 64
        %v1973 = vstv %s1972
        %v1974 = vadd.s32 %v464, %v1973
        %vm1975 = vcmp.lt.s32.totalorder %v1974, 64
        %v1976 = vsel %vm1975, 1, 0
        %v1977 = vcvt.s32.f32 %v1976
        %v1978 = vld [vmem:[#allocation2] sm:$0xff]
        %v1979 = vld [vmem:[#allocation2 + $0x8] sm:$0xf]
        %vm1980 = vcmask 523264
        %v1982 = vsel %vm1980, %v1977, 0
        %1984 = vmatprep.subr.mxu0 %v1877
        %1985 = vmatpush1.msra.mxu0 %v1876
        %1986 = vmatprep.subr.mxu0 %v1889
        %1987 = vmatpush1.msra.mxu0 %v1888
        %1988 = vmatprep.subr.mxu0 %v1901
        %1989 = vmatpush1.msra.mxu0 %v1900
        %1990 = vmatprep.subr.mxu0 %v1913
        %1991 = vmatpush1.msra.mxu0 %v1912
        %1992 = vmatprep.subr.mxu0 %v1925
        %1993 = vmatpush1.msra.mxu0 %v1924
        %1994 = vmatprep.subr.mxu0 %v1937
        %1995 = vmatpush1.msra.mxu0 %v1936
        %1996 = vmatprep.subr.mxu0 %v1949
        %1997 = vmatpush1.msra.mxu0 %v1948
        %1998 = vmatprep.subr.mxu0 %v1961
        %1999 = vmatpush1.msra.mxu0 %v1960
        %2000 = vmatprep.subr.mxu0 0.0
        %2001 = vmatpush1.msra.mxu0 0.0
        %2002 = vmatprep.subr.mxu0 0.0
        %2003 = vmatpush1.msra.mxu0 0.0
        %2004 = vmatprep.subr.mxu0 0.0
        %2005 = vmatpush1.msra.mxu0 0.0
        %2006 = vmatprep.subr.mxu0 0.0
        %2007 = vmatpush1.msra.mxu0 0.0
        %2008 = vmatprep.subr.mxu0 0.0
        %2009 = vmatpush1.msra.mxu0 0.0
        %2010 = vmatprep.subr.mxu0 0.0
        %2011 = vmatpush1.msra.mxu0 0.0
        %2012 = vmatprep.subr.mxu0 0.0
        %2013 = vmatpush1.msra.mxu0 0.0
        %2014 = vmatprep.subr.mxu0 0.0
        %2015 = vmatpush1.msra.mxu0 0.0
        %2016 = vmatprep.subr.mxu0 0.0
        %2017 = vmatpush1.msra.mxu0 0.0
        %2018 = vmatprep.subr.mxu0 0.0
        %2019 = vmatpush1.msra.mxu0 0.0
        %2020 = vmatprep.subr.mxu0 0.0
        %2021 = vmatpush1.msra.mxu0 0.0
        %2022 = vmatprep.subr.mxu0 0.0
        %2023 = vmatpush1.msra.mxu0 0.0
        %2024 = vmatprep.subr.mxu0 0.0
        %2025 = vmatpush1.msra.mxu0 0.0
        %2026 = vmatprep.subr.mxu0 0.0
        %2027 = vmatpush1.msra.mxu0 0.0
        %2028 = vmatprep.subr.mxu0 0.0
        %2029 = vmatpush1.msra.mxu0 0.0
        %2030 = vmatprep.subr.mxu0 0.0
        %2031 = vmatpush1.msra.mxu0 0.0
        %2032 = vmatprep.subr.mxu0 0.0
        %2033 = vmatpush1.msra.mxu0 0.0
        %2034 = vmatprep.subr.mxu0 0.0
        %2035 = vmatpush1.msra.mxu0 0.0
        %2036 = vmatprep.subr.mxu0 0.0
        %2037 = vmatpush1.msra.mxu0 0.0
        %2038 = vmatprep.subr.mxu0 0.0
        %2039 = vmatpush1.msra.mxu0 0.0
        %2040 = vmatprep.subr.mxu0 0.0
        %2041 = vmatpush1.msra.mxu0 0.0
        %2042 = vmatprep.subr.mxu0 0.0
        %2043 = vmatpush1.msra.mxu0 0.0
        %2044 = vmatprep.subr.mxu0 0.0
        %2045 = vmatpush1.msra.mxu0 0.0
        %2046 = vmatprep.subr.mxu0 0.0
        %2047 = vmatpush1.msra.mxu0 0.0
        %2048 = vmatprep.mubr.f32.mxu0 0.0
        %2049 = vmatmul.mubr.f32.gmra.mrb[0].mxu0 %v1982
        %v2050 = vpop.f32.mrb[0].mxu0
        %v2051 = vadd.f32 0.0, %v2050
        %v2052 = vpop.f32.mrb[0].mxu0
        %v2053 = vadd.f32 0.0, %v2052
        %2054 = vdwg.mxu0
        %2055 = vmatprep.subr.mxu0 %v1879
        %2056 = vmatpush1.msra.mxu0 %v1878
        %2057 = vmatprep.subr.mxu0 %v1891
        %2058 = vmatpush1.msra.mxu0 %v1890
        %2059 = vmatprep.subr.mxu0 %v1903
        %2060 = vmatpush1.msra.mxu0 %v1902
        %2061 = vmatprep.subr.mxu0 %v1915
        %2062 = vmatpush1.msra.mxu0 %v1914
        %2063 = vmatprep.subr.mxu0 %v1927
        %2064 = vmatpush1.msra.mxu0 %v1926
        %2065 = vmatprep.subr.mxu0 %v1939
        %2066 = vmatpush1.msra.mxu0 %v1938
        %2067 = vmatprep.subr.mxu0 %v1951
        %2068 = vmatpush1.msra.mxu0 %v1950
        %2069 = vmatprep.subr.mxu0 %v1963
        %2070 = vmatpush1.msra.mxu0 %v1962
        %2071 = vmatprep.subr.mxu0 0.0
        %2072 = vmatpush1.msra.mxu0 0.0
        %2073 = vmatprep.subr.mxu0 0.0
        %2074 = vmatpush1.msra.mxu0 0.0
        %2075 = vmatprep.subr.mxu0 0.0
        %2076 = vmatpush1.msra.mxu0 0.0
        %2077 = vmatprep.subr.mxu0 0.0
        %2078 = vmatpush1.msra.mxu0 0.0
        %2079 = vmatprep.subr.mxu0 0.0
        %2080 = vmatpush1.msra.mxu0 0.0
        %2081 = vmatprep.subr.mxu0 0.0
        %2082 = vmatpush1.msra.mxu0 0.0
        %2083 = vmatprep.subr.mxu0 0.0
        %2084 = vmatpush1.msra.mxu0 0.0
        %2085 = vmatprep.subr.mxu0 0.0
        %2086 = vmatpush1.msra.mxu0 0.0
        %2087 = vmatprep.subr.mxu0 0.0
        %2088 = vmatpush1.msra.mxu0 0.0
        %2089 = vmatprep.subr.mxu0 0.0
        %2090 = vmatpush1.msra.mxu0 0.0
        %2091 = vmatprep.subr.mxu0 0.0
        %2092 = vmatpush1.msra.mxu0 0.0
        %2093 = vmatprep.subr.mxu0 0.0
        %2094 = vmatpush1.msra.mxu0 0.0
        %2095 = vmatprep.subr.mxu0 0.0
        %2096 = vmatpush1.msra.mxu0 0.0
        %2097 = vmatprep.subr.mxu0 0.0
        %2098 = vmatpush1.msra.mxu0 0.0
        %2099 = vmatprep.subr.mxu0 0.0
        %2100 = vmatpush1.msra.mxu0 0.0
        %2101 = vmatprep.subr.mxu0 0.0
        %2102 = vmatpush1.msra.mxu0 0.0
        %2103 = vmatprep.subr.mxu0 0.0
        %2104 = vmatpush1.msra.mxu0 0.0
        %2105 = vmatprep.subr.mxu0 0.0
        %2106 = vmatpush1.msra.mxu0 0.0
        %2107 = vmatprep.subr.mxu0 0.0
        %2108 = vmatpush1.msra.mxu0 0.0
        %2109 = vmatprep.subr.mxu0 0.0
        %2110 = vmatpush1.msra.mxu0 0.0
        %2111 = vmatprep.subr.mxu0 0.0
        %2112 = vmatpush1.msra.mxu0 0.0
        %2113 = vmatprep.subr.mxu0 0.0
        %2114 = vmatpush1.msra.mxu0 0.0
        %2115 = vmatprep.subr.mxu0 0.0
        %2116 = vmatpush1.msra.mxu0 0.0
        %2117 = vmatprep.subr.mxu0 0.0
        %2118 = vmatpush1.msra.mxu0 0.0
        %2119 = vmatprep.mubr.f32.mxu0 0.0
        %2120 = vmatmul.mubr.f32.gmra.mrb[0].mxu0 %v1982
        %v2121 = vpop.f32.mrb[0].mxu0
        %v2122 = vadd.f32 0.0, %v2121
        %v2123 = vpop.f32.mrb[0].mxu0
        %v2124 = vadd.f32 0.0, %v2123
        %2125 = vdwg.mxu0
        %2126 = vmatprep.subr.mxu0 %v1881
        %2127 = vmatpush1.msra.mxu0 %v1880
        %2128 = vmatprep.subr.mxu0 %v1893
        %2129 = vmatpush1.msra.mxu0 %v1892
        %2130 = vmatprep.subr.mxu0 %v1905
        %2131 = vmatpush1.msra.mxu0 %v1904
        %2132 = vmatprep.subr.mxu0 %v1917
        %2133 = vmatpush1.msra.mxu0 %v1916
        %2134 = vmatprep.subr.mxu0 %v1929
        %2135 = vmatpush1.msra.mxu0 %v1928
        %2136 = vmatprep.subr.mxu0 %v1941
        %2137 = vmatpush1.msra.mxu0 %v1940
        %2138 = vmatprep.subr.mxu0 %v1953
        %2139 = vmatpush1.msra.mxu0 %v1952
        %2140 = vmatprep.subr.mxu0 %v1965
        %2141 = vmatpush1.msra.mxu0 %v1964
        %2142 = vmatprep.subr.mxu0 0.0
        %2143 = vmatpush1.msra.mxu0 0.0
        %2144 = vmatprep.subr.mxu0 0.0
        %2145 = vmatpush1.msra.mxu0 0.0
        %2146 = vmatprep.subr.mxu0 0.0
        %2147 = vmatpush1.msra.mxu0 0.0
        %2148 = vmatprep.subr.mxu0 0.0
        %2149 = vmatpush1.msra.mxu0 0.0
        %2150 = vmatprep.subr.mxu0 0.0
        %2151 = vmatpush1.msra.mxu0 0.0
        %2152 = vmatprep.subr.mxu0 0.0
        %2153 = vmatpush1.msra.mxu0 0.0
        %2154 = vmatprep.subr.mxu0 0.0
        %2155 = vmatpush1.msra.mxu0 0.0
        %2156 = vmatprep.subr.mxu0 0.0
        %2157 = vmatpush1.msra.mxu0 0.0
        %2158 = vmatprep.subr.mxu0 0.0
        %2159 = vmatpush1.msra.mxu0 0.0
        %2160 = vmatprep.subr.mxu0 0.0
        %2161 = vmatpush1.msra.mxu0 0.0
        %2162 = vmatprep.subr.mxu0 0.0
        %2163 = vmatpush1.msra.mxu0 0.0
        %2164 = vmatprep.subr.mxu0 0.0
        %2165 = vmatpush1.msra.mxu0 0.0
        %2166 = vmatprep.subr.mxu0 0.0
        %2167 = vmatpush1.msra.mxu0 0.0
        %2168 = vmatprep.subr.mxu0 0.0
        %2169 = vmatpush1.msra.mxu0 0.0
        %2170 = vmatprep.subr.mxu0 0.0
        %2171 = vmatpush1.msra.mxu0 0.0
        %2172 = vmatprep.subr.mxu0 0.0
        %2173 = vmatpush1.msra.mxu0 0.0
        %2174 = vmatprep.subr.mxu0 0.0
        %2175 = vmatpush1.msra.mxu0 0.0
        %2176 = vmatprep.subr.mxu0 0.0
        %2177 = vmatpush1.msra.mxu0 0.0
        %2178 = vmatprep.subr.mxu0 0.0
        %2179 = vmatpush1.msra.mxu0 0.0
        %2180 = vmatprep.subr.mxu0 0.0
        %2181 = vmatpush1.msra.mxu0 0.0
        %2182 = vmatprep.subr.mxu0 0.0
        %2183 = vmatpush1.msra.mxu0 0.0
        %2184 = vmatprep.subr.mxu0 0.0
        %2185 = vmatpush1.msra.mxu0 0.0
        %2186 = vmatprep.subr.mxu0 0.0
        %2187 = vmatpush1.msra.mxu0 0.0
        %2188 = vmatprep.subr.mxu0 0.0
        %2189 = vmatpush1.msra.mxu0 0.0
        %2190 = vmatprep.mubr.f32.mxu0 0.0
        %2191 = vmatmul.mubr.f32.gmra.mrb[0].mxu0 %v1982
        %v2192 = vpop.f32.mrb[0].mxu0
        %v2193 = vadd.f32 0.0, %v2192
        %v2194 = vpop.f32.mrb[0].mxu0
        %v2195 = vadd.f32 0.0, %v2194
        %2196 = vdwg.mxu0
        %2197 = vmatprep.subr.mxu0 %v1883
        %2198 = vmatpush1.msra.mxu0 %v1882
        %2199 = vmatprep.subr.mxu0 %v1895
        %2200 = vmatpush1.msra.mxu0 %v1894
        %2201 = vmatprep.subr.mxu0 %v1907
        %2202 = vmatpush1.msra.mxu0 %v1906
        %2203 = vmatprep.subr.mxu0 %v1919
        %2204 = vmatpush1.msra.mxu0 %v1918
        %2205 = vmatprep.subr.mxu0 %v1931
        %2206 = vmatpush1.msra.mxu0 %v1930
        %2207 = vmatprep.subr.mxu0 %v1943
        %2208 = vmatpush1.msra.mxu0 %v1942
        %2209 = vmatprep.subr.mxu0 %v1955
        %2210 = vmatpush1.msra.mxu0 %v1954
        %2211 = vmatprep.subr.mxu0 %v1967
        %2212 = vmatpush1.msra.mxu0 %v1966
        %2213 = vmatprep.subr.mxu0 0.0
        %2214 = vmatpush1.msra.mxu0 0.0
        %2215 = vmatprep.subr.mxu0 0.0
        %2216 = vmatpush1.msra.mxu0 0.0
        %2217 = vmatprep.subr.mxu0 0.0
        %2218 = vmatpush1.msra.mxu0 0.0
        %2219 = vmatprep.subr.mxu0 0.0
        %2220 = vmatpush1.msra.mxu0 0.0
        %2221 = vmatprep.subr.mxu0 0.0
        %2222 = vmatpush1.msra.mxu0 0.0
        %2223 = vmatprep.subr.mxu0 0.0
        %2224 = vmatpush1.msra.mxu0 0.0
        %2225 = vmatprep.subr.mxu0 0.0
        %2226 = vmatpush1.msra.mxu0 0.0
        %2227 = vmatprep.subr.mxu0 0.0
        %2228 = vmatpush1.msra.mxu0 0.0
        %2229 = vmatprep.subr.mxu0 0.0
        %2230 = vmatpush1.msra.mxu0 0.0
        %2231 = vmatprep.subr.mxu0 0.0
        %2232 = vmatpush1.msra.mxu0 0.0
        %2233 = vmatprep.subr.mxu0 0.0
        %2234 = vmatpush1.msra.mxu0 0.0
        %2235 = vmatprep.subr.mxu0 0.0
        %2236 = vmatpush1.msra.mxu0 0.0
        %2237 = vmatprep.subr.mxu0 0.0
        %2238 = vmatpush1.msra.mxu0 0.0
        %2239 = vmatprep.subr.mxu0 0.0
        %2240 = vmatpush1.msra.mxu0 0.0
        %2241 = vmatprep.subr.mxu0 0.0
        %2242 = vmatpush1.msra.mxu0 0.0
        %2243 = vmatprep.subr.mxu0 0.0
        %2244 = vmatpush1.msra.mxu0 0.0
        %2245 = vmatprep.subr.mxu0 0.0
        %2246 = vmatpush1.msra.mxu0 0.0
        %2247 = vmatprep.subr.mxu0 0.0
        %2248 = vmatpush1.msra.mxu0 0.0
        %2249 = vmatprep.subr.mxu0 0.0
        %2250 = vmatpush1.msra.mxu0 0.0
        %2251 = vmatprep.subr.mxu0 0.0
        %2252 = vmatpush1.msra.mxu0 0.0
        %2253 = vmatprep.subr.mxu0 0.0
        %2254 = vmatpush1.msra.mxu0 0.0
        %2255 = vmatprep.subr.mxu0 0.0
        %2256 = vmatpush1.msra.mxu0 0.0
        %2257 = vmatprep.subr.mxu0 0.0
        %2258 = vmatpush1.msra.mxu0 0.0
        %2259 = vmatprep.subr.mxu0 0.0
        %2260 = vmatpush1.msra.mxu0 0.0
        %2261 = vmatprep.mubr.f32.mxu0 0.0
        %2262 = vmatmul.mubr.f32.gmra.mrb[0].mxu0 %v1982
        %v2263 = vpop.f32.mrb[0].mxu0
        %v2264 = vadd.f32 0.0, %v2263
        %v2265 = vpop.f32.mrb[0].mxu0
        %v2266 = vadd.f32 0.0, %v2265
        %2267 = vdwg.mxu0
        %2268 = vmatprep.subr.mxu0 %v1885
        %2269 = vmatpush1.msra.mxu0 %v1884
        %2270 = vmatprep.subr.mxu0 %v1897
        %2271 = vmatpush1.msra.mxu0 %v1896
        %2272 = vmatprep.subr.mxu0 %v1909
        %2273 = vmatpush1.msra.mxu0 %v1908
        %2274 = vmatprep.subr.mxu0 %v1921
        %2275 = vmatpush1.msra.mxu0 %v1920
        %2276 = vmatprep.subr.mxu0 %v1933
        %2277 = vmatpush1.msra.mxu0 %v1932
        %2278 = vmatprep.subr.mxu0 %v1945
        %2279 = vmatpush1.msra.mxu0 %v1944
        %2280 = vmatprep.subr.mxu0 %v1957
        %2281 = vmatpush1.msra.mxu0 %v1956
        %2282 = vmatprep.subr.mxu0 %v1969
        %2283 = vmatpush1.msra.mxu0 %v1968
        %2284 = vmatprep.subr.mxu0 0.0
        %2285 = vmatpush1.msra.mxu0 0.0
        %2286 = vmatprep.subr.mxu0 0.0
        %2287 = vmatpush1.msra.mxu0 0.0
        %2288 = vmatprep.subr.mxu0 0.0
        %2289 = vmatpush1.msra.mxu0 0.0
        %2290 = vmatprep.subr.mxu0 0.0
        %2291 = vmatpush1.msra.mxu0 0.0
        %2292 = vmatprep.subr.mxu0 0.0
        %2293 = vmatpush1.msra.mxu0 0.0
        %2294 = vmatprep.subr.mxu0 0.0
        %2295 = vmatpush1.msra.mxu0 0.0
        %2296 = vmatprep.subr.mxu0 0.0
        %2297 = vmatpush1.msra.mxu0 0.0
        %2298 = vmatprep.subr.mxu0 0.0
        %2299 = vmatpush1.msra.mxu0 0.0
        %2300 = vmatprep.subr.mxu0 0.0
        %2301 = vmatpush1.msra.mxu0 0.0
        %2302 = vmatprep.subr.mxu0 0.0
        %2303 = vmatpush1.msra.mxu0 0.0
        %2304 = vmatprep.subr.mxu0 0.0
        %2305 = vmatpush1.msra.mxu0 0.0
        %2306 = vmatprep.subr.mxu0 0.0
        %2307 = vmatpush1.msra.mxu0 0.0
        %2308 = vmatprep.subr.mxu0 0.0
        %2309 = vmatpush1.msra.mxu0 0.0
        %2310 = vmatprep.subr.mxu0 0.0
        %2311 = vmatpush1.msra.mxu0 0.0
        %2312 = vmatprep.subr.mxu0 0.0
        %2313 = vmatpush1.msra.mxu0 0.0
        %2314 = vmatprep.subr.mxu0 0.0
        %2315 = vmatpush1.msra.mxu0 0.0
        %2316 = vmatprep.subr.mxu0 0.0
        %2317 = vmatpush1.msra.mxu0 0.0
        %2318 = vmatprep.subr.mxu0 0.0
        %2319 = vmatpush1.msra.mxu0 0.0
        %2320 = vmatprep.subr.mxu0 0.0
        %2321 = vmatpush1.msra.mxu0 0.0
        %2322 = vmatprep.subr.mxu0 0.0
        %2323 = vmatpush1.msra.mxu0 0.0
        %2324 = vmatprep.subr.mxu0 0.0
        %2325 = vmatpush1.msra.mxu0 0.0
        %2326 = vmatprep.subr.mxu0 0.0
        %2327 = vmatpush1.msra.mxu0 0.0
        %2328 = vmatprep.subr.mxu0 0.0
        %2329 = vmatpush1.msra.mxu0 0.0
        %2330 = vmatprep.subr.mxu0 0.0
        %2331 = vmatpush1.msra.mxu0 0.0
        %2332 = vmatprep.mubr.f32.mxu0 0.0
        %2333 = vmatmul.mubr.f32.gmra.mrb[0].mxu0 %v1982
        %v2334 = vpop.f32.mrb[0].mxu0
        %v2335 = vadd.f32 0.0, %v2334
        %v2336 = vpop.f32.mrb[0].mxu0
        %v2337 = vadd.f32 0.0, %v2336
        %2338 = vdwg.mxu0
        %2339 = vmatprep.subr.mxu0 %v1887
        %2340 = vmatpush1.msra.mxu0 %v1886
        %2341 = vmatprep.subr.mxu0 %v1899
        %2342 = vmatpush1.msra.mxu0 %v1898
        %2343 = vmatprep.subr.mxu0 %v1911
        %2344 = vmatpush1.msra.mxu0 %v1910
        %2345 = vmatprep.subr.mxu0 %v1923
        %2346 = vmatpush1.msra.mxu0 %v1922
        %2347 = vmatprep.subr.mxu0 %v1935
        %2348 = vmatpush1.msra.mxu0 %v1934
        %2349 = vmatprep.subr.mxu0 %v1947
        %2350 = vmatpush1.msra.mxu0 %v1946
        %2351 = vmatprep.subr.mxu0 %v1959
        %2352 = vmatpush1.msra.mxu0 %v1958
        %2353 = vmatprep.subr.mxu0 %v1971
        %2354 = vmatpush1.msra.mxu0 %v1970
        %2355 = vmatprep.subr.mxu0 0.0
        %2356 = vmatpush1.msra.mxu0 0.0
        %2357 = vmatprep.subr.mxu0 0.0
        %2358 = vmatpush1.msra.mxu0 0.0
        %2359 = vmatprep.subr.mxu0 0.0
        %2360 = vmatpush1.msra.mxu0 0.0
        %2361 = vmatprep.subr.mxu0 0.0
        %2362 = vmatpush1.msra.mxu0 0.0
        %2363 = vmatprep.subr.mxu0 0.0
        %2364 = vmatpush1.msra.mxu0 0.0
        %2365 = vmatprep.subr.mxu0 0.0
        %2366 = vmatpush1.msra.mxu0 0.0
        %2367 = vmatprep.subr.mxu0 0.0
        %2368 = vmatpush1.msra.mxu0 0.0
        %2369 = vmatprep.subr.mxu0 0.0
        %2370 = vmatpush1.msra.mxu0 0.0
        %2371 = vmatprep.subr.mxu0 0.0
        %2372 = vmatpush1.msra.mxu0 0.0
        %2373 = vmatprep.subr.mxu0 0.0
        %2374 = vmatpush1.msra.mxu0 0.0
        %2375 = vmatprep.subr.mxu0 0.0
        %2376 = vmatpush1.msra.mxu0 0.0
        %2377 = vmatprep.subr.mxu0 0.0
        %2378 = vmatpush1.msra.mxu0 0.0
        %2379 = vmatprep.subr.mxu0 0.0
        %2380 = vmatpush1.msra.mxu0 0.0
        %2381 = vmatprep.subr.mxu0 0.0
        %2382 = vmatpush1.msra.mxu0 0.0
        %2383 = vmatprep.subr.mxu0 0.0
        %2384 = vmatpush1.msra.mxu0 0.0
        %2385 = vmatprep.subr.mxu0 0.0
        %2386 = vmatpush1.msra.mxu0 0.0
        %2387 = vmatprep.subr.mxu0 0.0
        %2388 = vmatpush1.msra.mxu0 0.0
        %2389 = vmatprep.subr.mxu0 0.0
        %2390 = vmatpush1.msra.mxu0 0.0
        %2391 = vmatprep.subr.mxu0 0.0
        %2392 = vmatpush1.msra.mxu0 0.0
        %2393 = vmatprep.subr.mxu0 0.0
        %2394 = vmatpush1.msra.mxu0 0.0
        %2395 = vmatprep.subr.mxu0 0.0
        %2396 = vmatpush1.msra.mxu0 0.0
        %2397 = vmatprep.subr.mxu0 0.0
        %2398 = vmatpush1.msra.mxu0 0.0
        %2399 = vmatprep.subr.mxu0 0.0
        %2400 = vmatpush1.msra.mxu0 0.0
        %2401 = vmatprep.subr.mxu0 0.0
        %2402 = vmatpush1.msra.mxu0 0.0
        %2403 = vmatprep.mubr.f32.mxu0 0.0
        %2404 = vmatmul.mubr.f32.gmra.mrb[0].mxu0 %v1982
        %v2405 = vpop.f32.mrb[0].mxu0
        %v2406 = vadd.f32 0.0, %v2405
        %v2407 = vpop.f32.mrb[0].mxu0
        %v2408 = vadd.f32 0.0, %v2407
        %2409 = vdwg.mxu0
        %v2422 = vcombine.low %v2051, %v2053
        %v2423 = vcombine.low %v2122, %v2124
        %v2424 = vcombine.low %v2193, %v2195
        %v2425 = vcombine.low %v2264, %v2266
        %v2427 = vunpack.c.l.s4 1966171168
        %v2428 = vunpack.c.0.s8 %v2427
        %v2429 = vlaneseq
        %v2430 = vshrl.u32 %v2429, 7
        %v2431 = vsub.s32 %v2428, %v2430
        %v2432 = vrot.slane %v2422, %v2431
        %v2434 = vunpack.c.l.s4 1966171168
        %v2435 = vunpack.c.0.s8 %v2434
        %v2436 = vlaneseq
        %v2437 = vshrl.u32 %v2436, 7
        %v2438 = vsub.s32 %v2435, %v2437
        %v2439 = vrot.slane %v2423, %v2438
        %v2441 = vunpack.c.l.s4 1966171168
        %v2442 = vunpack.c.0.s8 %v2441
        %v2443 = vlaneseq
        %v2444 = vshrl.u32 %v2443, 7
        %v2445 = vsub.s32 %v2442, %v2444
        %v2446 = vrot.slane %v2424, %v2445
        %v2448 = vunpack.c.l.s4 1966171168
        %v2449 = vunpack.c.0.s8 %v2448
        %v2450 = vlaneseq
        %v2451 = vshrl.u32 %v2450, 7
        %v2452 = vsub.s32 %v2449, %v2451
        %v2453 = vrot.slane %v2425, %v2452
        %v2454 = vcombine.low %v2432, %v2439
        %v2455 = vcombine.low %v2446, %v2453
        %v2457 = vunpack.c.l.s4 1966171168
        %v2458 = vunpack.c.0.s8 %v2457
        %v2459 = vlaneseq
        %v2460 = vshrl.u32 %v2459, 7
        %v2461 = vsub.s32 %v2458, %v2460
        %v2462 = vrot.slane %v2454, %v2461
        %v2464 = vunpack.c.l.s4 1966171168
        %v2465 = vunpack.c.0.s8 %v2464
        %v2466 = vlaneseq
        %v2467 = vshrl.u32 %v2466, 7
        %v2468 = vsub.s32 %v2465, %v2467
        %v2469 = vrot.slane %v2455, %v2468
        %v2470 = vcombine.low %v2462, %v2469
        %v2471 = vcombine.low %v2335, %v2337
        %v2472 = vcombine.low %v2406, %v2408
        %v2474 = vunpack.c.l.s4 1966171168
        %v2475 = vunpack.c.0.s8 %v2474
        %v2476 = vlaneseq
        %v2477 = vshrl.u32 %v2476, 7
        %v2478 = vsub.s32 %v2475, %v2477
        %v2479 = vrot.slane %v2471, %v2478
        %v2481 = vunpack.c.l.s4 1966171168
        %v2482 = vunpack.c.0.s8 %v2481
        %v2483 = vlaneseq
        %v2484 = vshrl.u32 %v2483, 7
        %v2485 = vsub.s32 %v2482, %v2484
        %v2486 = vrot.slane %v2472, %v2485
        %v2487 = vcombine.low %v2479, %v2486
        %v2489 = vunpack.c.l.s4 1966171168
        %v2490 = vunpack.c.0.s8 %v2489
        %v2491 = vlaneseq
        %v2492 = vshrl.u32 %v2491, 7
        %v2493 = vsub.s32 %v2490, %v2492
        %v2494 = vrot.slane %v2487, %v2493
        %v2497 = vadd.f32 %v1978, %v2470
        %v2498 = vadd.f32 %v1979, %v2494
        %2499 = vst [vmem:[#allocation2] sm:$0xff] %v2497
        %v2500 = vlaneseq
        %vm2501 = vcmp.ge.s32.totalorder %v2500, 0
        %vm2502 = vcmp.lt.s32.totalorder %v2500, 512
        %vm2503 = vmand %vm2501, %vm2502
        %2504 = vst.msk [vmem:[#allocation2 + $0x8] sm:$0xf] %vm2503, %v2498
        // Predicated region
        $region49: #{tpu_custom_call.1} parent=43 // pred_check
          %p2505 = pneg %p278
        $region50: #{tpu_custom_call.1} parent=43 // pred_check_branch
          %2507 = sbr.rel (%p2505) target = $region52
        $region51: #{tpu_custom_call.1} parent=43 // pred_region
          %v2508 = vld [vmem:[#allocation2] sm:$0xff]
          %v2509 = vld [vmem:[#allocation2 + $0x8] sm:$0xf]
          %v2510 = vmul.f32 %v2508, 0.015625
          %v2511 = vmul.f32 %v2509, 0.015625
          %v2512 = vld [vmem:[%s4] sm:$0xff]
          %v2513 = vld [vmem:[%s4 + $0x8] sm:$0xff]
          %v2514 = vld [vmem:[%s4 + $0x10] sm:$0xff]
          %v2515 = vld [vmem:[%s4 + $0x18] sm:$0xff]
          %v2516 = vld [vmem:[%s4 + $0x20] sm:$0xff]
          %v2517 = vld [vmem:[%s4 + $0x28] sm:$0xff]
          %v2518 = vld [vmem:[%s4 + $0x30] sm:$0xff]
          %v2519 = vld [vmem:[%s4 + $0x38] sm:$0xff]
          %v2520 = vld [vmem:[%s4 + $0x40] sm:$0xff]
          %v2521 = vld [vmem:[%s4 + $0x48] sm:$0xff]
          %v2522 = vld [vmem:[%s4 + $0x50] sm:$0xff]
          %v2523 = vld [vmem:[%s4 + $0x58] sm:$0xff]
          %v2524 = vld [vmem:[%s4 + $0x60] sm:$0xff]
          %v2525 = vld [vmem:[%s4 + $0x68] sm:$0xff]
          %v2526 = vld [vmem:[%s4 + $0x70] sm:$0xff]
          %v2527 = vld [vmem:[%s4 + $0x78] sm:$0xff]
          %v2528 = vld [vmem:[%s4 + $0x80] sm:$0xff]
          %v2529 = vld [vmem:[%s4 + $0x88] sm:$0xff]
          %v2530 = vld [vmem:[%s4 + $0x90] sm:$0xff]
          %v2531 = vld [vmem:[%s4 + $0x98] sm:$0xff]
          %v2532 = vld [vmem:[%s4 + $0xa0] sm:$0xff]
          %v2533 = vld [vmem:[%s4 + $0xa8] sm:$0xff]
          %v2534 = vld [vmem:[%s4 + $0xb0] sm:$0xff]
          %v2535 = vld [vmem:[%s4 + $0xb8] sm:$0xff]
          %v2536 = vld [vmem:[%s4 + $0xc0] sm:$0xff]
          %v2537 = vld [vmem:[%s4 + $0xc8] sm:$0xff]
          %v2538 = vld [vmem:[%s4 + $0xd0] sm:$0xff]
          %v2539 = vld [vmem:[%s4 + $0xd8] sm:$0xff]
          %v2540 = vld [vmem:[%s4 + $0xe0] sm:$0xff]
          %v2541 = vld [vmem:[%s4 + $0xe8] sm:$0xff]
          %v2542 = vld [vmem:[%s4 + $0xf0] sm:$0xff]
          %v2543 = vld [vmem:[%s4 + $0xf8] sm:$0xff]
          %v2544 = vld [vmem:[%s4 + $0x100] sm:$0xff]
          %v2545 = vld [vmem:[%s4 + $0x108] sm:$0xff]
          %v2546 = vld [vmem:[%s4 + $0x110] sm:$0xff]
          %v2547 = vld [vmem:[%s4 + $0x118] sm:$0xff]
          %v2548 = vld [vmem:[%s4 + $0x120] sm:$0xff]
          %v2549 = vld [vmem:[%s4 + $0x128] sm:$0xff]
          %v2550 = vld [vmem:[%s4 + $0x130] sm:$0xff]
          %v2551 = vld [vmem:[%s4 + $0x138] sm:$0xff]
          %v2552 = vld [vmem:[%s4 + $0x140] sm:$0xff]
          %v2553 = vld [vmem:[%s4 + $0x148] sm:$0xff]
          %v2554 = vld [vmem:[%s4 + $0x150] sm:$0xff]
          %v2555 = vld [vmem:[%s4 + $0x158] sm:$0xff]
          %v2556 = vld [vmem:[%s4 + $0x160] sm:$0xff]
          %v2557 = vld [vmem:[%s4 + $0x168] sm:$0xff]
          %v2558 = vld [vmem:[%s4 + $0x170] sm:$0xff]
          %v2559 = vld [vmem:[%s4 + $0x178] sm:$0xff]
          %v2560 = vld [vmem:[%s4 + $0x180] sm:$0xff]
          %v2561 = vld [vmem:[%s4 + $0x188] sm:$0xff]
          %v2562 = vld [vmem:[%s4 + $0x190] sm:$0xff]
          %v2563 = vld [vmem:[%s4 + $0x198] sm:$0xff]
          %v2564 = vld [vmem:[%s4 + $0x1a0] sm:$0xff]
          %v2565 = vld [vmem:[%s4 + $0x1a8] sm:$0xff]
          %v2566 = vld [vmem:[%s4 + $0x1b0] sm:$0xff]
          %v2567 = vld [vmem:[%s4 + $0x1b8] sm:$0xff]
          %v2568 = vld [vmem:[%s4 + $0x1c0] sm:$0xff]
          %v2569 = vld [vmem:[%s4 + $0x1c8] sm:$0xff]
          %v2570 = vld [vmem:[%s4 + $0x1d0] sm:$0xff]
          %v2571 = vld [vmem:[%s4 + $0x1d8] sm:$0xff]
          %v2572 = vld [vmem:[%s4 + $0x1e0] sm:$0xff]
          %v2573 = vld [vmem:[%s4 + $0x1e8] sm:$0xff]
          %v2574 = vld [vmem:[%s4 + $0x1f0] sm:$0xff]
          %v2575 = vld [vmem:[%s4 + $0x1f8] sm:$0xff]
          %v2576 = vld [vmem:[%s4 + $0x200] sm:$0xff]
          %v2577 = vld [vmem:[%s4 + $0x208] sm:$0xff]
          %v2578 = vld [vmem:[%s4 + $0x210] sm:$0xff]
          %v2579 = vld [vmem:[%s4 + $0x218] sm:$0xff]
          %v2580 = vld [vmem:[%s4 + $0x220] sm:$0xff]
          %v2581 = vld [vmem:[%s4 + $0x228] sm:$0xff]
          %v2582 = vld [vmem:[%s4 + $0x230] sm:$0xff]
          %v2583 = vld [vmem:[%s4 + $0x238] sm:$0xff]
          %v2584 = vld [vmem:[%s4 + $0x240] sm:$0xff]
          %v2585 = vld [vmem:[%s4 + $0x248] sm:$0xff]
          %v2586 = vld [vmem:[%s4 + $0x250] sm:$0xff]
          %v2587 = vld [vmem:[%s4 + $0x258] sm:$0xff]
          %v2588 = vld [vmem:[%s4 + $0x260] sm:$0xff]
          %v2589 = vld [vmem:[%s4 + $0x268] sm:$0xff]
          %v2590 = vld [vmem:[%s4 + $0x270] sm:$0xff]
          %v2591 = vld [vmem:[%s4 + $0x278] sm:$0xff]
          %v2592 = vld [vmem:[%s4 + $0x280] sm:$0xff]
          %v2593 = vld [vmem:[%s4 + $0x288] sm:$0xff]
          %v2594 = vld [vmem:[%s4 + $0x290] sm:$0xff]
          %v2595 = vld [vmem:[%s4 + $0x298] sm:$0xff]
          %v2596 = vld [vmem:[%s4 + $0x2a0] sm:$0xff]
          %v2597 = vld [vmem:[%s4 + $0x2a8] sm:$0xff]
          %v2598 = vld [vmem:[%s4 + $0x2b0] sm:$0xff]
          %v2599 = vld [vmem:[%s4 + $0x2b8] sm:$0xff]
          %v2600 = vld [vmem:[%s4 + $0x2c0] sm:$0xff]
          %v2601 = vld [vmem:[%s4 + $0x2c8] sm:$0xff]
          %v2602 = vld [vmem:[%s4 + $0x2d0] sm:$0xff]
          %v2603 = vld [vmem:[%s4 + $0x2d8] sm:$0xff]
          %v2604 = vld [vmem:[%s4 + $0x2e0] sm:$0xff]
          %v2605 = vld [vmem:[%s4 + $0x2e8] sm:$0xff]
          %v2606 = vld [vmem:[%s4 + $0x2f0] sm:$0xff]
          %v2607 = vld [vmem:[%s4 + $0x2f8] sm:$0xff]
          %v2608 = vld [vmem:[%s4 + $0x300] sm:$0xff]
          %v2609 = vld [vmem:[%s4 + $0x308] sm:$0xff]
          %v2610 = vld [vmem:[%s4 + $0x310] sm:$0xff]
          %v2611 = vld [vmem:[%s4 + $0x318] sm:$0xff]
          %v2612 = vld [vmem:[%s4 + $0x320] sm:$0xff]
          %v2613 = vld [vmem:[%s4 + $0x328] sm:$0xff]
          %v2614 = vld [vmem:[%s4 + $0x330] sm:$0xff]
          %v2615 = vld [vmem:[%s4 + $0x338] sm:$0xff]
          %v2616 = vld [vmem:[%s4 + $0x340] sm:$0xff]
          %v2617 = vld [vmem:[%s4 + $0x348] sm:$0xff]
          %v2618 = vld [vmem:[%s4 + $0x350] sm:$0xff]
          %v2619 = vld [vmem:[%s4 + $0x358] sm:$0xff]
          %v2620 = vld [vmem:[%s4 + $0x360] sm:$0xff]
          %v2621 = vld [vmem:[%s4 + $0x368] sm:$0xff]
          %v2622 = vld [vmem:[%s4 + $0x370] sm:$0xff]
          %v2623 = vld [vmem:[%s4 + $0x378] sm:$0xff]
          %v2624 = vld [vmem:[%s4 + $0x380] sm:$0xff]
          %v2625 = vld [vmem:[%s4 + $0x388] sm:$0xff]
          %v2626 = vld [vmem:[%s4 + $0x390] sm:$0xff]
          %v2627 = vld [vmem:[%s4 + $0x398] sm:$0xff]
          %v2628 = vld [vmem:[%s4 + $0x3a0] sm:$0xff]
          %v2629 = vld [vmem:[%s4 + $0x3a8] sm:$0xff]
          %v2630 = vld [vmem:[%s4 + $0x3b0] sm:$0xff]
          %v2631 = vld [vmem:[%s4 + $0x3b8] sm:$0xff]
          %v2632 = vld [vmem:[%s4 + $0x3c0] sm:$0xff]
          %v2633 = vld [vmem:[%s4 + $0x3c8] sm:$0xff]
          %v2634 = vld [vmem:[%s4 + $0x3d0] sm:$0xff]
          %v2635 = vld [vmem:[%s4 + $0x3d8] sm:$0xff]
          %v2636 = vld [vmem:[%s4 + $0x3e0] sm:$0xff]
          %v2637 = vld [vmem:[%s4 + $0x3e8] sm:$0xff]
          %v2638 = vld [vmem:[%s4 + $0x3f0] sm:$0xff]
          %v2639 = vld [vmem:[%s4 + $0x3f8] sm:$0xff]
          %v2640 = vld [vmem:[%s4 + $0x400] sm:$0xff]
          %v2641 = vld [vmem:[%s4 + $0x408] sm:$0xff]
          %v2642 = vld [vmem:[%s4 + $0x410] sm:$0xff]
          %v2643 = vld [vmem:[%s4 + $0x418] sm:$0xff]
          %v2644 = vld [vmem:[%s4 + $0x420] sm:$0xff]
          %v2645 = vld [vmem:[%s4 + $0x428] sm:$0xff]
          %v2646 = vld [vmem:[%s4 + $0x430] sm:$0xff]
          %v2647 = vld [vmem:[%s4 + $0x438] sm:$0xff]
          %v2648 = vld [vmem:[%s4 + $0x440] sm:$0xff]
          %v2649 = vld [vmem:[%s4 + $0x448] sm:$0xff]
          %v2650 = vld [vmem:[%s4 + $0x450] sm:$0xff]
          %v2651 = vld [vmem:[%s4 + $0x458] sm:$0xff]
          %v2652 = vld [vmem:[%s4 + $0x460] sm:$0xff]
          %v2653 = vld [vmem:[%s4 + $0x468] sm:$0xff]
          %v2654 = vld [vmem:[%s4 + $0x470] sm:$0xff]
          %v2655 = vld [vmem:[%s4 + $0x478] sm:$0xff]
          %v2656 = vld [vmem:[%s4 + $0x480] sm:$0xff]
          %v2657 = vld [vmem:[%s4 + $0x488] sm:$0xff]
          %v2658 = vld [vmem:[%s4 + $0x490] sm:$0xff]
          %v2659 = vld [vmem:[%s4 + $0x498] sm:$0xff]
          %v2660 = vld [vmem:[%s4 + $0x4a0] sm:$0xff]
          %v2661 = vld [vmem:[%s4 + $0x4a8] sm:$0xff]
          %v2662 = vld [vmem:[%s4 + $0x4b0] sm:$0xff]
          %v2663 = vld [vmem:[%s4 + $0x4b8] sm:$0xff]
          %v2664 = vld [vmem:[%s4 + $0x4c0] sm:$0xff]
          %v2665 = vld [vmem:[%s4 + $0x4c8] sm:$0xff]
          %v2666 = vld [vmem:[%s4 + $0x4d0] sm:$0xff]
          %v2667 = vld [vmem:[%s4 + $0x4d8] sm:$0xff]
          %v2668 = vld [vmem:[%s4 + $0x4e0] sm:$0xff]
          %v2669 = vld [vmem:[%s4 + $0x4e8] sm:$0xff]
          %v2670 = vld [vmem:[%s4 + $0x4f0] sm:$0xff]
          %v2671 = vld [vmem:[%s4 + $0x4f8] sm:$0xff]
          %v2672 = vld [vmem:[%s4 + $0x500] sm:$0xff]
          %v2673 = vld [vmem:[%s4 + $0x508] sm:$0xff]
          %v2674 = vld [vmem:[%s4 + $0x510] sm:$0xff]
          %v2675 = vld [vmem:[%s4 + $0x518] sm:$0xff]
          %v2676 = vld [vmem:[%s4 + $0x520] sm:$0xff]
          %v2677 = vld [vmem:[%s4 + $0x528] sm:$0xff]
          %v2678 = vld [vmem:[%s4 + $0x530] sm:$0xff]
          %v2679 = vld [vmem:[%s4 + $0x538] sm:$0xff]
          %v2680 = vld [vmem:[%s4 + $0x540] sm:$0xff]
          %v2681 = vld [vmem:[%s4 + $0x548] sm:$0xff]
          %v2682 = vld [vmem:[%s4 + $0x550] sm:$0xff]
          %v2683 = vld [vmem:[%s4 + $0x558] sm:$0xff]
          %v2684 = vld [vmem:[%s4 + $0x560] sm:$0xff]
          %v2685 = vld [vmem:[%s4 + $0x568] sm:$0xff]
          %v2686 = vld [vmem:[%s4 + $0x570] sm:$0xff]
          %v2687 = vld [vmem:[%s4 + $0x578] sm:$0xff]
          %v2688 = vld [vmem:[%s4 + $0x580] sm:$0xff]
          %v2689 = vld [vmem:[%s4 + $0x588] sm:$0xff]
          %v2690 = vld [vmem:[%s4 + $0x590] sm:$0xff]
          %v2691 = vld [vmem:[%s4 + $0x598] sm:$0xff]
          %v2692 = vld [vmem:[%s4 + $0x5a0] sm:$0xff]
          %v2693 = vld [vmem:[%s4 + $0x5a8] sm:$0xff]
          %v2694 = vld [vmem:[%s4 + $0x5b0] sm:$0xff]
          %v2695 = vld [vmem:[%s4 + $0x5b8] sm:$0xff]
          %v2696 = vld [vmem:[%s4 + $0x5c0] sm:$0xff]
          %v2697 = vld [vmem:[%s4 + $0x5c8] sm:$0xff]
          %v2698 = vld [vmem:[%s4 + $0x5d0] sm:$0xff]
          %v2699 = vld [vmem:[%s4 + $0x5d8] sm:$0xff]
          %v2700 = vld [vmem:[%s4 + $0x5e0] sm:$0xff]
          %v2701 = vld [vmem:[%s4 + $0x5e8] sm:$0xff]
          %v2702 = vld [vmem:[%s4 + $0x5f0] sm:$0xff]
          %v2703 = vld [vmem:[%s4 + $0x5f8] sm:$0xff]
          %v2704 = vld [vmem:[%s5] sm:$0x1]
          %v2707 = vlaneseq
          %v2708 = vshrl.u32 %v2707, 7
          %v2709 = vsub.s32 0, %v2708
          %v2710 = vrot.slane %v2510, %v2709
          %v2711 = vlaneseq
          %v2712 = vshrl.u32 %v2711, 7
          %v2713 = vsub.s32 1, %v2712
          %v2714 = vrot.slane %v2510, %v2713
          %v2715 = vlaneseq
          %v2716 = vshrl.u32 %v2715, 7
          %v2717 = vsub.s32 2, %v2716
          %v2718 = vrot.slane %v2510, %v2717
          %v2719 = vlaneseq
          %v2720 = vshrl.u32 %v2719, 7
          %v2721 = vsub.s32 3, %v2720
          %v2722 = vrot.slane %v2510, %v2721
          %v2723 = vlaneseq
          %v2724 = vshrl.u32 %v2723, 7
          %v2725 = vsub.s32 4, %v2724
          %v2726 = vrot.slane %v2510, %v2725
          %v2727 = vlaneseq
          %v2728 = vshrl.u32 %v2727, 7
          %v2729 = vsub.s32 5, %v2728
          %v2730 = vrot.slane %v2510, %v2729
          %v2731 = vlaneseq
          %v2732 = vshrl.u32 %v2731, 7
          %v2733 = vsub.s32 6, %v2732
          %v2734 = vrot.slane %v2510, %v2733
          %v2735 = vlaneseq
          %v2736 = vshrl.u32 %v2735, 7
          %v2737 = vsub.s32 7, %v2736
          %v2738 = vrot.slane %v2510, %v2737
          %v2739 = vlaneseq
          %v2740 = vshrl.u32 %v2739, 7
          %v2741 = vsub.s32 0, %v2740
          %v2742 = vrot.slane %v2511, %v2741
          %v2743 = vlaneseq
          %v2744 = vshrl.u32 %v2743, 7
          %v2745 = vsub.s32 1, %v2744
          %v2746 = vrot.slane %v2511, %v2745
          %v2747 = vlaneseq
          %v2748 = vshrl.u32 %v2747, 7
          %v2749 = vsub.s32 2, %v2748
          %v2750 = vrot.slane %v2511, %v2749
          %v2751 = vlaneseq
          %v2752 = vshrl.u32 %v2751, 7
          %v2753 = vsub.s32 3, %v2752
          %v2754 = vrot.slane %v2511, %v2753
          %2767 = vmatprep.subr.mxu0 0.0
          %2768 = vmatpush1.msra.mxu0 %v2512
          %2769 = vmatprep.subr.mxu0 0.0
          %2770 = vmatpush1.msra.mxu0 %v2513
          %2771 = vmatprep.subr.mxu0 0.0
          %2772 = vmatpush1.msra.mxu0 %v2514
          %2773 = vmatprep.subr.mxu0 0.0
          %2774 = vmatpush1.msra.mxu0 %v2515
          %2775 = vmatprep.subr.mxu0 0.0
          %2776 = vmatpush1.msra.mxu0 %v2516
          %2777 = vmatprep.subr.mxu0 0.0
          %2778 = vmatpush1.msra.mxu0 %v2517
          %2779 = vmatprep.subr.mxu0 0.0
          %2780 = vmatpush1.msra.mxu0 %v2518
          %2781 = vmatprep.subr.mxu0 0.0
          %2782 = vmatpush1.msra.mxu0 %v2519
          %2783 = vmatprep.subr.mxu0 0.0
          %2784 = vmatpush1.msra.mxu0 %v2520
          %2785 = vmatprep.subr.mxu0 0.0
          %2786 = vmatpush1.msra.mxu0 %v2521
          %2787 = vmatprep.subr.mxu0 0.0
          %2788 = vmatpush1.msra.mxu0 %v2522
          %2789 = vmatprep.subr.mxu0 0.0
          %2790 = vmatpush1.msra.mxu0 %v2523
          %2791 = vmatprep.subr.mxu0 0.0
          %2792 = vmatpush1.msra.mxu0 %v2524
          %2793 = vmatprep.subr.mxu0 0.0
          %2794 = vmatpush1.msra.mxu0 %v2525
          %2795 = vmatprep.subr.mxu0 0.0
          %2796 = vmatpush1.msra.mxu0 %v2526
          %2797 = vmatprep.subr.mxu0 0.0
          %2798 = vmatpush1.msra.mxu0 %v2527
          %2799 = vmatprep.subr.mxu0 0.0
          %2800 = vmatpush1.msra.mxu0 %v2528
          %2801 = vmatprep.subr.mxu0 0.0
          %2802 = vmatpush1.msra.mxu0 %v2529
          %2803 = vmatprep.subr.mxu0 0.0
          %2804 = vmatpush1.msra.mxu0 %v2530
          %2805 = vmatprep.subr.mxu0 0.0
          %2806 = vmatpush1.msra.mxu0 %v2531
          %2807 = vmatprep.subr.mxu0 0.0
          %2808 = vmatpush1.msra.mxu0 %v2532
          %2809 = vmatprep.subr.mxu0 0.0
          %2810 = vmatpush1.msra.mxu0 %v2533
          %2811 = vmatprep.subr.mxu0 0.0
          %2812 = vmatpush1.msra.mxu0 %v2534
          %2813 = vmatprep.subr.mxu0 0.0
          %2814 = vmatpush1.msra.mxu0 %v2535
          %2815 = vmatprep.subr.mxu0 0.0
          %2816 = vmatpush1.msra.mxu0 %v2536
          %2817 = vmatprep.subr.mxu0 0.0
          %2818 = vmatpush1.msra.mxu0 %v2537
          %2819 = vmatprep.subr.mxu0 0.0
          %2820 = vmatpush1.msra.mxu0 %v2538
          %2821 = vmatprep.subr.mxu0 0.0
          %2822 = vmatpush1.msra.mxu0 %v2539
          %2823 = vmatprep.subr.mxu0 0.0
          %2824 = vmatpush1.msra.mxu0 %v2540
          %2825 = vmatprep.subr.mxu0 0.0
          %2826 = vmatpush1.msra.mxu0 %v2541
          %2827 = vmatprep.subr.mxu0 0.0
          %2828 = vmatpush1.msra.mxu0 %v2542
          %2829 = vmatprep.subr.mxu0 0.0
          %2830 = vmatpush1.msra.mxu0 %v2543
          %2831 = vmatprep.mubr.f32.mxu0 %v2714
          %2832 = vmatmul.mubr.f32.gmra.mrb[0].mxu0 %v2710
          %v2833 = vpop.f32.mrb[0].mxu0
          %v2834 = vadd.f32 %v2704, %v2833
          %v2835 = vpop.f32.mrb[0].mxu0
          %2836 = vdwg.mxu0
          %2837 = vmatprep.subr.mxu0 0.0
          %2838 = vmatpush1.msra.mxu0 %v2544
          %2839 = vmatprep.subr.mxu0 0.0
          %2840 = vmatpush1.msra.mxu0 %v2545
          %2841 = vmatprep.subr.mxu0 0.0
          %2842 = vmatpush1.msra.mxu0 %v2546
          %2843 = vmatprep.subr.mxu0 0.0
          %2844 = vmatpush1.msra.mxu0 %v2547
          %2845 = vmatprep.subr.mxu0 0.0
          %2846 = vmatpush1.msra.mxu0 %v2548
          %2847 = vmatprep.subr.mxu0 0.0
          %2848 = vmatpush1.msra.mxu0 %v2549
          %2849 = vmatprep.subr.mxu0 0.0
          %2850 = vmatpush1.msra.mxu0 %v2550
          %2851 = vmatprep.subr.mxu0 0.0
          %2852 = vmatpush1.msra.mxu0 %v2551
          %2853 = vmatprep.subr.mxu0 0.0
          %2854 = vmatpush1.msra.mxu0 %v2552
          %2855 = vmatprep.subr.mxu0 0.0
          %2856 = vmatpush1.msra.mxu0 %v2553
          %2857 = vmatprep.subr.mxu0 0.0
          %2858 = vmatpush1.msra.mxu0 %v2554
          %2859 = vmatprep.subr.mxu0 0.0
          %2860 = vmatpush1.msra.mxu0 %v2555
          %2861 = vmatprep.subr.mxu0 0.0
          %2862 = vmatpush1.msra.mxu0 %v2556
          %2863 = vmatprep.subr.mxu0 0.0
          %2864 = vmatpush1.msra.mxu0 %v2557
          %2865 = vmatprep.subr.mxu0 0.0
          %2866 = vmatpush1.msra.mxu0 %v2558
          %2867 = vmatprep.subr.mxu0 0.0
          %2868 = vmatpush1.msra.mxu0 %v2559
          %2869 = vmatprep.subr.mxu0 0.0
          %2870 = vmatpush1.msra.mxu0 %v2560
          %2871 = vmatprep.subr.mxu0 0.0
          %2872 = vmatpush1.msra.mxu0 %v2561
          %2873 = vmatprep.subr.mxu0 0.0
          %2874 = vmatpush1.msra.mxu0 %v2562
          %2875 = vmatprep.subr.mxu0 0.0
          %2876 = vmatpush1.msra.mxu0 %v2563
          %2877 = vmatprep.subr.mxu0 0.0
          %2878 = vmatpush1.msra.mxu0 %v2564
          %2879 = vmatprep.subr.mxu0 0.0
          %2880 = vmatpush1.msra.mxu0 %v2565
          %2881 = vmatprep.subr.mxu0 0.0
          %2882 = vmatpush1.msra.mxu0 %v2566
          %2883 = vmatprep.subr.mxu0 0.0
          %2884 = vmatpush1.msra.mxu0 %v2567
          %2885 = vmatprep.subr.mxu0 0.0
          %2886 = vmatpush1.msra.mxu0 %v2568
          %2887 = vmatprep.subr.mxu0 0.0
          %2888 = vmatpush1.msra.mxu0 %v2569
          %2889 = vmatprep.subr.mxu0 0.0
          %2890 = vmatpush1.msra.mxu0 %v2570
          %2891 = vmatprep.subr.mxu0 0.0
          %2892 = vmatpush1.msra.mxu0 %v2571
          %2893 = vmatprep.subr.mxu0 0.0
          %2894 = vmatpush1.msra.mxu0 %v2572
          %2895 = vmatprep.subr.mxu0 0.0
          %2896 = vmatpush1.msra.mxu0 %v2573
          %2897 = vmatprep.subr.mxu0 0.0
          %2898 = vmatpush1.msra.mxu0 %v2574
          %2899 = vmatprep.subr.mxu0 0.0
          %2900 = vmatpush1.msra.mxu0 %v2575
          %2901 = vmatprep.mubr.f32.mxu0 %v2722
          %2902 = vmatmul.mubr.f32.gmra.mrb[0].mxu0 %v2718
          %v2903 = vpop.f32.mrb[0].mxu0
          %v2904 = vadd.f32 %v2834, %v2903
          %v2905 = vpop.f32.mrb[0].mxu0
          %2906 = vdwg.mxu0
          %2907 = vmatprep.subr.mxu0 0.0
          %2908 = vmatpush1.msra.mxu0 %v2576
          %2909 = vmatprep.subr.mxu0 0.0
          %2910 = vmatpush1.msra.mxu0 %v2577
          %2911 = vmatprep.subr.mxu0 0.0
          %2912 = vmatpush1.msra.mxu0 %v2578
          %2913 = vmatprep.subr.mxu0 0.0
          %2914 = vmatpush1.msra.mxu0 %v2579
          %2915 = vmatprep.subr.mxu0 0.0
          %2916 = vmatpush1.msra.mxu0 %v2580
          %2917 = vmatprep.subr.mxu0 0.0
          %2918 = vmatpush1.msra.mxu0 %v2581
          %2919 = vmatprep.subr.mxu0 0.0
          %2920 = vmatpush1.msra.mxu0 %v2582
          %2921 = vmatprep.subr.mxu0 0.0
          %2922 = vmatpush1.msra.mxu0 %v2583
          %2923 = vmatprep.subr.mxu0 0.0
          %2924 = vmatpush1.msra.mxu0 %v2584
          %2925 = vmatprep.subr.mxu0 0.0
          %2926 = vmatpush1.msra.mxu0 %v2585
          %2927 = vmatprep.subr.mxu0 0.0
          %2928 = vmatpush1.msra.mxu0 %v2586
          %2929 = vmatprep.subr.mxu0 0.0
          %2930 = vmatpush1.msra.mxu0 %v2587
          %2931 = vmatprep.subr.mxu0 0.0
          %2932 = vmatpush1.msra.mxu0 %v2588
          %2933 = vmatprep.subr.mxu0 0.0
          %2934 = vmatpush1.msra.mxu0 %v2589
          %2935 = vmatprep.subr.mxu0 0.0
          %2936 = vmatpush1.msra.mxu0 %v2590
          %2937 = vmatprep.subr.mxu0 0.0
          %2938 = vmatpush1.msra.mxu0 %v2591
          %2939 = vmatprep.subr.mxu0 0.0
          %2940 = vmatpush1.msra.mxu0 %v2592
          %2941 = vmatprep.subr.mxu0 0.0
          %2942 = vmatpush1.msra.mxu0 %v2593
          %2943 = vmatprep.subr.mxu0 0.0
          %2944 = vmatpush1.msra.mxu0 %v2594
          %2945 = vmatprep.subr.mxu0 0.0
          %2946 = vmatpush1.msra.mxu0 %v2595
          %2947 = vmatprep.subr.mxu0 0.0
          %2948 = vmatpush1.msra.mxu0 %v2596
          %2949 = vmatprep.subr.mxu0 0.0
          %2950 = vmatpush1.msra.mxu0 %v2597
          %2951 = vmatprep.subr.mxu0 0.0
          %2952 = vmatpush1.msra.mxu0 %v2598
          %2953 = vmatprep.subr.mxu0 0.0
          %2954 = vmatpush1.msra.mxu0 %v2599
          %2955 = vmatprep.subr.mxu0 0.0
          %2956 = vmatpush1.msra.mxu0 %v2600
          %2957 = vmatprep.subr.mxu0 0.0
          %2958 = vmatpush1.msra.mxu0 %v2601
          %2959 = vmatprep.subr.mxu0 0.0
          %2960 = vmatpush1.msra.mxu0 %v2602
          %2961 = vmatprep.subr.mxu0 0.0
          %2962 = vmatpush1.msra.mxu0 %v2603
          %2963 = vmatprep.subr.mxu0 0.0
          %2964 = vmatpush1.msra.mxu0 %v2604
          %2965 = vmatprep.subr.mxu0 0.0
          %2966 = vmatpush1.msra.mxu0 %v2605
          %2967 = vmatprep.subr.mxu0 0.0
          %2968 = vmatpush1.msra.mxu0 %v2606
          %2969 = vmatprep.subr.mxu0 0.0
          %2970 = vmatpush1.msra.mxu0 %v2607
          %2971 = vmatprep.mubr.f32.mxu0 %v2730
          %2972 = vmatmul.mubr.f32.gmra.mrb[0].mxu0 %v2726
          %v2973 = vpop.f32.mrb[0].mxu0
          %v2974 = vadd.f32 %v2904, %v2973
          %v2975 = vpop.f32.mrb[0].mxu0
          %2976 = vdwg.mxu0
          %2977 = vmatprep.subr.mxu0 0.0
          %2978 = vmatpush1.msra.mxu0 %v2608
          %2979 = vmatprep.subr.mxu0 0.0
          %2980 = vmatpush1.msra.mxu0 %v2609
          %2981 = vmatprep.subr.mxu0 0.0
          %2982 = vmatpush1.msra.mxu0 %v2610
          %2983 = vmatprep.subr.mxu0 0.0
          %2984 = vmatpush1.msra.mxu0 %v2611
          %2985 = vmatprep.subr.mxu0 0.0
          %2986 = vmatpush1.msra.mxu0 %v2612
          %2987 = vmatprep.subr.mxu0 0.0
          %2988 = vmatpush1.msra.mxu0 %v2613
          %2989 = vmatprep.subr.mxu0 0.0
          %2990 = vmatpush1.msra.mxu0 %v2614
          %2991 = vmatprep.subr.mxu0 0.0
          %2992 = vmatpush1.msra.mxu0 %v2615
          %2993 = vmatprep.subr.mxu0 0.0
          %2994 = vmatpush1.msra.mxu0 %v2616
          %2995 = vmatprep.subr.mxu0 0.0
          %2996 = vmatpush1.msra.mxu0 %v2617
          %2997 = vmatprep.subr.mxu0 0.0
          %2998 = vmatpush1.msra.mxu0 %v2618
          %2999 = vmatprep.subr.mxu0 0.0
          %3000 = vmatpush1.msra.mxu0 %v2619
          %3001 = vmatprep.subr.mxu0 0.0
          %3002 = vmatpush1.msra.mxu0 %v2620
          %3003 = vmatprep.subr.mxu0 0.0
          %3004 = vmatpush1.msra.mxu0 %v2621
          %3005 = vmatprep.subr.mxu0 0.0
          %3006 = vmatpush1.msra.mxu0 %v2622
          %3007 = vmatprep.subr.mxu0 0.0
          %3008 = vmatpush1.msra.mxu0 %v2623
          %3009 = vmatprep.subr.mxu0 0.0
          %3010 = vmatpush1.msra.mxu0 %v2624
          %3011 = vmatprep.subr.mxu0 0.0
          %3012 = vmatpush1.msra.mxu0 %v2625
          %3013 = vmatprep.subr.mxu0 0.0
          %3014 = vmatpush1.msra.mxu0 %v2626
          %3015 = vmatprep.subr.mxu0 0.0
          %3016 = vmatpush1.msra.mxu0 %v2627
          %3017 = vmatprep.subr.mxu0 0.0
          %3018 = vmatpush1.msra.mxu0 %v2628
          %3019 = vmatprep.subr.mxu0 0.0
          %3020 = vmatpush1.msra.mxu0 %v2629
          %3021 = vmatprep.subr.mxu0 0.0
          %3022 = vmatpush1.msra.mxu0 %v2630
          %3023 = vmatprep.subr.mxu0 0.0
          %3024 = vmatpush1.msra.mxu0 %v2631
          %3025 = vmatprep.subr.mxu0 0.0
          %3026 = vmatpush1.msra.mxu0 %v2632
          %3027 = vmatprep.subr.mxu0 0.0
          %3028 = vmatpush1.msra.mxu0 %v2633
          %3029 = vmatprep.subr.mxu0 0.0
          %3030 = vmatpush1.msra.mxu0 %v2634
          %3031 = vmatprep.subr.mxu0 0.0
          %3032 = vmatpush1.msra.mxu0 %v2635
          %3033 = vmatprep.subr.mxu0 0.0
          %3034 = vmatpush1.msra.mxu0 %v2636
          %3035 = vmatprep.subr.mxu0 0.0
          %3036 = vmatpush1.msra.mxu0 %v2637
          %3037 = vmatprep.subr.mxu0 0.0
          %3038 = vmatpush1.msra.mxu0 %v2638
          %3039 = vmatprep.subr.mxu0 0.0
          %3040 = vmatpush1.msra.mxu0 %v2639
          %3041 = vmatprep.mubr.f32.mxu0 %v2738
          %3042 = vmatmul.mubr.f32.gmra.mrb[0].mxu0 %v2734
          %v3043 = vpop.f32.mrb[0].mxu0
          %v3044 = vadd.f32 %v2974, %v3043
          %v3045 = vpop.f32.mrb[0].mxu0
          %3046 = vdwg.mxu0
          %3047 = vmatprep.subr.mxu0 0.0
          %3048 = vmatpush1.msra.mxu0 %v2640
          %3049 = vmatprep.subr.mxu0 0.0
          %3050 = vmatpush1.msra.mxu0 %v2641
          %3051 = vmatprep.subr.mxu0 0.0
          %3052 = vmatpush1.msra.mxu0 %v2642
          %3053 = vmatprep.subr.mxu0 0.0
          %3054 = vmatpush1.msra.mxu0 %v2643
          %3055 = vmatprep.subr.mxu0 0.0
          %3056 = vmatpush1.msra.mxu0 %v2644
          %3057 = vmatprep.subr.mxu0 0.0
          %3058 = vmatpush1.msra.mxu0 %v2645
          %3059 = vmatprep.subr.mxu0 0.0
          %3060 = vmatpush1.msra.mxu0 %v2646
          %3061 = vmatprep.subr.mxu0 0.0
          %3062 = vmatpush1.msra.mxu0 %v2647
          %3063 = vmatprep.subr.mxu0 0.0
          %3064 = vmatpush1.msra.mxu0 %v2648
          %3065 = vmatprep.subr.mxu0 0.0
          %3066 = vmatpush1.msra.mxu0 %v2649
          %3067 = vmatprep.subr.mxu0 0.0
          %3068 = vmatpush1.msra.mxu0 %v2650
          %3069 = vmatprep.subr.mxu0 0.0
          %3070 = vmatpush1.msra.mxu0 %v2651
          %3071 = vmatprep.subr.mxu0 0.0
          %3072 = vmatpush1.msra.mxu0 %v2652
          %3073 = vmatprep.subr.mxu0 0.0
          %3074 = vmatpush1.msra.mxu0 %v2653
          %3075 = vmatprep.subr.mxu0 0.0
          %3076 = vmatpush1.msra.mxu0 %v2654
          %3077 = vmatprep.subr.mxu0 0.0
          %3078 = vmatpush1.msra.mxu0 %v2655
          %3079 = vmatprep.subr.mxu0 0.0
          %3080 = vmatpush1.msra.mxu0 %v2656
          %3081 = vmatprep.subr.mxu0 0.0
          %3082 = vmatpush1.msra.mxu0 %v2657
          %3083 = vmatprep.subr.mxu0 0.0
          %3084 = vmatpush1.msra.mxu0 %v2658
          %3085 = vmatprep.subr.mxu0 0.0
          %3086 = vmatpush1.msra.mxu0 %v2659
          %3087 = vmatprep.subr.mxu0 0.0
          %3088 = vmatpush1.msra.mxu0 %v2660
          %3089 = vmatprep.subr.mxu0 0.0
          %3090 = vmatpush1.msra.mxu0 %v2661
          %3091 = vmatprep.subr.mxu0 0.0
          %3092 = vmatpush1.msra.mxu0 %v2662
          %3093 = vmatprep.subr.mxu0 0.0
          %3094 = vmatpush1.msra.mxu0 %v2663
          %3095 = vmatprep.subr.mxu0 0.0
          %3096 = vmatpush1.msra.mxu0 %v2664
          %3097 = vmatprep.subr.mxu0 0.0
          %3098 = vmatpush1.msra.mxu0 %v2665
          %3099 = vmatprep.subr.mxu0 0.0
          %3100 = vmatpush1.msra.mxu0 %v2666
          %3101 = vmatprep.subr.mxu0 0.0
          %3102 = vmatpush1.msra.mxu0 %v2667
          %3103 = vmatprep.subr.mxu0 0.0
          %3104 = vmatpush1.msra.mxu0 %v2668
          %3105 = vmatprep.subr.mxu0 0.0
          %3106 = vmatpush1.msra.mxu0 %v2669
          %3107 = vmatprep.subr.mxu0 0.0
          %3108 = vmatpush1.msra.mxu0 %v2670
          %3109 = vmatprep.subr.mxu0 0.0
          %3110 = vmatpush1.msra.mxu0 %v2671
          %3111 = vmatprep.mubr.f32.mxu0 %v2746
          %3112 = vmatmul.mubr.f32.gmra.mrb[0].mxu0 %v2742
          %v3113 = vpop.f32.mrb[0].mxu0
          %v3114 = vadd.f32 %v3044, %v3113
          %v3115 = vpop.f32.mrb[0].mxu0
          %3116 = vdwg.mxu0
          %3117 = vmatprep.subr.mxu0 0.0
          %3118 = vmatpush1.msra.mxu0 %v2672
          %3119 = vmatprep.subr.mxu0 0.0
          %3120 = vmatpush1.msra.mxu0 %v2673
          %3121 = vmatprep.subr.mxu0 0.0
          %3122 = vmatpush1.msra.mxu0 %v2674
          %3123 = vmatprep.subr.mxu0 0.0
          %3124 = vmatpush1.msra.mxu0 %v2675
          %3125 = vmatprep.subr.mxu0 0.0
          %3126 = vmatpush1.msra.mxu0 %v2676
          %3127 = vmatprep.subr.mxu0 0.0
          %3128 = vmatpush1.msra.mxu0 %v2677
          %3129 = vmatprep.subr.mxu0 0.0
          %3130 = vmatpush1.msra.mxu0 %v2678
          %3131 = vmatprep.subr.mxu0 0.0
          %3132 = vmatpush1.msra.mxu0 %v2679
          %3133 = vmatprep.subr.mxu0 0.0
          %3134 = vmatpush1.msra.mxu0 %v2680
          %3135 = vmatprep.subr.mxu0 0.0
          %3136 = vmatpush1.msra.mxu0 %v2681
          %3137 = vmatprep.subr.mxu0 0.0
          %3138 = vmatpush1.msra.mxu0 %v2682
          %3139 = vmatprep.subr.mxu0 0.0
          %3140 = vmatpush1.msra.mxu0 %v2683
          %3141 = vmatprep.subr.mxu0 0.0
          %3142 = vmatpush1.msra.mxu0 %v2684
          %3143 = vmatprep.subr.mxu0 0.0
          %3144 = vmatpush1.msra.mxu0 %v2685
          %3145 = vmatprep.subr.mxu0 0.0
          %3146 = vmatpush1.msra.mxu0 %v2686
          %3147 = vmatprep.subr.mxu0 0.0
          %3148 = vmatpush1.msra.mxu0 %v2687
          %3149 = vmatprep.subr.mxu0 0.0
          %3150 = vmatpush1.msra.mxu0 %v2688
          %3151 = vmatprep.subr.mxu0 0.0
          %3152 = vmatpush1.msra.mxu0 %v2689
          %3153 = vmatprep.subr.mxu0 0.0
          %3154 = vmatpush1.msra.mxu0 %v2690
          %3155 = vmatprep.subr.mxu0 0.0
          %3156 = vmatpush1.msra.mxu0 %v2691
          %3157 = vmatprep.subr.mxu0 0.0
          %3158 = vmatpush1.msra.mxu0 %v2692
          %3159 = vmatprep.subr.mxu0 0.0
          %3160 = vmatpush1.msra.mxu0 %v2693
          %3161 = vmatprep.subr.mxu0 0.0
          %3162 = vmatpush1.msra.mxu0 %v2694
          %3163 = vmatprep.subr.mxu0 0.0
          %3164 = vmatpush1.msra.mxu0 %v2695
          %3165 = vmatprep.subr.mxu0 0.0
          %3166 = vmatpush1.msra.mxu0 %v2696
          %3167 = vmatprep.subr.mxu0 0.0
          %3168 = vmatpush1.msra.mxu0 %v2697
          %3169 = vmatprep.subr.mxu0 0.0
          %3170 = vmatpush1.msra.mxu0 %v2698
          %3171 = vmatprep.subr.mxu0 0.0
          %3172 = vmatpush1.msra.mxu0 %v2699
          %3173 = vmatprep.subr.mxu0 0.0
          %3174 = vmatpush1.msra.mxu0 %v2700
          %3175 = vmatprep.subr.mxu0 0.0
          %3176 = vmatpush1.msra.mxu0 %v2701
          %3177 = vmatprep.subr.mxu0 0.0
          %3178 = vmatpush1.msra.mxu0 %v2702
          %3179 = vmatprep.subr.mxu0 0.0
          %3180 = vmatpush1.msra.mxu0 %v2703
          %3181 = vmatprep.mubr.f32.mxu0 %v2754
          %3182 = vmatmul.mubr.f32.gmra.mrb[0].mxu0 %v2750
          %v3183 = vpop.f32.mrb[0].mxu0
          %v3184 = vadd.f32 %v3114, %v3183
          %v3185 = vpop.f32.mrb[0].mxu0
          %3186 = vdwg.mxu0
          %vm3187 = vcmask 73728
          %3188 = vst.msk [vmem:[%s266] sm:$0x1] %vm3187, %v3184
        $region52: #{tpu_custom_call.1} parent=43 // pred_fallthru
          _
        %s3189 = sand.u32 %s173, 1
        %s3190 = scalar_lea.sflag [#allocation4], %s3189
        %s3191 = sand.u32 %s173, 1
        %s3192 = scalar_lea.vmem [#allocation3], %s3191
        // Predicated region
        $region53: #{tpu_custom_call.1} parent=43 // pred_check
          %p3193 = pneg %p183
        $region54: #{tpu_custom_call.1} parent=43 // pred_check_branch
          %3195 = sbr.rel (%p3193) target = $region56
        $region55: #{tpu_custom_call.1} parent=43 // pred_region
          %s3197 = ssub.s32 16, 16
          %3198 = vsyncadd %s3190, %s3197
          %s3199 = smul.addr %s24, 16
          %s3200 = scalar_lea.hbm %s6, %s3199
          %s3202 = sshll.u32 %s3192, 4
          %s3203 = int_to_ptr.vmem [resolvable:$true] %s3202
          %3205 = dma.vmem_to_hbm [thread:$0]  %s3203, 16, %s3200, %s3190
        $region56: #{tpu_custom_call.1} parent=43 // pred_fallthru
          _
      $region44: #{tpu_custom_call.1} parent=5 // pred_fallthru
        _
      %p3206 = scmp.le.s32.totalorder 2, %s15
      // Predicated region
      $region57: #{tpu_custom_call.1} parent=5 // pred_check
        %p3207 = pneg %p3206
      $region58: #{tpu_custom_call.1} parent=5 // pred_check_branch
        %3209 = sbr.rel (%p3207) target = $region60
      $region59: #{tpu_custom_call.1} parent=5 // pred_region
        %s3210 = ssub.s32 %s15, 2
        // Predicated region
        $region61: #{tpu_custom_call.1} parent=59 // pred_check
          %p3211 = pneg %p189
        $region62: #{tpu_custom_call.1} parent=59 // pred_check_branch
          %3213 = sbr.rel (%p3211) target = $region64
        $region63: #{tpu_custom_call.1} parent=59 // pred_region
          %s3214 = sand.u32 %s174, 1
          %s3215 = scalar_lea.sflag [#allocation4], %s3214
          %s3216 = sand.u32 %s174, 1
          %s3217 = scalar_lea.vmem [#allocation3], %s3216
          %3218 = dma.done %s3215, 16
        $region64: #{tpu_custom_call.1} parent=59 // pred_fallthru
          _
      $region60: #{tpu_custom_call.1} parent=5 // pred_fallthru
        _
    $region6: #{tpu_custom_call.1} parent=1 // loop_footer
      %s19 = sadd.s32 1, %s15
    $region7: #{tpu_custom_call.1} parent=1 // loop_footer_branch
      %14 = sbr.rel target = $region3
    $region8: #{tpu_custom_call.1} parent=1 // loop_exit
      _
    %3219 = vsyncpa [#allocation4], 1
    %s3220 = scalar_lea.sflag [#allocation4], 1
    %3221 = vsyncpa %s3220, 1

</llo_original>
